<compile_context>
chip_gen: v7x
topology: tpu7x:2x2x1
jax: 0.10.0
libtpu: 0.0.40
codegen_flags: <defaults>
</compile_context>

<pallas_src>
import math

import jax
import jax.numpy as jnp
from jax.experimental import pallas as pl
from jax.experimental.pallas import tpu as pltpu

# ----------------- small synthetic BERT config -----------------
B = 2                 # batch
S = 8                 # sequence length
H = 128               # hidden size
NH = 2                # attention heads
DH = H // NH          # real head dim (64)
DHP = 128             # lane-padded head dim
FF = 4 * H            # intermediate size
NUM_LAYERS = 2        # encoder layers
NUM_LABELS = 16       # intent classes
LANE = 128            # lane-dense padded width (logits / mask / losses)
VOCAB = 64
TYPE_VOCAB = 2
IB_LAMBDA = 1e-3      # config.regularizers.ib_lambda
LN_EPS = 1e-12
NEG_INF = -1e9
# config.regularizers.use_ib = True, use_afr = False, eval mode (dropout = id)


# ----------------- helpers -----------------
def _full_spec(shape):
    """Whole-array BlockSpec for a grid=(1,) pallas_call."""
    nd = len(shape)
    return pl.BlockSpec(tuple(shape), lambda *_: (0,) * nd)


def _mm(x, w):
    """bf16 MXU matmul with f32 accumulation (w already bf16)."""
    return jnp.dot(x.astype(jnp.bfloat16), w,
                   preferred_element_type=jnp.float32)


def _layernorm(x, g, b, eps=LN_EPS):
    mu = jnp.mean(x, axis=-1, keepdims=True)
    xc = x - mu
    var = jnp.mean(xc * xc, axis=-1, keepdims=True)
    return xc * jax.lax.rsqrt(var + eps) * g + b


def _gelu(x):
    # tanh-approximate GELU (HF BERT default is erf GELU; difference is tiny)
    c = math.sqrt(2.0 / math.pi)
    return 0.5 * x * (1.0 + jnp.tanh(c * (x + 0.044715 * x * x * x)))


# ----------------- the single fused forward kernel -----------------
def fused_forward_kernel(
        # embeddings (already summed word+pos+type in the wrapper)
        emb_ref, embg_ref, embb_ref,
        # mask / noise / labels
        addmask_ref, eps_ref, lab_ref,
        # stacked encoder-layer weights, leading axis = layer
        wqkv_ref, bqkv_ref, wo_ref, bo_ref, ln1g_ref, ln1b_ref,
        w1_ref, b1_ref, w2_ref, b2_ref, ln2g_ref, ln2b_ref,
        # head (pooler / IB / classifier)
        poolw_ref, poolb_ref, muw_ref, mub_ref, lvw_ref, lvb_ref,
        clsw_ref, clsb_ref,
        # outputs
        logits_ref, feat_ref, loss_ref,
        # scratch
        ctx_ref):

    # ---- embedding LayerNorm ----
    x = _layernorm(emb_ref[...], embg_ref[...], embb_ref[...])   # [B*S, H] f32

    addmask = addmask_ref[...]                                   # [B, 128] f32

    # ---- encoder layers, statically unrolled ----
    for l in range(NUM_LAYERS):
        # fused QKV projection (1/sqrt(DH) pre-folded into the Q columns)
        qkv = (_mm(x, wqkv_ref[l]) + bqkv_ref[l]).astype(jnp.bfloat16)

        # self-attention; each head's context written to an aligned scratch tile
        for b in range(B):
            r0 = b * S
            mask_b = addmask[b:b + 1, :S]                        # [1, S]
            for h in range(NH):
                cq = h * DHP
                ck = NH * DHP + h * DHP
                cv = 2 * NH * DHP + h * DHP
                qbh = qkv[r0:r0 + S, cq:cq + DHP]                # [S, 128] bf16
                kbh = qkv[r0:r0 + S, ck:ck + DHP]
                vbh = qkv[r0:r0 + S, cv:cv + DHP]
                s = jax.lax.dot_general(
                    qbh, kbh, (((1,), (1,)), ((), ())),
                    preferred_element_type=jnp.float32)          # [S, S]
                s = s + mask_b
                s = s - jnp.max(s, axis=-1, keepdims=True)
                e = jnp.exp(s)
                p = e * pl.reciprocal(jnp.sum(e, axis=-1, keepdims=True),
                                      approx=True)
                c = jnp.dot(p.astype(jnp.bfloat16), vbh,
                            preferred_element_type=jnp.float32)  # [S, 128]
                ctx_ref[r0:r0 + S, h * DHP:(h + 1) * DHP] = c

        # output projection + residual + LayerNorm
        attn_out = _mm(ctx_ref[...], wo_ref[l]) + bo_ref[l]
        x = _layernorm(x + attn_out, ln1g_ref[l], ln1b_ref[l])

        # FFN: w1 + GELU + w2 + residual + LayerNorm
        hmid = _gelu(_mm(x, w1_ref[l]) + b1_ref[l])              # [B*S, FF]
        ffo = _mm(hmid, w2_ref[l]) + b2_ref[l]
        x = _layernorm(x + ffo, ln2g_ref[l], ln2b_ref[l])

    # ---- head: CLS rows already resident in VMEM ----
    cls = jnp.concatenate([x[b * S:b * S + 1, :] for b in range(B)], axis=0)

    pooled = jnp.tanh(_mm(cls, poolw_ref[...]) + poolb_ref[...])  # pooler

    mu = _mm(pooled, muw_ref[...]) + mub_ref[...]                 # IB head
    lv = _mm(pooled, lvw_ref[...]) + lvb_ref[...]
    z = mu + jnp.exp(0.5 * lv) * eps_ref[...]                     # reparameterize
    feat_ref[...] = z                                             # dropout = id (eval)

    kld = -0.5 * jnp.sum(1.0 + lv - mu * mu - jnp.exp(lv),
                         axis=-1, keepdims=True)                  # [B, 1]
    ib = IB_LAMBDA * jnp.mean(kld, axis=0, keepdims=True)         # [1, 1]

    # classifier (NUM_LABELS padded to 128 lane-dense columns)
    logits = _mm(z, clsw_ref[...]) + clsb_ref[...]                # [B, 128]
    logits_ref[...] = logits

    # cross-entropy over the first NUM_LABELS columns only
    col = jax.lax.broadcasted_iota(jnp.int32, (B, LANE), 1)
    ml = jnp.where(col < NUM_LABELS, logits, NEG_INF)
    m = jnp.max(ml, axis=-1, keepdims=True)
    lse = jnp.log(jnp.sum(jnp.exp(ml - m), axis=-1, keepdims=True)) + m
    onehot = (col == lab_ref[...]).astype(jnp.float32)
    picked = jnp.sum(logits * onehot, axis=-1, keepdims=True)
    ce = jnp.mean(lse - picked, axis=0, keepdims=True)            # [1, 1]
    tot = ce + ib

    # pack the three scalars into one lane-dense [1, 128] output
    lane = jax.lax.broadcasted_iota(jnp.int32, (1, LANE), 1)
    loss_ref[...] = (jnp.where(lane == 0, ce, 0.0)
                     + jnp.where(lane == 1, ib, 0.0)
                     + jnp.where(lane == 2, tot, 0.0))


# ----------------- parameters (deterministic synthetic init) -----------------
def init_params(key):
    keys = jax.random.split(key, 40)
    kit = iter(keys)

    def rnd(shape, scale=0.02):
        return scale * jax.random.normal(next(kit), shape, jnp.float32)

    def zeros(shape):
        return jnp.zeros(shape, jnp.float32)

    def ones(shape):
        return jnp.ones(shape, jnp.float32)

    q_scale = 1.0 / math.sqrt(DH)

    wqkv_l, bqkv_l, wo_l, bo_l = [], [], [], []
    ln1g_l, ln1b_l, w1_l, b1_l = [], [], [], []
    w2_l, b2_l, ln2g_l, ln2b_l = [], [], [], []
    for _ in range(NUM_LAYERS):
        wq, wk, wv = rnd((H, H)), rnd((H, H)), rnd((H, H))
        # lane-padded fused QKV: [H, 3*NH*128], each head 128-lane aligned,
        # 1/sqrt(DH) folded into the Q columns.
        wqkv = jnp.zeros((H, 3 * NH * DHP), jnp.float32)
        for h in range(NH):
            wqkv = wqkv.at[:, h * DHP:h * DHP + DH].set(
                wq[:, h * DH:(h + 1) * DH] * q_scale)
            wqkv = wqkv.at[:, NH * DHP + h * DHP:NH * DHP + h * DHP + DH].set(
                wk[:, h * DH:(h + 1) * DH])
            wqkv = wqkv.at[:, 2 * NH * DHP + h * DHP:
                           2 * NH * DHP + h * DHP + DH].set(
                wv[:, h * DH:(h + 1) * DH])
        wqkv_l.append(wqkv.astype(jnp.bfloat16))
        bqkv_l.append(zeros((1, 3 * NH * DHP)))

        # lane-padded output projection: [NH*128, H] with zero rows for padding
        wo_real = rnd((H, H))
        wo = jnp.zeros((NH * DHP, H), jnp.float32)
        for h in range(NH):
            wo = wo.at[h * DHP:h * DHP + DH, :].set(
                wo_real[h * DH:(h + 1) * DH, :])
        wo_l.append(wo.astype(jnp.bfloat16))
        bo_l.append(zeros((1, H)))

        ln1g_l.append(ones((1, H))); ln1b_l.append(zeros((1, H)))
        w1_l.append(rnd((H, FF)).astype(jnp.bfloat16)); b1_l.append(zeros((1, FF)))
        w2_l.append(rnd((FF, H)).astype(jnp.bfloat16)); b2_l.append(zeros((1, H)))
        ln2g_l.append(ones((1, H))); ln2b_l.append(zeros((1, H)))

    # classifier weight padded to a lane-dense 128-wide output (extra cols = 0)
    cls_w = jnp.zeros((H, LANE), jnp.float32)
    cls_w = cls_w.at[:, :NUM_LABELS].set(rnd((H, NUM_LABELS)))

    return {
        "word_emb": rnd((VOCAB, H)),
        "pos_emb": rnd((S, H)),
        "type_emb": rnd((TYPE_VOCAB, H)),
        "emb_ln_g": ones((1, H)), "emb_ln_b": zeros((1, H)),
        # stacked per-layer weights, leading axis = layer
        "wqkv": jnp.stack(wqkv_l), "bqkv": jnp.stack(bqkv_l),
        "wo": jnp.stack(wo_l), "bo": jnp.stack(bo_l),
        "ln1_g": jnp.stack(ln1g_l), "ln1_b": jnp.stack(ln1b_l),
        "w1": jnp.stack(w1_l), "b1": jnp.stack(b1_l),
        "w2": jnp.stack(w2_l), "b2": jnp.stack(b2_l),
        "ln2_g": jnp.stack(ln2g_l), "ln2_b": jnp.stack(ln2b_l),
        # head
        "pool_w": rnd((H, H)).astype(jnp.bfloat16), "pool_b": zeros((1, H)),
        "ib_mu_w": rnd((H, H)).astype(jnp.bfloat16), "ib_mu_b": zeros((1, H)),
        "ib_lv_w": rnd((H, H)).astype(jnp.bfloat16), "ib_lv_b": zeros((1, H)),
        "cls_w": cls_w.astype(jnp.bfloat16), "cls_b": zeros((1, LANE)),
    }


# ----------------- forward pass (one pallas_call) -----------------
def forward(params, input_ids, attention_mask, labels, token_type_ids, ib_eps):
    # embedding gathers + word/pos/type sum stay in plain JAX (fuse into gather)
    emb = (params["word_emb"][input_ids]
           + params["pos_emb"][None, :, :]
           + params["type_emb"][token_type_ids]).reshape(B * S, H)

    # additive attention mask, computed once, padded lane-dense to [B, 128]
    maskf = attention_mask.astype(jnp.float32)                    # [B, S]
    addmask = jnp.pad((1.0 - maskf) * NEG_INF, ((0, 0), (0, LANE - S)))

    labels2d = labels.astype(jnp.int32)[:, None]                  # [B, 1]

    args = (emb, params["emb_ln_g"], params["emb_ln_b"],
            addmask, ib_eps, labels2d,
            params["wqkv"], params["bqkv"], params["wo"], params["bo"],
            params["ln1_g"], params["ln1_b"],
            params["w1"], params["b1"], params["w2"], params["b2"],
            params["ln2_g"], params["ln2_b"],
            params["pool_w"], params["pool_b"],
            params["ib_mu_w"], params["ib_mu_b"],
            params["ib_lv_w"], params["ib_lv_b"],
            params["cls_w"], params["cls_b"])

    out_shapes = (
        jax.ShapeDtypeStruct((B, LANE), jnp.float32),   # padded logits
        jax.ShapeDtypeStruct((B, H), jnp.float32),      # features (IB z)
        jax.ShapeDtypeStruct((1, LANE), jnp.float32),   # packed losses
    )

    # TODO(synk): on v7x a leading "parallel" row-block grid axis would split
    # rows across the 2 TensorCores, but only worthwhile once B*S >= 256 rows.
    logits_pad, features, losses = pl.pallas_call(
        fused_forward_kernel,
        out_shape=out_shapes,
        grid=(1,),
        in_specs=[_full_spec(a.shape) for a in args],
        out_specs=tuple(_full_spec(o.shape) for o in out_shapes),
        scratch_shapes=[pltpu.VMEM((B * S, NH * DHP), jnp.float32)],
        compiler_params=pltpu.CompilerParams(
            dimension_semantics=("arbitrary",)),
    )(*args)

    # TODO(synk): AnchoredFeatureRegularizer (use_afr) not implemented — its
    # stateful anchor EMA update on detached features has no clean kernel map.
    return {
        "logits": logits_pad[:, :NUM_LABELS],
        "features": features,
        "classification_loss": losses[0, 0],
        "ib_loss": losses[0, 1],
        "loss": losses[0, 2],
    }


# ----------------- driver -----------------
if __name__ == "__main__":
    root = jax.random.PRNGKey(0)
    k_param, k_ids, k_lab, k_eps = jax.random.split(root, 4)

    params = init_params(k_param)

    input_ids = jax.random.randint(k_ids, (B, S), 0, VOCAB, dtype=jnp.int32)
    attention_mask = jnp.ones((B, S), jnp.int32).at[1, S - 2:].set(0)  # pad tail
    token_type_ids = jnp.zeros((B, S), jnp.int32)
    labels = jax.random.randint(k_lab, (B,), 0, NUM_LABELS, dtype=jnp.int32)
    ib_eps = jax.random.normal(k_eps, (B, H), jnp.float32)   # reparam noise

    fwd = jax.jit(forward)
    out = fwd(params, input_ids, attention_mask, labels, token_type_ids, ib_eps)
    jax.block_until_ready(out["loss"])

    assert out["logits"].shape == (B, NUM_LABELS)
    assert out["features"].shape == (B, H)
    assert jnp.isfinite(out["loss"])
    print("KERNEL_OK")
</pallas_src>

<mosaic_0001>
module attributes {stable_mosaic.version = 11 : i64} {
  func.func @fused_forward_kernel(%arg0: i32, %arg1: memref<16x128xf32, #tpu.memory_space<vmem>>, %arg2: memref<1x128xf32, #tpu.memory_space<vmem>>, %arg3: memref<1x128xf32, #tpu.memory_space<vmem>>, %arg4: memref<2x128xf32, #tpu.memory_space<vmem>>, %arg5: memref<2x128xf32, #tpu.memory_space<vmem>>, %arg6: memref<2x1xi32, #tpu.memory_space<vmem>>, %arg7: memref<2x128x768xbf16, #tpu.memory_space<vmem>>, %arg8: memref<2x1x768xf32, #tpu.memory_space<vmem>>, %arg9: memref<2x256x128xbf16, #tpu.memory_space<vmem>>, %arg10: memref<2x1x128xf32, #tpu.memory_space<vmem>>, %arg11: memref<2x1x128xf32, #tpu.memory_space<vmem>>, %arg12: memref<2x1x128xf32, #tpu.memory_space<vmem>>, %arg13: memref<2x128x512xbf16, #tpu.memory_space<vmem>>, %arg14: memref<2x1x512xf32, #tpu.memory_space<vmem>>, %arg15: memref<2x512x128xbf16, #tpu.memory_space<vmem>>, %arg16: memref<2x1x128xf32, #tpu.memory_space<vmem>>, %arg17: memref<2x1x128xf32, #tpu.memory_space<vmem>>, %arg18: memref<2x1x128xf32, #tpu.memory_space<vmem>>, %arg19: memref<128x128xbf16, #tpu.memory_space<vmem>>, %arg20: memref<1x128xf32, #tpu.memory_space<vmem>>, %arg21: memref<128x128xbf16, #tpu.memory_space<vmem>>, %arg22: memref<1x128xf32, #tpu.memory_space<vmem>>, %arg23: memref<128x128xbf16, #tpu.memory_space<vmem>>, %arg24: memref<1x128xf32, #tpu.memory_space<vmem>>, %arg25: memref<128x128xbf16, #tpu.memory_space<vmem>>, %arg26: memref<1x128xf32, #tpu.memory_space<vmem>>, %arg27: memref<2x128xf32, #tpu.memory_space<vmem>>, %arg28: memref<2x128xf32, #tpu.memory_space<vmem>>, %arg29: memref<1x128xf32, #tpu.memory_space<vmem>>, %arg30: memref<16x256xf32, #tpu.memory_space<vmem>>) attributes {dimension_semantics = [#tpu.dimension_semantics<arbitrary>], iteration_bounds = array<i64: 1>, scalar_prefetch = 0 : i64, scratch_operands = 1 : i64, tpu.core_type = #tpu.core_type<tc>, window_params = [{pipeline_mode = #tpu.pipeline_mode<synchronous>, transform_indices = @transform_0, window_bounds = array<i64: 16, 128>}, {pipeline_mode = #tpu.pipeline_mode<synchronous>, transform_indices = @transform_1, window_bounds = array<i64: 1, 128>}, {pipeline_mode = #tpu.pipeline_mode<synchronous>, transform_indices = @transform_2, window_bounds = array<i64: 1, 128>}, {pipeline_mode = #tpu.pipeline_mode<synchronous>, transform_indices = @transform_3, window_bounds = array<i64: 2, 128>}, {pipeline_mode = #tpu.pipeline_mode<synchronous>, transform_indices = @transform_4, window_bounds = array<i64: 2, 128>}, {pipeline_mode = #tpu.pipeline_mode<synchronous>, transform_indices = @transform_5, window_bounds = array<i64: 2, 1>}, {pipeline_mode = #tpu.pipeline_mode<synchronous>, transform_indices = @transform_6, window_bounds = array<i64: 2, 128, 768>}, {pipeline_mode = #tpu.pipeline_mode<synchronous>, transform_indices = @transform_7, window_bounds = array<i64: 2, 1, 768>}, {pipeline_mode = #tpu.pipeline_mode<synchronous>, transform_indices = @transform_8, window_bounds = array<i64: 2, 256, 128>}, {pipeline_mode = #tpu.pipeline_mode<synchronous>, transform_indices = @transform_9, window_bounds = array<i64: 2, 1, 128>}, {pipeline_mode = #tpu.pipeline_mode<synchronous>, transform_indices = @transform_10, window_bounds = array<i64: 2, 1, 128>}, {pipeline_mode = #tpu.pipeline_mode<synchronous>, transform_indices = @transform_11, window_bounds = array<i64: 2, 1, 128>}, {pipeline_mode = #tpu.pipeline_mode<synchronous>, transform_indices = @transform_12, window_bounds = array<i64: 2, 128, 512>}, {pipeline_mode = #tpu.pipeline_mode<synchronous>, transform_indices = @transform_13, window_bounds = array<i64: 2, 1, 512>}, {pipeline_mode = #tpu.pipeline_mode<synchronous>, transform_indices = @transform_14, window_bounds = array<i64: 2, 512, 128>}, {pipeline_mode = #tpu.pipeline_mode<synchronous>, transform_indices = @transform_15, window_bounds = array<i64: 2, 1, 128>}, {pipeline_mode = #tpu.pipeline_mode<synchronous>, transform_indices = @transform_16, window_bounds = array<i64: 2, 1, 128>}, {pipeline_mode = #tpu.pipeline_mode<synchronous>, transform_indices = @transform_17, window_bounds = array<i64: 2, 1, 128>}, {pipeline_mode = #tpu.pipeline_mode<synchronous>, transform_indices = @transform_18, window_bounds = array<i64: 128, 128>}, {pipeline_mode = #tpu.pipeline_mode<synchronous>, transform_indices = @transform_19, window_bounds = array<i64: 1, 128>}, {pipeline_mode = #tpu.pipeline_mode<synchronous>, transform_indices = @transform_20, window_bounds = array<i64: 128, 128>}, {pipeline_mode = #tpu.pipeline_mode<synchronous>, transform_indices = @transform_21, window_bounds = array<i64: 1, 128>}, {pipeline_mode = #tpu.pipeline_mode<synchronous>, transform_indices = @transform_22, window_bounds = array<i64: 128, 128>}, {pipeline_mode = #tpu.pipeline_mode<synchronous>, transform_indices = @transform_23, window_bounds = array<i64: 1, 128>}, {pipeline_mode = #tpu.pipeline_mode<synchronous>, transform_indices = @transform_24, window_bounds = array<i64: 128, 128>}, {pipeline_mode = #tpu.pipeline_mode<synchronous>, transform_indices = @transform_25, window_bounds = array<i64: 1, 128>}, {pipeline_mode = #tpu.pipeline_mode<synchronous>, transform_indices = @transform_26, window_bounds = array<i64: 2, 128>}, {pipeline_mode = #tpu.pipeline_mode<synchronous>, transform_indices = @transform_27, window_bounds = array<i64: 2, 128>}, {pipeline_mode = #tpu.pipeline_mode<synchronous>, transform_indices = @transform_28, window_bounds = array<i64: 1, 128>}]} {
    %c0 = arith.constant 0 : index
    %c0_0 = arith.constant 0 : index
    %0 = vector.load %arg1[%c0, %c0_0] : memref<16x128xf32, #tpu.memory_space<vmem>>, vector<16x128xf32>
    %c0_1 = arith.constant 0 : index
    %c0_2 = arith.constant 0 : index
    %1 = vector.load %arg2[%c0_1, %c0_2] : memref<1x128xf32, #tpu.memory_space<vmem>>, vector<1x128xf32>
    %c0_3 = arith.constant 0 : index
    %c0_4 = arith.constant 0 : index
    %2 = vector.load %arg3[%c0_3, %c0_4] : memref<1x128xf32, #tpu.memory_space<vmem>>, vector<1x128xf32>
    %cst = arith.constant dense<0.000000e+00> : vector<16xf32>
    %3 = vector.multi_reduction <add>, %0, %cst [1] : vector<16x128xf32> to vector<16xf32>
    %4 = vector.shape_cast %3 : vector<16xf32> to vector<16x1xf32>
    %cst_5 = arith.constant 1.280000e+02 : f32
    %5 = vector.broadcast %cst_5 : f32 to vector<16x1xf32>
    %6 = arith.divf %4, %5 : vector<16x1xf32>
    %7 = vector.broadcast %6 : vector<16x1xf32> to vector<16x128xf32>
    %8 = arith.subf %0, %7 : vector<16x128xf32>
    %9 = arith.mulf %8, %8 : vector<16x128xf32>
    %cst_6 = arith.constant dense<0.000000e+00> : vector<16xf32>
    %10 = vector.multi_reduction <add>, %9, %cst_6 [1] : vector<16x128xf32> to vector<16xf32>
    %11 = vector.shape_cast %10 : vector<16xf32> to vector<16x1xf32>
    %cst_7 = arith.constant 1.280000e+02 : f32
    %12 = vector.broadcast %cst_7 : f32 to vector<16x1xf32>
    %13 = arith.divf %11, %12 : vector<16x1xf32>
    %cst_8 = arith.constant 9.99999996E-13 : f32
    %14 = vector.broadcast %cst_8 : f32 to vector<16x1xf32>
    %15 = arith.addf %13, %14 : vector<16x1xf32>
    %16 = math.rsqrt %15 : vector<16x1xf32>
    %17 = vector.broadcast %16 : vector<16x1xf32> to vector<16x128xf32>
    %18 = arith.mulf %8, %17 : vector<16x128xf32>
    %19 = vector.broadcast %1 : vector<1x128xf32> to vector<16x128xf32>
    %20 = arith.mulf %18, %19 : vector<16x128xf32>
    %21 = vector.broadcast %2 : vector<1x128xf32> to vector<16x128xf32>
    %22 = arith.addf %20, %21 : vector<16x128xf32>
    %c0_9 = arith.constant 0 : index
    %c0_10 = arith.constant 0 : index
    %23 = vector.load %arg4[%c0_9, %c0_10] : memref<2x128xf32, #tpu.memory_space<vmem>>, vector<2x128xf32>
    %c0_11 = arith.constant 0 : index
    %c0_12 = arith.constant 0 : index
    %c0_13 = arith.constant 0 : index
    %24 = vector.load %arg7[%c0_11, %c0_12, %c0_13] : memref<2x128x768xbf16, #tpu.memory_space<vmem>>, vector<1x128x768xbf16>
    %25 = vector.shape_cast %24 : vector<1x128x768xbf16> to vector<128x768xbf16>
    %26 = arith.truncf %22 : vector<16x128xf32> to vector<16x128xbf16>
    %cst_14 = arith.constant dense<0.000000e+00> : vector<16x768xf32>
    %27 = tpu.matmul %26, %25, %cst_14 {dimension_numbers = #tpu.dot_dimension_numbers<[1], [0], [0], [1], [0, 0, 1, 1], [], []>} : vector<16x128xbf16>, vector<128x768xbf16>, vector<16x768xf32> -> vector<16x768xf32>
    %c0_15 = arith.constant 0 : index
    %c0_16 = arith.constant 0 : index
    %c0_17 = arith.constant 0 : index
    %28 = vector.load %arg8[%c0_15, %c0_16, %c0_17] : memref<2x1x768xf32, #tpu.memory_space<vmem>>, vector<1x1x768xf32>
    %29 = vector.shape_cast %28 : vector<1x1x768xf32> to vector<1x768xf32>
    %30 = vector.broadcast %29 : vector<1x768xf32> to vector<16x768xf32>
    %31 = arith.addf %27, %30 : vector<16x768xf32>
    %32 = arith.truncf %31 : vector<16x768xf32> to vector<16x768xbf16>
    %33 = vector.extract_strided_slice %23 {offsets = [0, 0], sizes = [1, 8], strides = [1, 1]} : vector<2x128xf32> to vector<1x8xf32>
    %34 = vector.extract_strided_slice %32 {offsets = [0, 0], sizes = [8, 128], strides = [1, 1]} : vector<16x768xbf16> to vector<8x128xbf16>
    %35 = vector.extract_strided_slice %32 {offsets = [0, 256], sizes = [8, 128], strides = [1, 1]} : vector<16x768xbf16> to vector<8x128xbf16>
    %36 = vector.extract_strided_slice %32 {offsets = [0, 512], sizes = [8, 128], strides = [1, 1]} : vector<16x768xbf16> to vector<8x128xbf16>
    %cst_18 = arith.constant dense<0.000000e+00> : vector<8x8xf32>
    %37 = tpu.matmul %34, %35, %cst_18 {dimension_numbers = #tpu.dot_dimension_numbers<[1], [1], [0], [0], [0, 0, 1, 0], [], []>} : vector<8x128xbf16>, vector<8x128xbf16>, vector<8x8xf32> -> vector<8x8xf32>
    %38 = vector.broadcast %33 : vector<1x8xf32> to vector<8x8xf32>
    %39 = arith.addf %37, %38 : vector<8x8xf32>
    %cst_19 = arith.constant dense<0xFF800000> : vector<8xf32>
    %40 = vector.multi_reduction <maximumf>, %39, %cst_19 [1] : vector<8x8xf32> to vector<8xf32>
    %41 = vector.shape_cast %40 : vector<8xf32> to vector<8x1xf32>
    %42 = vector.broadcast %41 : vector<8x1xf32> to vector<8x8xf32>
    %43 = arith.subf %39, %42 : vector<8x8xf32>
    %44 = math.exp %43 : vector<8x8xf32>
    %cst_20 = arith.constant dense<0.000000e+00> : vector<8xf32>
    %45 = vector.multi_reduction <add>, %44, %cst_20 [1] : vector<8x8xf32> to vector<8xf32>
    %46 = vector.shape_cast %45 : vector<8xf32> to vector<8x1xf32>
    %47 = tpu.reciprocal %46 {approx = true} : vector<8x1xf32> -> vector<8x1xf32>
    %48 = vector.broadcast %47 : vector<8x1xf32> to vector<8x8xf32>
    %49 = arith.mulf %44, %48 : vector<8x8xf32>
    %50 = arith.truncf %49 : vector<8x8xf32> to vector<8x8xbf16>
    %cst_21 = arith.constant dense<0.000000e+00> : vector<8x128xf32>
    %51 = tpu.matmul %50, %36, %cst_21 {dimension_numbers = #tpu.dot_dimension_numbers<[1], [0], [0], [1], [0, 0, 1, 1], [], []>} : vector<8x8xbf16>, vector<8x128xbf16>, vector<8x128xf32> -> vector<8x128xf32>
    %c0_22 = arith.constant 0 : index
    %c0_23 = arith.constant 0 : index
    %52 = vector.load %arg30[%c0_22, %c0_23] : memref<16x256xf32, #tpu.memory_space<vmem>>, vector<8x128xf32>
    tpu.vector_store %arg30[%c0_22, %c0_23], %51 {strides = array<i32>} : memref<16x256xf32, #tpu.memory_space<vmem>>, vector<8x128xf32>,
    %53 = vector.extract_strided_slice %32 {offsets = [0, 128], sizes = [8, 128], strides = [1, 1]} : vector<16x768xbf16> to vector<8x128xbf16>
    %54 = vector.extract_strided_slice %32 {offsets = [0, 384], sizes = [8, 128], strides = [1, 1]} : vector<16x768xbf16> to vector<8x128xbf16>
    %55 = vector.extract_strided_slice %32 {offsets = [0, 640], sizes = [8, 128], strides = [1, 1]} : vector<16x768xbf16> to vector<8x128xbf16>
    %cst_24 = arith.constant dense<0.000000e+00> : vector<8x8xf32>
    %56 = tpu.matmul %53, %54, %cst_24 {dimension_numbers = #tpu.dot_dimension_numbers<[1], [1], [0], [0], [0, 0, 1, 0], [], []>} : vector<8x128xbf16>, vector<8x128xbf16>, vector<8x8xf32> -> vector<8x8xf32>
    %57 = vector.broadcast %33 : vector<1x8xf32> to vector<8x8xf32>
    %58 = arith.addf %56, %57 : vector<8x8xf32>
    %cst_25 = arith.constant dense<0xFF800000> : vector<8xf32>
    %59 = vector.multi_reduction <maximumf>, %58, %cst_25 [1] : vector<8x8xf32> to vector<8xf32>
    %60 = vector.shape_cast %59 : vector<8xf32> to vector<8x1xf32>
    %61 = vector.broadcast %60 : vector<8x1xf32> to vector<8x8xf32>
    %62 = arith.subf %58, %61 : vector<8x8xf32>
    %63 = math.exp %62 : vector<8x8xf32>
    %cst_26 = arith.constant dense<0.000000e+00> : vector<8xf32>
    %64 = vector.multi_reduction <add>, %63, %cst_26 [1] : vector<8x8xf32> to vector<8xf32>
    %65 = vector.shape_cast %64 : vector<8xf32> to vector<8x1xf32>
    %66 = tpu.reciprocal %65 {approx = true} : vector<8x1xf32> -> vector<8x1xf32>
    %67 = vector.broadcast %66 : vector<8x1xf32> to vector<8x8xf32>
    %68 = arith.mulf %63, %67 : vector<8x8xf32>
    %69 = arith.truncf %68 : vector<8x8xf32> to vector<8x8xbf16>
    %cst_27 = arith.constant dense<0.000000e+00> : vector<8x128xf32>
    %70 = tpu.matmul %69, %55, %cst_27 {dimension_numbers = #tpu.dot_dimension_numbers<[1], [0], [0], [1], [0, 0, 1, 1], [], []>} : vector<8x8xbf16>, vector<8x128xbf16>, vector<8x128xf32> -> vector<8x128xf32>
    %c0_28 = arith.constant 0 : index
    %c128 = arith.constant 128 : index
    %71 = vector.load %arg30[%c0_28, %c128] : memref<16x256xf32, #tpu.memory_space<vmem>>, vector<8x128xf32>
    tpu.vector_store %arg30[%c0_28, %c128], %70 {strides = array<i32>} : memref<16x256xf32, #tpu.memory_space<vmem>>, vector<8x128xf32>,
    %72 = vector.extract_strided_slice %23 {offsets = [1, 0], sizes = [1, 8], strides = [1, 1]} : vector<2x128xf32> to vector<1x8xf32>
    %73 = vector.extract_strided_slice %32 {offsets = [8, 0], sizes = [8, 128], strides = [1, 1]} : vector<16x768xbf16> to vector<8x128xbf16>
    %74 = vector.extract_strided_slice %32 {offsets = [8, 256], sizes = [8, 128], strides = [1, 1]} : vector<16x768xbf16> to vector<8x128xbf16>
    %75 = vector.extract_strided_slice %32 {offsets = [8, 512], sizes = [8, 128], strides = [1, 1]} : vector<16x768xbf16> to vector<8x128xbf16>
    %cst_29 = arith.constant dense<0.000000e+00> : vector<8x8xf32>
    %76 = tpu.matmul %73, %74, %cst_29 {dimension_numbers = #tpu.dot_dimension_numbers<[1], [1], [0], [0], [0, 0, 1, 0], [], []>} : vector<8x128xbf16>, vector<8x128xbf16>, vector<8x8xf32> -> vector<8x8xf32>
    %77 = vector.broadcast %72 : vector<1x8xf32> to vector<8x8xf32>
    %78 = arith.addf %76, %77 : vector<8x8xf32>
    %cst_30 = arith.constant dense<0xFF800000> : vector<8xf32>
    %79 = vector.multi_reduction <maximumf>, %78, %cst_30 [1] : vector<8x8xf32> to vector<8xf32>
    %80 = vector.shape_cast %79 : vector<8xf32> to vector<8x1xf32>
    %81 = vector.broadcast %80 : vector<8x1xf32> to vector<8x8xf32>
    %82 = arith.subf %78, %81 : vector<8x8xf32>
    %83 = math.exp %82 : vector<8x8xf32>
    %cst_31 = arith.constant dense<0.000000e+00> : vector<8xf32>
    %84 = vector.multi_reduction <add>, %83, %cst_31 [1] : vector<8x8xf32> to vector<8xf32>
    %85 = vector.shape_cast %84 : vector<8xf32> to vector<8x1xf32>
    %86 = tpu.reciprocal %85 {approx = true} : vector<8x1xf32> -> vector<8x1xf32>
    %87 = vector.broadcast %86 : vector<8x1xf32> to vector<8x8xf32>
    %88 = arith.mulf %83, %87 : vector<8x8xf32>
    %89 = arith.truncf %88 : vector<8x8xf32> to vector<8x8xbf16>
    %cst_32 = arith.constant dense<0.000000e+00> : vector<8x128xf32>
    %90 = tpu.matmul %89, %75, %cst_32 {dimension_numbers = #tpu.dot_dimension_numbers<[1], [0], [0], [1], [0, 0, 1, 1], [], []>} : vector<8x8xbf16>, vector<8x128xbf16>, vector<8x128xf32> -> vector<8x128xf32>
    %c8 = arith.constant 8 : index
    %c0_33 = arith.constant 0 : index
    %91 = vector.load %arg30[%c8, %c0_33] : memref<16x256xf32, #tpu.memory_space<vmem>>, vector<8x128xf32>
    tpu.vector_store %arg30[%c8, %c0_33], %90 {strides = array<i32>} : memref<16x256xf32, #tpu.memory_space<vmem>>, vector<8x128xf32>,
    %92 = vector.extract_strided_slice %32 {offsets = [8, 128], sizes = [8, 128], strides = [1, 1]} : vector<16x768xbf16> to vector<8x128xbf16>
    %93 = vector.extract_strided_slice %32 {offsets = [8, 384], sizes = [8, 128], strides = [1, 1]} : vector<16x768xbf16> to vector<8x128xbf16>
    %94 = vector.extract_strided_slice %32 {offsets = [8, 640], sizes = [8, 128], strides = [1, 1]} : vector<16x768xbf16> to vector<8x128xbf16>
    %cst_34 = arith.constant dense<0.000000e+00> : vector<8x8xf32>
    %95 = tpu.matmul %92, %93, %cst_34 {dimension_numbers = #tpu.dot_dimension_numbers<[1], [1], [0], [0], [0, 0, 1, 0], [], []>} : vector<8x128xbf16>, vector<8x128xbf16>, vector<8x8xf32> -> vector<8x8xf32>
    %96 = vector.broadcast %72 : vector<1x8xf32> to vector<8x8xf32>
    %97 = arith.addf %95, %96 : vector<8x8xf32>
    %cst_35 = arith.constant dense<0xFF800000> : vector<8xf32>
    %98 = vector.multi_reduction <maximumf>, %97, %cst_35 [1] : vector<8x8xf32> to vector<8xf32>
    %99 = vector.shape_cast %98 : vector<8xf32> to vector<8x1xf32>
    %100 = vector.broadcast %99 : vector<8x1xf32> to vector<8x8xf32>
    %101 = arith.subf %97, %100 : vector<8x8xf32>
    %102 = math.exp %101 : vector<8x8xf32>
    %cst_36 = arith.constant dense<0.000000e+00> : vector<8xf32>
    %103 = vector.multi_reduction <add>, %102, %cst_36 [1] : vector<8x8xf32> to vector<8xf32>
    %104 = vector.shape_cast %103 : vector<8xf32> to vector<8x1xf32>
    %105 = tpu.reciprocal %104 {approx = true} : vector<8x1xf32> -> vector<8x1xf32>
    %106 = vector.broadcast %105 : vector<8x1xf32> to vector<8x8xf32>
    %107 = arith.mulf %102, %106 : vector<8x8xf32>
    %108 = arith.truncf %107 : vector<8x8xf32> to vector<8x8xbf16>
    %cst_37 = arith.constant dense<0.000000e+00> : vector<8x128xf32>
    %109 = tpu.matmul %108, %94, %cst_37 {dimension_numbers = #tpu.dot_dimension_numbers<[1], [0], [0], [1], [0, 0, 1, 1], [], []>} : vector<8x8xbf16>, vector<8x128xbf16>, vector<8x128xf32> -> vector<8x128xf32>
    %c8_38 = arith.constant 8 : index
    %c128_39 = arith.constant 128 : index
    %110 = vector.load %arg30[%c8_38, %c128_39] : memref<16x256xf32, #tpu.memory_space<vmem>>, vector<8x128xf32>
    tpu.vector_store %arg30[%c8_38, %c128_39], %109 {strides = array<i32>} : memref<16x256xf32, #tpu.memory_space<vmem>>, vector<8x128xf32>,
    %c0_40 = arith.constant 0 : index
    %c0_41 = arith.constant 0 : index
    %111 = vector.load %arg30[%c0_40, %c0_41] : memref<16x256xf32, #tpu.memory_space<vmem>>, vector<16x256xf32>
    %c0_42 = arith.constant 0 : index
    %c0_43 = arith.constant 0 : index
    %c0_44 = arith.constant 0 : index
    %112 = vector.load %arg9[%c0_42, %c0_43, %c0_44] : memref<2x256x128xbf16, #tpu.memory_space<vmem>>, vector<1x256x128xbf16>
    %113 = vector.shape_cast %112 : vector<1x256x128xbf16> to vector<256x128xbf16>
    %114 = arith.truncf %111 : vector<16x256xf32> to vector<16x256xbf16>
    %cst_45 = arith.constant dense<0.000000e+00> : vector<16x128xf32>
    %115 = tpu.matmul %114, %113, %cst_45 {dimension_numbers = #tpu.dot_dimension_numbers<[1], [0], [0], [1], [0, 0, 1, 1], [], []>} : vector<16x256xbf16>, vector<256x128xbf16>, vector<16x128xf32> -> vector<16x128xf32>
    %c0_46 = arith.constant 0 : index
    %c0_47 = arith.constant 0 : index
    %c0_48 = arith.constant 0 : index
    %116 = vector.load %arg10[%c0_46, %c0_47, %c0_48] : memref<2x1x128xf32, #tpu.memory_space<vmem>>, vector<1x1x128xf32>
    %117 = vector.shape_cast %116 : vector<1x1x128xf32> to vector<1x128xf32>
    %118 = vector.broadcast %117 : vector<1x128xf32> to vector<16x128xf32>
    %119 = arith.addf %115, %118 : vector<16x128xf32>
    %120 = arith.addf %22, %119 : vector<16x128xf32>
    %c0_49 = arith.constant 0 : index
    %c0_50 = arith.constant 0 : index
    %c0_51 = arith.constant 0 : index
    %121 = vector.load %arg11[%c0_49, %c0_50, %c0_51] : memref<2x1x128xf32, #tpu.memory_space<vmem>>, vector<1x1x128xf32>
    %122 = vector.shape_cast %121 : vector<1x1x128xf32> to vector<1x128xf32>
    %c0_52 = arith.constant 0 : index
    %c0_53 = arith.constant 0 : index
    %c0_54 = arith.constant 0 : index
    %123 = vector.load %arg12[%c0_52, %c0_53, %c0_54] : memref<2x1x128xf32, #tpu.memory_space<vmem>>, vector<1x1x128xf32>
    %124 = vector.shape_cast %123 : vector<1x1x128xf32> to vector<1x128xf32>
    %cst_55 = arith.constant dense<0.000000e+00> : vector<16xf32>
    %125 = vector.multi_reduction <add>, %120, %cst_55 [1] : vector<16x128xf32> to vector<16xf32>
    %126 = vector.shape_cast %125 : vector<16xf32> to vector<16x1xf32>
    %cst_56 = arith.constant 1.280000e+02 : f32
    %127 = vector.broadcast %cst_56 : f32 to vector<16x1xf32>
    %128 = arith.divf %126, %127 : vector<16x1xf32>
    %129 = vector.broadcast %128 : vector<16x1xf32> to vector<16x128xf32>
    %130 = arith.subf %120, %129 : vector<16x128xf32>
    %131 = arith.mulf %130, %130 : vector<16x128xf32>
    %cst_57 = arith.constant dense<0.000000e+00> : vector<16xf32>
    %132 = vector.multi_reduction <add>, %131, %cst_57 [1] : vector<16x128xf32> to vector<16xf32>
    %133 = vector.shape_cast %132 : vector<16xf32> to vector<16x1xf32>
    %cst_58 = arith.constant 1.280000e+02 : f32
    %134 = vector.broadcast %cst_58 : f32 to vector<16x1xf32>
    %135 = arith.divf %133, %134 : vector<16x1xf32>
    %cst_59 = arith.constant 9.99999996E-13 : f32
    %136 = vector.broadcast %cst_59 : f32 to vector<16x1xf32>
    %137 = arith.addf %135, %136 : vector<16x1xf32>
    %138 = math.rsqrt %137 : vector<16x1xf32>
    %139 = vector.broadcast %138 : vector<16x1xf32> to vector<16x128xf32>
    %140 = arith.mulf %130, %139 : vector<16x128xf32>
    %141 = vector.broadcast %122 : vector<1x128xf32> to vector<16x128xf32>
    %142 = arith.mulf %140, %141 : vector<16x128xf32>
    %143 = vector.broadcast %124 : vector<1x128xf32> to vector<16x128xf32>
    %144 = arith.addf %142, %143 : vector<16x128xf32>
    %c0_60 = arith.constant 0 : index
    %c0_61 = arith.constant 0 : index
    %c0_62 = arith.constant 0 : index
    %145 = vector.load %arg13[%c0_60, %c0_61, %c0_62] : memref<2x128x512xbf16, #tpu.memory_space<vmem>>, vector<1x128x512xbf16>
    %146 = vector.shape_cast %145 : vector<1x128x512xbf16> to vector<128x512xbf16>
    %147 = arith.truncf %144 : vector<16x128xf32> to vector<16x128xbf16>
    %cst_63 = arith.constant dense<0.000000e+00> : vector<16x512xf32>
    %148 = tpu.matmul %147, %146, %cst_63 {dimension_numbers = #tpu.dot_dimension_numbers<[1], [0], [0], [1], [0, 0, 1, 1], [], []>} : vector<16x128xbf16>, vector<128x512xbf16>, vector<16x512xf32> -> vector<16x512xf32>
    %c0_64 = arith.constant 0 : index
    %c0_65 = arith.constant 0 : index
    %c0_66 = arith.constant 0 : index
    %149 = vector.load %arg14[%c0_64, %c0_65, %c0_66] : memref<2x1x512xf32, #tpu.memory_space<vmem>>, vector<1x1x512xf32>
    %150 = vector.shape_cast %149 : vector<1x1x512xf32> to vector<1x512xf32>
    %151 = vector.broadcast %150 : vector<1x512xf32> to vector<16x512xf32>
    %152 = arith.addf %148, %151 : vector<16x512xf32>
    %cst_67 = arith.constant 5.000000e-01 : f32
    %153 = vector.broadcast %cst_67 : f32 to vector<16x512xf32>
    %154 = arith.mulf %153, %152 : vector<16x512xf32>
    %cst_68 = arith.constant 4.471500e-02 : f32
    %155 = vector.broadcast %cst_68 : f32 to vector<16x512xf32>
    %156 = arith.mulf %155, %152 : vector<16x512xf32>
    %157 = arith.mulf %156, %152 : vector<16x512xf32>
    %158 = arith.mulf %157, %152 : vector<16x512xf32>
    %159 = arith.addf %152, %158 : vector<16x512xf32>
    %cst_69 = arith.constant 0.797884583 : f32
    %160 = vector.broadcast %cst_69 : f32 to vector<16x512xf32>
    %161 = arith.mulf %160, %159 : vector<16x512xf32>
    %162 = math.tanh %161 : vector<16x512xf32>
    %cst_70 = arith.constant 1.000000e+00 : f32
    %163 = vector.broadcast %cst_70 : f32 to vector<16x512xf32>
    %164 = arith.addf %163, %162 : vector<16x512xf32>
    %165 = arith.mulf %154, %164 : vector<16x512xf32>
    %c0_71 = arith.constant 0 : index
    %c0_72 = arith.constant 0 : index
    %c0_73 = arith.constant 0 : index
    %166 = vector.load %arg15[%c0_71, %c0_72, %c0_73] : memref<2x512x128xbf16, #tpu.memory_space<vmem>>, vector<1x512x128xbf16>
    %167 = vector.shape_cast %166 : vector<1x512x128xbf16> to vector<512x128xbf16>
    %168 = arith.truncf %165 : vector<16x512xf32> to vector<16x512xbf16>
    %cst_74 = arith.constant dense<0.000000e+00> : vector<16x128xf32>
    %169 = tpu.matmul %168, %167, %cst_74 {dimension_numbers = #tpu.dot_dimension_numbers<[1], [0], [0], [1], [0, 0, 1, 1], [], []>} : vector<16x512xbf16>, vector<512x128xbf16>, vector<16x128xf32> -> vector<16x128xf32>
    %c0_75 = arith.constant 0 : index
    %c0_76 = arith.constant 0 : index
    %c0_77 = arith.constant 0 : index
    %170 = vector.load %arg16[%c0_75, %c0_76, %c0_77] : memref<2x1x128xf32, #tpu.memory_space<vmem>>, vector<1x1x128xf32>
    %171 = vector.shape_cast %170 : vector<1x1x128xf32> to vector<1x128xf32>
    %172 = vector.broadcast %171 : vector<1x128xf32> to vector<16x128xf32>
    %173 = arith.addf %169, %172 : vector<16x128xf32>
    %174 = arith.addf %144, %173 : vector<16x128xf32>
    %c0_78 = arith.constant 0 : index
    %c0_79 = arith.constant 0 : index
    %c0_80 = arith.constant 0 : index
    %175 = vector.load %arg17[%c0_78, %c0_79, %c0_80] : memref<2x1x128xf32, #tpu.memory_space<vmem>>, vector<1x1x128xf32>
    %176 = vector.shape_cast %175 : vector<1x1x128xf32> to vector<1x128xf32>
    %c0_81 = arith.constant 0 : index
    %c0_82 = arith.constant 0 : index
    %c0_83 = arith.constant 0 : index
    %177 = vector.load %arg18[%c0_81, %c0_82, %c0_83] : memref<2x1x128xf32, #tpu.memory_space<vmem>>, vector<1x1x128xf32>
    %178 = vector.shape_cast %177 : vector<1x1x128xf32> to vector<1x128xf32>
    %cst_84 = arith.constant dense<0.000000e+00> : vector<16xf32>
    %179 = vector.multi_reduction <add>, %174, %cst_84 [1] : vector<16x128xf32> to vector<16xf32>
    %180 = vector.shape_cast %179 : vector<16xf32> to vector<16x1xf32>
    %cst_85 = arith.constant 1.280000e+02 : f32
    %181 = vector.broadcast %cst_85 : f32 to vector<16x1xf32>
    %182 = arith.divf %180, %181 : vector<16x1xf32>
    %183 = vector.broadcast %182 : vector<16x1xf32> to vector<16x128xf32>
    %184 = arith.subf %174, %183 : vector<16x128xf32>
    %185 = arith.mulf %184, %184 : vector<16x128xf32>
    %cst_86 = arith.constant dense<0.000000e+00> : vector<16xf32>
    %186 = vector.multi_reduction <add>, %185, %cst_86 [1] : vector<16x128xf32> to vector<16xf32>
    %187 = vector.shape_cast %186 : vector<16xf32> to vector<16x1xf32>
    %cst_87 = arith.constant 1.280000e+02 : f32
    %188 = vector.broadcast %cst_87 : f32 to vector<16x1xf32>
    %189 = arith.divf %187, %188 : vector<16x1xf32>
    %cst_88 = arith.constant 9.99999996E-13 : f32
    %190 = vector.broadcast %cst_88 : f32 to vector<16x1xf32>
    %191 = arith.addf %189, %190 : vector<16x1xf32>
    %192 = math.rsqrt %191 : vector<16x1xf32>
    %193 = vector.broadcast %192 : vector<16x1xf32> to vector<16x128xf32>
    %194 = arith.mulf %184, %193 : vector<16x128xf32>
    %195 = vector.broadcast %176 : vector<1x128xf32> to vector<16x128xf32>
    %196 = arith.mulf %194, %195 : vector<16x128xf32>
    %197 = vector.broadcast %178 : vector<1x128xf32> to vector<16x128xf32>
    %198 = arith.addf %196, %197 : vector<16x128xf32>
    %c1 = arith.constant 1 : index
    %c0_89 = arith.constant 0 : index
    %c0_90 = arith.constant 0 : index
    %199 = vector.load %arg7[%c1, %c0_89, %c0_90] : memref<2x128x768xbf16, #tpu.memory_space<vmem>>, vector<1x128x768xbf16>
    %200 = vector.shape_cast %199 : vector<1x128x768xbf16> to vector<128x768xbf16>
    %201 = arith.truncf %198 : vector<16x128xf32> to vector<16x128xbf16>
    %cst_91 = arith.constant dense<0.000000e+00> : vector<16x768xf32>
    %202 = tpu.matmul %201, %200, %cst_91 {dimension_numbers = #tpu.dot_dimension_numbers<[1], [0], [0], [1], [0, 0, 1, 1], [], []>} : vector<16x128xbf16>, vector<128x768xbf16>, vector<16x768xf32> -> vector<16x768xf32>
    %c1_92 = arith.constant 1 : index
    %c0_93 = arith.constant 0 : index
    %c0_94 = arith.constant 0 : index
    %203 = vector.load %arg8[%c1_92, %c0_93, %c0_94] : memref<2x1x768xf32, #tpu.memory_space<vmem>>, vector<1x1x768xf32>
    %204 = vector.shape_cast %203 : vector<1x1x768xf32> to vector<1x768xf32>
    %205 = vector.broadcast %204 : vector<1x768xf32> to vector<16x768xf32>
    %206 = arith.addf %202, %205 : vector<16x768xf32>
    %207 = arith.truncf %206 : vector<16x768xf32> to vector<16x768xbf16>
    %208 = vector.extract_strided_slice %23 {offsets = [0, 0], sizes = [1, 8], strides = [1, 1]} : vector<2x128xf32> to vector<1x8xf32>
    %209 = vector.extract_strided_slice %207 {offsets = [0, 0], sizes = [8, 128], strides = [1, 1]} : vector<16x768xbf16> to vector<8x128xbf16>
    %210 = vector.extract_strided_slice %207 {offsets = [0, 256], sizes = [8, 128], strides = [1, 1]} : vector<16x768xbf16> to vector<8x128xbf16>
    %211 = vector.extract_strided_slice %207 {offsets = [0, 512], sizes = [8, 128], strides = [1, 1]} : vector<16x768xbf16> to vector<8x128xbf16>
    %cst_95 = arith.constant dense<0.000000e+00> : vector<8x8xf32>
    %212 = tpu.matmul %209, %210, %cst_95 {dimension_numbers = #tpu.dot_dimension_numbers<[1], [1], [0], [0], [0, 0, 1, 0], [], []>} : vector<8x128xbf16>, vector<8x128xbf16>, vector<8x8xf32> -> vector<8x8xf32>
    %213 = vector.broadcast %208 : vector<1x8xf32> to vector<8x8xf32>
    %214 = arith.addf %212, %213 : vector<8x8xf32>
    %cst_96 = arith.constant dense<0xFF800000> : vector<8xf32>
    %215 = vector.multi_reduction <maximumf>, %214, %cst_96 [1] : vector<8x8xf32> to vector<8xf32>
    %216 = vector.shape_cast %215 : vector<8xf32> to vector<8x1xf32>
    %217 = vector.broadcast %216 : vector<8x1xf32> to vector<8x8xf32>
    %218 = arith.subf %214, %217 : vector<8x8xf32>
    %219 = math.exp %218 : vector<8x8xf32>
    %cst_97 = arith.constant dense<0.000000e+00> : vector<8xf32>
    %220 = vector.multi_reduction <add>, %219, %cst_97 [1] : vector<8x8xf32> to vector<8xf32>
    %221 = vector.shape_cast %220 : vector<8xf32> to vector<8x1xf32>
    %222 = tpu.reciprocal %221 {approx = true} : vector<8x1xf32> -> vector<8x1xf32>
    %223 = vector.broadcast %222 : vector<8x1xf32> to vector<8x8xf32>
    %224 = arith.mulf %219, %223 : vector<8x8xf32>
    %225 = arith.truncf %224 : vector<8x8xf32> to vector<8x8xbf16>
    %cst_98 = arith.constant dense<0.000000e+00> : vector<8x128xf32>
    %226 = tpu.matmul %225, %211, %cst_98 {dimension_numbers = #tpu.dot_dimension_numbers<[1], [0], [0], [1], [0, 0, 1, 1], [], []>} : vector<8x8xbf16>, vector<8x128xbf16>, vector<8x128xf32> -> vector<8x128xf32>
    %c0_99 = arith.constant 0 : index
    %c0_100 = arith.constant 0 : index
    %227 = vector.load %arg30[%c0_99, %c0_100] : memref<16x256xf32, #tpu.memory_space<vmem>>, vector<8x128xf32>
    tpu.vector_store %arg30[%c0_99, %c0_100], %226 {strides = array<i32>} : memref<16x256xf32, #tpu.memory_space<vmem>>, vector<8x128xf32>,
    %228 = vector.extract_strided_slice %207 {offsets = [0, 128], sizes = [8, 128], strides = [1, 1]} : vector<16x768xbf16> to vector<8x128xbf16>
    %229 = vector.extract_strided_slice %207 {offsets = [0, 384], sizes = [8, 128], strides = [1, 1]} : vector<16x768xbf16> to vector<8x128xbf16>
    %230 = vector.extract_strided_slice %207 {offsets = [0, 640], sizes = [8, 128], strides = [1, 1]} : vector<16x768xbf16> to vector<8x128xbf16>
    %cst_101 = arith.constant dense<0.000000e+00> : vector<8x8xf32>
    %231 = tpu.matmul %228, %229, %cst_101 {dimension_numbers = #tpu.dot_dimension_numbers<[1], [1], [0], [0], [0, 0, 1, 0], [], []>} : vector<8x128xbf16>, vector<8x128xbf16>, vector<8x8xf32> -> vector<8x8xf32>
    %232 = vector.broadcast %208 : vector<1x8xf32> to vector<8x8xf32>
    %233 = arith.addf %231, %232 : vector<8x8xf32>
    %cst_102 = arith.constant dense<0xFF800000> : vector<8xf32>
    %234 = vector.multi_reduction <maximumf>, %233, %cst_102 [1] : vector<8x8xf32> to vector<8xf32>
    %235 = vector.shape_cast %234 : vector<8xf32> to vector<8x1xf32>
    %236 = vector.broadcast %235 : vector<8x1xf32> to vector<8x8xf32>
    %237 = arith.subf %233, %236 : vector<8x8xf32>
    %238 = math.exp %237 : vector<8x8xf32>
    %cst_103 = arith.constant dense<0.000000e+00> : vector<8xf32>
    %239 = vector.multi_reduction <add>, %238, %cst_103 [1] : vector<8x8xf32> to vector<8xf32>
    %240 = vector.shape_cast %239 : vector<8xf32> to vector<8x1xf32>
    %241 = tpu.reciprocal %240 {approx = true} : vector<8x1xf32> -> vector<8x1xf32>
    %242 = vector.broadcast %241 : vector<8x1xf32> to vector<8x8xf32>
    %243 = arith.mulf %238, %242 : vector<8x8xf32>
    %244 = arith.truncf %243 : vector<8x8xf32> to vector<8x8xbf16>
    %cst_104 = arith.constant dense<0.000000e+00> : vector<8x128xf32>
    %245 = tpu.matmul %244, %230, %cst_104 {dimension_numbers = #tpu.dot_dimension_numbers<[1], [0], [0], [1], [0, 0, 1, 1], [], []>} : vector<8x8xbf16>, vector<8x128xbf16>, vector<8x128xf32> -> vector<8x128xf32>
    %c0_105 = arith.constant 0 : index
    %c128_106 = arith.constant 128 : index
    %246 = vector.load %arg30[%c0_105, %c128_106] : memref<16x256xf32, #tpu.memory_space<vmem>>, vector<8x128xf32>
    tpu.vector_store %arg30[%c0_105, %c128_106], %245 {strides = array<i32>} : memref<16x256xf32, #tpu.memory_space<vmem>>, vector<8x128xf32>,
    %247 = vector.extract_strided_slice %23 {offsets = [1, 0], sizes = [1, 8], strides = [1, 1]} : vector<2x128xf32> to vector<1x8xf32>
    %248 = vector.extract_strided_slice %207 {offsets = [8, 0], sizes = [8, 128], strides = [1, 1]} : vector<16x768xbf16> to vector<8x128xbf16>
    %249 = vector.extract_strided_slice %207 {offsets = [8, 256], sizes = [8, 128], strides = [1, 1]} : vector<16x768xbf16> to vector<8x128xbf16>
    %250 = vector.extract_strided_slice %207 {offsets = [8, 512], sizes = [8, 128], strides = [1, 1]} : vector<16x768xbf16> to vector<8x128xbf16>
    %cst_107 = arith.constant dense<0.000000e+00> : vector<8x8xf32>
    %251 = tpu.matmul %248, %249, %cst_107 {dimension_numbers = #tpu.dot_dimension_numbers<[1], [1], [0], [0], [0, 0, 1, 0], [], []>} : vector<8x128xbf16>, vector<8x128xbf16>, vector<8x8xf32> -> vector<8x8xf32>
    %252 = vector.broadcast %247 : vector<1x8xf32> to vector<8x8xf32>
    %253 = arith.addf %251, %252 : vector<8x8xf32>
    %cst_108 = arith.constant dense<0xFF800000> : vector<8xf32>
    %254 = vector.multi_reduction <maximumf>, %253, %cst_108 [1] : vector<8x8xf32> to vector<8xf32>
    %255 = vector.shape_cast %254 : vector<8xf32> to vector<8x1xf32>
    %256 = vector.broadcast %255 : vector<8x1xf32> to vector<8x8xf32>
    %257 = arith.subf %253, %256 : vector<8x8xf32>
    %258 = math.exp %257 : vector<8x8xf32>
    %cst_109 = arith.constant dense<0.000000e+00> : vector<8xf32>
    %259 = vector.multi_reduction <add>, %258, %cst_109 [1] : vector<8x8xf32> to vector<8xf32>
    %260 = vector.shape_cast %259 : vector<8xf32> to vector<8x1xf32>
    %261 = tpu.reciprocal %260 {approx = true} : vector<8x1xf32> -> vector<8x1xf32>
    %262 = vector.broadcast %261 : vector<8x1xf32> to vector<8x8xf32>
    %263 = arith.mulf %258, %262 : vector<8x8xf32>
    %264 = arith.truncf %263 : vector<8x8xf32> to vector<8x8xbf16>
    %cst_110 = arith.constant dense<0.000000e+00> : vector<8x128xf32>
    %265 = tpu.matmul %264, %250, %cst_110 {dimension_numbers = #tpu.dot_dimension_numbers<[1], [0], [0], [1], [0, 0, 1, 1], [], []>} : vector<8x8xbf16>, vector<8x128xbf16>, vector<8x128xf32> -> vector<8x128xf32>
    %c8_111 = arith.constant 8 : index
    %c0_112 = arith.constant 0 : index
    %266 = vector.load %arg30[%c8_111, %c0_112] : memref<16x256xf32, #tpu.memory_space<vmem>>, vector<8x128xf32>
    tpu.vector_store %arg30[%c8_111, %c0_112], %265 {strides = array<i32>} : memref<16x256xf32, #tpu.memory_space<vmem>>, vector<8x128xf32>,
    %267 = vector.extract_strided_slice %207 {offsets = [8, 128], sizes = [8, 128], strides = [1, 1]} : vector<16x768xbf16> to vector<8x128xbf16>
    %268 = vector.extract_strided_slice %207 {offsets = [8, 384], sizes = [8, 128], strides = [1, 1]} : vector<16x768xbf16> to vector<8x128xbf16>
    %269 = vector.extract_strided_slice %207 {offsets = [8, 640], sizes = [8, 128], strides = [1, 1]} : vector<16x768xbf16> to vector<8x128xbf16>
    %cst_113 = arith.constant dense<0.000000e+00> : vector<8x8xf32>
    %270 = tpu.matmul %267, %268, %cst_113 {dimension_numbers = #tpu.dot_dimension_numbers<[1], [1], [0], [0], [0, 0, 1, 0], [], []>} : vector<8x128xbf16>, vector<8x128xbf16>, vector<8x8xf32> -> vector<8x8xf32>
    %271 = vector.broadcast %247 : vector<1x8xf32> to vector<8x8xf32>
    %272 = arith.addf %270, %271 : vector<8x8xf32>
    %cst_114 = arith.constant dense<0xFF800000> : vector<8xf32>
    %273 = vector.multi_reduction <maximumf>, %272, %cst_114 [1] : vector<8x8xf32> to vector<8xf32>
    %274 = vector.shape_cast %273 : vector<8xf32> to vector<8x1xf32>
    %275 = vector.broadcast %274 : vector<8x1xf32> to vector<8x8xf32>
    %276 = arith.subf %272, %275 : vector<8x8xf32>
    %277 = math.exp %276 : vector<8x8xf32>
    %cst_115 = arith.constant dense<0.000000e+00> : vector<8xf32>
    %278 = vector.multi_reduction <add>, %277, %cst_115 [1] : vector<8x8xf32> to vector<8xf32>
    %279 = vector.shape_cast %278 : vector<8xf32> to vector<8x1xf32>
    %280 = tpu.reciprocal %279 {approx = true} : vector<8x1xf32> -> vector<8x1xf32>
    %281 = vector.broadcast %280 : vector<8x1xf32> to vector<8x8xf32>
    %282 = arith.mulf %277, %281 : vector<8x8xf32>
    %283 = arith.truncf %282 : vector<8x8xf32> to vector<8x8xbf16>
    %cst_116 = arith.constant dense<0.000000e+00> : vector<8x128xf32>
    %284 = tpu.matmul %283, %269, %cst_116 {dimension_numbers = #tpu.dot_dimension_numbers<[1], [0], [0], [1], [0, 0, 1, 1], [], []>} : vector<8x8xbf16>, vector<8x128xbf16>, vector<8x128xf32> -> vector<8x128xf32>
    %c8_117 = arith.constant 8 : index
    %c128_118 = arith.constant 128 : index
    %285 = vector.load %arg30[%c8_117, %c128_118] : memref<16x256xf32, #tpu.memory_space<vmem>>, vector<8x128xf32>
    tpu.vector_store %arg30[%c8_117, %c128_118], %284 {strides = array<i32>} : memref<16x256xf32, #tpu.memory_space<vmem>>, vector<8x128xf32>,
    %c0_119 = arith.constant 0 : index
    %c0_120 = arith.constant 0 : index
    %286 = vector.load %arg30[%c0_119, %c0_120] : memref<16x256xf32, #tpu.memory_space<vmem>>, vector<16x256xf32>
    %c1_121 = arith.constant 1 : index
    %c0_122 = arith.constant 0 : index
    %c0_123 = arith.constant 0 : index
    %287 = vector.load %arg9[%c1_121, %c0_122, %c0_123] : memref<2x256x128xbf16, #tpu.memory_space<vmem>>, vector<1x256x128xbf16>
    %288 = vector.shape_cast %287 : vector<1x256x128xbf16> to vector<256x128xbf16>
    %289 = arith.truncf %286 : vector<16x256xf32> to vector<16x256xbf16>
    %cst_124 = arith.constant dense<0.000000e+00> : vector<16x128xf32>
    %290 = tpu.matmul %289, %288, %cst_124 {dimension_numbers = #tpu.dot_dimension_numbers<[1], [0], [0], [1], [0, 0, 1, 1], [], []>} : vector<16x256xbf16>, vector<256x128xbf16>, vector<16x128xf32> -> vector<16x128xf32>
    %c1_125 = arith.constant 1 : index
    %c0_126 = arith.constant 0 : index
    %c0_127 = arith.constant 0 : index
    %291 = vector.load %arg10[%c1_125, %c0_126, %c0_127] : memref<2x1x128xf32, #tpu.memory_space<vmem>>, vector<1x1x128xf32>
    %292 = vector.shape_cast %291 : vector<1x1x128xf32> to vector<1x128xf32>
    %293 = vector.broadcast %292 : vector<1x128xf32> to vector<16x128xf32>
    %294 = arith.addf %290, %293 : vector<16x128xf32>
    %295 = arith.addf %198, %294 : vector<16x128xf32>
    %c1_128 = arith.constant 1 : index
    %c0_129 = arith.constant 0 : index
    %c0_130 = arith.constant 0 : index
    %296 = vector.load %arg11[%c1_128, %c0_129, %c0_130] : memref<2x1x128xf32, #tpu.memory_space<vmem>>, vector<1x1x128xf32>
    %297 = vector.shape_cast %296 : vector<1x1x128xf32> to vector<1x128xf32>
    %c1_131 = arith.constant 1 : index
    %c0_132 = arith.constant 0 : index
    %c0_133 = arith.constant 0 : index
    %298 = vector.load %arg12[%c1_131, %c0_132, %c0_133] : memref<2x1x128xf32, #tpu.memory_space<vmem>>, vector<1x1x128xf32>
    %299 = vector.shape_cast %298 : vector<1x1x128xf32> to vector<1x128xf32>
    %cst_134 = arith.constant dense<0.000000e+00> : vector<16xf32>
    %300 = vector.multi_reduction <add>, %295, %cst_134 [1] : vector<16x128xf32> to vector<16xf32>
    %301 = vector.shape_cast %300 : vector<16xf32> to vector<16x1xf32>
    %cst_135 = arith.constant 1.280000e+02 : f32
    %302 = vector.broadcast %cst_135 : f32 to vector<16x1xf32>
    %303 = arith.divf %301, %302 : vector<16x1xf32>
    %304 = vector.broadcast %303 : vector<16x1xf32> to vector<16x128xf32>
    %305 = arith.subf %295, %304 : vector<16x128xf32>
    %306 = arith.mulf %305, %305 : vector<16x128xf32>
    %cst_136 = arith.constant dense<0.000000e+00> : vector<16xf32>
    %307 = vector.multi_reduction <add>, %306, %cst_136 [1] : vector<16x128xf32> to vector<16xf32>
    %308 = vector.shape_cast %307 : vector<16xf32> to vector<16x1xf32>
    %cst_137 = arith.constant 1.280000e+02 : f32
    %309 = vector.broadcast %cst_137 : f32 to vector<16x1xf32>
    %310 = arith.divf %308, %309 : vector<16x1xf32>
    %cst_138 = arith.constant 9.99999996E-13 : f32
    %311 = vector.broadcast %cst_138 : f32 to vector<16x1xf32>
    %312 = arith.addf %310, %311 : vector<16x1xf32>
    %313 = math.rsqrt %312 : vector<16x1xf32>
    %314 = vector.broadcast %313 : vector<16x1xf32> to vector<16x128xf32>
    %315 = arith.mulf %305, %314 : vector<16x128xf32>
    %316 = vector.broadcast %297 : vector<1x128xf32> to vector<16x128xf32>
    %317 = arith.mulf %315, %316 : vector<16x128xf32>
    %318 = vector.broadcast %299 : vector<1x128xf32> to vector<16x128xf32>
    %319 = arith.addf %317, %318 : vector<16x128xf32>
    %c1_139 = arith.constant 1 : index
    %c0_140 = arith.constant 0 : index
    %c0_141 = arith.constant 0 : index
    %320 = vector.load %arg13[%c1_139, %c0_140, %c0_141] : memref<2x128x512xbf16, #tpu.memory_space<vmem>>, vector<1x128x512xbf16>
    %321 = vector.shape_cast %320 : vector<1x128x512xbf16> to vector<128x512xbf16>
    %322 = arith.truncf %319 : vector<16x128xf32> to vector<16x128xbf16>
    %cst_142 = arith.constant dense<0.000000e+00> : vector<16x512xf32>
    %323 = tpu.matmul %322, %321, %cst_142 {dimension_numbers = #tpu.dot_dimension_numbers<[1], [0], [0], [1], [0, 0, 1, 1], [], []>} : vector<16x128xbf16>, vector<128x512xbf16>, vector<16x512xf32> -> vector<16x512xf32>
    %c1_143 = arith.constant 1 : index
    %c0_144 = arith.constant 0 : index
    %c0_145 = arith.constant 0 : index
    %324 = vector.load %arg14[%c1_143, %c0_144, %c0_145] : memref<2x1x512xf32, #tpu.memory_space<vmem>>, vector<1x1x512xf32>
    %325 = vector.shape_cast %324 : vector<1x1x512xf32> to vector<1x512xf32>
    %326 = vector.broadcast %325 : vector<1x512xf32> to vector<16x512xf32>
    %327 = arith.addf %323, %326 : vector<16x512xf32>
    %cst_146 = arith.constant 5.000000e-01 : f32
    %328 = vector.broadcast %cst_146 : f32 to vector<16x512xf32>
    %329 = arith.mulf %328, %327 : vector<16x512xf32>
    %cst_147 = arith.constant 4.471500e-02 : f32
    %330 = vector.broadcast %cst_147 : f32 to vector<16x512xf32>
    %331 = arith.mulf %330, %327 : vector<16x512xf32>
    %332 = arith.mulf %331, %327 : vector<16x512xf32>
    %333 = arith.mulf %332, %327 : vector<16x512xf32>
    %334 = arith.addf %327, %333 : vector<16x512xf32>
    %cst_148 = arith.constant 0.797884583 : f32
    %335 = vector.broadcast %cst_148 : f32 to vector<16x512xf32>
    %336 = arith.mulf %335, %334 : vector<16x512xf32>
    %337 = math.tanh %336 : vector<16x512xf32>
    %cst_149 = arith.constant 1.000000e+00 : f32
    %338 = vector.broadcast %cst_149 : f32 to vector<16x512xf32>
    %339 = arith.addf %338, %337 : vector<16x512xf32>
    %340 = arith.mulf %329, %339 : vector<16x512xf32>
    %c1_150 = arith.constant 1 : index
    %c0_151 = arith.constant 0 : index
    %c0_152 = arith.constant 0 : index
    %341 = vector.load %arg15[%c1_150, %c0_151, %c0_152] : memref<2x512x128xbf16, #tpu.memory_space<vmem>>, vector<1x512x128xbf16>
    %342 = vector.shape_cast %341 : vector<1x512x128xbf16> to vector<512x128xbf16>
    %343 = arith.truncf %340 : vector<16x512xf32> to vector<16x512xbf16>
    %cst_153 = arith.constant dense<0.000000e+00> : vector<16x128xf32>
    %344 = tpu.matmul %343, %342, %cst_153 {dimension_numbers = #tpu.dot_dimension_numbers<[1], [0], [0], [1], [0, 0, 1, 1], [], []>} : vector<16x512xbf16>, vector<512x128xbf16>, vector<16x128xf32> -> vector<16x128xf32>
    %c1_154 = arith.constant 1 : index
    %c0_155 = arith.constant 0 : index
    %c0_156 = arith.constant 0 : index
    %345 = vector.load %arg16[%c1_154, %c0_155, %c0_156] : memref<2x1x128xf32, #tpu.memory_space<vmem>>, vector<1x1x128xf32>
    %346 = vector.shape_cast %345 : vector<1x1x128xf32> to vector<1x128xf32>
    %347 = vector.broadcast %346 : vector<1x128xf32> to vector<16x128xf32>
    %348 = arith.addf %344, %347 : vector<16x128xf32>
    %349 = arith.addf %319, %348 : vector<16x128xf32>
    %c1_157 = arith.constant 1 : index
    %c0_158 = arith.constant 0 : index
    %c0_159 = arith.constant 0 : index
    %350 = vector.load %arg17[%c1_157, %c0_158, %c0_159] : memref<2x1x128xf32, #tpu.memory_space<vmem>>, vector<1x1x128xf32>
    %351 = vector.shape_cast %350 : vector<1x1x128xf32> to vector<1x128xf32>
    %c1_160 = arith.constant 1 : index
    %c0_161 = arith.constant 0 : index
    %c0_162 = arith.constant 0 : index
    %352 = vector.load %arg18[%c1_160, %c0_161, %c0_162] : memref<2x1x128xf32, #tpu.memory_space<vmem>>, vector<1x1x128xf32>
    %353 = vector.shape_cast %352 : vector<1x1x128xf32> to vector<1x128xf32>
    %cst_163 = arith.constant dense<0.000000e+00> : vector<16xf32>
    %354 = vector.multi_reduction <add>, %349, %cst_163 [1] : vector<16x128xf32> to vector<16xf32>
    %355 = vector.shape_cast %354 : vector<16xf32> to vector<16x1xf32>
    %cst_164 = arith.constant 1.280000e+02 : f32
    %356 = vector.broadcast %cst_164 : f32 to vector<16x1xf32>
    %357 = arith.divf %355, %356 : vector<16x1xf32>
    %358 = vector.broadcast %357 : vector<16x1xf32> to vector<16x128xf32>
    %359 = arith.subf %349, %358 : vector<16x128xf32>
    %360 = arith.mulf %359, %359 : vector<16x128xf32>
    %cst_165 = arith.constant dense<0.000000e+00> : vector<16xf32>
    %361 = vector.multi_reduction <add>, %360, %cst_165 [1] : vector<16x128xf32> to vector<16xf32>
    %362 = vector.shape_cast %361 : vector<16xf32> to vector<16x1xf32>
    %cst_166 = arith.constant 1.280000e+02 : f32
    %363 = vector.broadcast %cst_166 : f32 to vector<16x1xf32>
    %364 = arith.divf %362, %363 : vector<16x1xf32>
    %cst_167 = arith.constant 9.99999996E-13 : f32
    %365 = vector.broadcast %cst_167 : f32 to vector<16x1xf32>
    %366 = arith.addf %364, %365 : vector<16x1xf32>
    %367 = math.rsqrt %366 : vector<16x1xf32>
    %368 = vector.broadcast %367 : vector<16x1xf32> to vector<16x128xf32>
    %369 = arith.mulf %359, %368 : vector<16x128xf32>
    %370 = vector.broadcast %351 : vector<1x128xf32> to vector<16x128xf32>
    %371 = arith.mulf %369, %370 : vector<16x128xf32>
    %372 = vector.broadcast %353 : vector<1x128xf32> to vector<16x128xf32>
    %373 = arith.addf %371, %372 : vector<16x128xf32>
    %374 = vector.extract_strided_slice %373 {offsets = [0, 0], sizes = [1, 128], strides = [1, 1]} : vector<16x128xf32> to vector<1x128xf32>
    %375 = vector.extract_strided_slice %373 {offsets = [8, 0], sizes = [1, 128], strides = [1, 1]} : vector<16x128xf32> to vector<1x128xf32>
    %376 = tpu.concatenate %374, %375 in 0 : vector<1x128xf32>, vector<1x128xf32> -> vector<2x128xf32>
    %c0_168 = arith.constant 0 : index
    %c0_169 = arith.constant 0 : index
    %377 = vector.load %arg19[%c0_168, %c0_169] : memref<128x128xbf16, #tpu.memory_space<vmem>>, vector<128x128xbf16>
    %378 = arith.truncf %376 : vector<2x128xf32> to vector<2x128xbf16>
    %cst_170 = arith.constant dense<0.000000e+00> : vector<2x128xf32>
    %379 = tpu.matmul %378, %377, %cst_170 {dimension_numbers = #tpu.dot_dimension_numbers<[1], [0], [0], [1], [0, 0, 1, 1], [], []>} : vector<2x128xbf16>, vector<128x128xbf16>, vector<2x128xf32> -> vector<2x128xf32>
    %c0_171 = arith.constant 0 : index
    %c0_172 = arith.constant 0 : index
    %380 = vector.load %arg20[%c0_171, %c0_172] : memref<1x128xf32, #tpu.memory_space<vmem>>, vector<1x128xf32>
    %381 = vector.broadcast %380 : vector<1x128xf32> to vector<2x128xf32>
    %382 = arith.addf %379, %381 : vector<2x128xf32>
    %383 = math.tanh %382 : vector<2x128xf32>
    %c0_173 = arith.constant 0 : index
    %c0_174 = arith.constant 0 : index
    %384 = vector.load %arg21[%c0_173, %c0_174] : memref<128x128xbf16, #tpu.memory_space<vmem>>, vector<128x128xbf16>
    %385 = arith.truncf %383 : vector<2x128xf32> to vector<2x128xbf16>
    %cst_175 = arith.constant dense<0.000000e+00> : vector<2x128xf32>
    %386 = tpu.matmul %385, %384, %cst_175 {dimension_numbers = #tpu.dot_dimension_numbers<[1], [0], [0], [1], [0, 0, 1, 1], [], []>} : vector<2x128xbf16>, vector<128x128xbf16>, vector<2x128xf32> -> vector<2x128xf32>
    %c0_176 = arith.constant 0 : index
    %c0_177 = arith.constant 0 : index
    %387 = vector.load %arg22[%c0_176, %c0_177] : memref<1x128xf32, #tpu.memory_space<vmem>>, vector<1x128xf32>
    %388 = vector.broadcast %387 : vector<1x128xf32> to vector<2x128xf32>
    %389 = arith.addf %386, %388 : vector<2x128xf32>
    %c0_178 = arith.constant 0 : index
    %c0_179 = arith.constant 0 : index
    %390 = vector.load %arg23[%c0_178, %c0_179] : memref<128x128xbf16, #tpu.memory_space<vmem>>, vector<128x128xbf16>
    %391 = arith.truncf %383 : vector<2x128xf32> to vector<2x128xbf16>
    %cst_180 = arith.constant dense<0.000000e+00> : vector<2x128xf32>
    %392 = tpu.matmul %391, %390, %cst_180 {dimension_numbers = #tpu.dot_dimension_numbers<[1], [0], [0], [1], [0, 0, 1, 1], [], []>} : vector<2x128xbf16>, vector<128x128xbf16>, vector<2x128xf32> -> vector<2x128xf32>
    %c0_181 = arith.constant 0 : index
    %c0_182 = arith.constant 0 : index
    %393 = vector.load %arg24[%c0_181, %c0_182] : memref<1x128xf32, #tpu.memory_space<vmem>>, vector<1x128xf32>
    %394 = vector.broadcast %393 : vector<1x128xf32> to vector<2x128xf32>
    %395 = arith.addf %392, %394 : vector<2x128xf32>
    %cst_183 = arith.constant 5.000000e-01 : f32
    %396 = vector.broadcast %cst_183 : f32 to vector<2x128xf32>
    %397 = arith.mulf %396, %395 : vector<2x128xf32>
    %398 = math.exp %397 : vector<2x128xf32>
    %c0_184 = arith.constant 0 : index
    %c0_185 = arith.constant 0 : index
    %399 = vector.load %arg5[%c0_184, %c0_185] : memref<2x128xf32, #tpu.memory_space<vmem>>, vector<2x128xf32>
    %400 = arith.mulf %398, %399 : vector<2x128xf32>
    %401 = arith.addf %389, %400 : vector<2x128xf32>
    %c0_186 = arith.constant 0 : index
    %c0_187 = arith.constant 0 : index
    %402 = vector.load %arg28[%c0_186, %c0_187] : memref<2x128xf32, #tpu.memory_space<vmem>>, vector<2x128xf32>
    tpu.vector_store %arg28[%c0_186, %c0_187], %401 {strides = array<i32>} : memref<2x128xf32, #tpu.memory_space<vmem>>, vector<2x128xf32>,
    %cst_188 = arith.constant 1.000000e+00 : f32
    %403 = vector.broadcast %cst_188 : f32 to vector<2x128xf32>
    %404 = arith.addf %403, %395 : vector<2x128xf32>
    %405 = arith.mulf %389, %389 : vector<2x128xf32>
    %406 = arith.subf %404, %405 : vector<2x128xf32>
    %407 = math.exp %395 : vector<2x128xf32>
    %408 = arith.subf %406, %407 : vector<2x128xf32>
    %cst_189 = arith.constant dense<0.000000e+00> : vector<2xf32>
    %409 = vector.multi_reduction <add>, %408, %cst_189 [1] : vector<2x128xf32> to vector<2xf32>
    %410 = vector.shape_cast %409 : vector<2xf32> to vector<2x1xf32>
    %cst_190 = arith.constant -5.000000e-01 : f32
    %411 = vector.broadcast %cst_190 : f32 to vector<2x1xf32>
    %412 = arith.mulf %411, %410 : vector<2x1xf32>
    %cst_191 = arith.constant dense<0.000000e+00> : vector<1xf32>
    %413 = vector.multi_reduction <add>, %412, %cst_191 [0] : vector<2x1xf32> to vector<1xf32>
    %414 = vector.shape_cast %413 : vector<1xf32> to vector<1x1xf32>
    %cst_192 = arith.constant 2.000000e+00 : f32
    %415 = vector.broadcast %cst_192 : f32 to vector<1x1xf32>
    %416 = arith.divf %414, %415 : vector<1x1xf32>
    %cst_193 = arith.constant 1.000000e-03 : f32
    %417 = vector.broadcast %cst_193 : f32 to vector<1x1xf32>
    %418 = arith.mulf %417, %416 : vector<1x1xf32>
    %c0_194 = arith.constant 0 : index
    %c0_195 = arith.constant 0 : index
    %419 = vector.load %arg25[%c0_194, %c0_195] : memref<128x128xbf16, #tpu.memory_space<vmem>>, vector<128x128xbf16>
    %420 = arith.truncf %401 : vector<2x128xf32> to vector<2x128xbf16>
    %cst_196 = arith.constant dense<0.000000e+00> : vector<2x128xf32>
    %421 = tpu.matmul %420, %419, %cst_196 {dimension_numbers = #tpu.dot_dimension_numbers<[1], [0], [0], [1], [0, 0, 1, 1], [], []>} : vector<2x128xbf16>, vector<128x128xbf16>, vector<2x128xf32> -> vector<2x128xf32>
    %c0_197 = arith.constant 0 : index
    %c0_198 = arith.constant 0 : index
    %422 = vector.load %arg26[%c0_197, %c0_198] : memref<1x128xf32, #tpu.memory_space<vmem>>, vector<1x128xf32>
    %423 = vector.broadcast %422 : vector<1x128xf32> to vector<2x128xf32>
    %424 = arith.addf %421, %423 : vector<2x128xf32>
    %c0_199 = arith.constant 0 : index
    %c0_200 = arith.constant 0 : index
    %425 = vector.load %arg27[%c0_199, %c0_200] : memref<2x128xf32, #tpu.memory_space<vmem>>, vector<2x128xf32>
    tpu.vector_store %arg27[%c0_199, %c0_200], %424 {strides = array<i32>} : memref<2x128xf32, #tpu.memory_space<vmem>>, vector<2x128xf32>,
    %426 = tpu.iota {dimensions = array<i32: 1>} : vector<2x128xi32>
    %c16_i32 = arith.constant 16 : i32
    %427 = vector.broadcast %c16_i32 : i32 to vector<2x128xi32>
    %428 = arith.cmpi slt, %426, %427 : vector<2x128xi32>
    %cst_201 = arith.constant -1.000000e+09 : f32
    %429 = vector.broadcast %cst_201 : f32 to vector<2x128xf32>
    %430 = arith.select %428, %424, %429 : vector<2x128xi1>, vector<2x128xf32>
    %cst_202 = arith.constant dense<0xFF800000> : vector<2xf32>
    %431 = vector.multi_reduction <maximumf>, %430, %cst_202 [1] : vector<2x128xf32> to vector<2xf32>
    %432 = vector.shape_cast %431 : vector<2xf32> to vector<2x1xf32>
    %433 = vector.broadcast %432 : vector<2x1xf32> to vector<2x128xf32>
    %434 = arith.subf %430, %433 : vector<2x128xf32>
    %435 = math.exp %434 : vector<2x128xf32>
    %cst_203 = arith.constant dense<0.000000e+00> : vector<2xf32>
    %436 = vector.multi_reduction <add>, %435, %cst_203 [1] : vector<2x128xf32> to vector<2xf32>
    %437 = vector.shape_cast %436 : vector<2xf32> to vector<2x1xf32>
    %438 = math.log %437 : vector<2x1xf32>
    %439 = arith.addf %438, %432 : vector<2x1xf32>
    %c0_204 = arith.constant 0 : index
    %c0_205 = arith.constant 0 : index
    %440 = vector.load %arg6[%c0_204, %c0_205] : memref<2x1xi32, #tpu.memory_space<vmem>>, vector<2x1xi32>
    %441 = vector.broadcast %440 : vector<2x1xi32> to vector<2x128xi32>
    %442 = arith.cmpi eq, %426, %441 : vector<2x128xi32>
    %443 = arith.extui %442 : vector<2x128xi1> to vector<2x128xi32>
    %444 = arith.sitofp %443 : vector<2x128xi32> to vector<2x128xf32>
    %445 = arith.mulf %424, %444 : vector<2x128xf32>
    %cst_206 = arith.constant dense<0.000000e+00> : vector<2xf32>
    %446 = vector.multi_reduction <add>, %445, %cst_206 [1] : vector<2x128xf32> to vector<2xf32>
    %447 = vector.shape_cast %446 : vector<2xf32> to vector<2x1xf32>
    %448 = arith.subf %439, %447 : vector<2x1xf32>
    %cst_207 = arith.constant dense<0.000000e+00> : vector<1xf32>
    %449 = vector.multi_reduction <add>, %448, %cst_207 [0] : vector<2x1xf32> to vector<1xf32>
    %450 = vector.shape_cast %449 : vector<1xf32> to vector<1x1xf32>
    %cst_208 = arith.constant 2.000000e+00 : f32
    %451 = vector.broadcast %cst_208 : f32 to vector<1x1xf32>
    %452 = arith.divf %450, %451 : vector<1x1xf32>
    %453 = arith.addf %452, %418 : vector<1x1xf32>
    %454 = tpu.iota {dimensions = array<i32: 1>} : vector<1x128xi32>
    %c0_i32 = arith.constant 0 : i32
    %455 = vector.broadcast %c0_i32 : i32 to vector<1x128xi32>
    %456 = arith.cmpi eq, %454, %455 : vector<1x128xi32>
    %cst_209 = arith.constant 0.000000e+00 : f32
    %457 = vector.shape_cast %452 : vector<1x1xf32> to vector<1x1xf32>
    %458 = vector.broadcast %457 : vector<1x1xf32> to vector<1x128xf32>
    %459 = vector.broadcast %cst_209 : f32 to vector<1x128xf32>
    %460 = arith.select %456, %458, %459 : vector<1x128xi1>, vector<1x128xf32>
    %c1_i32 = arith.constant 1 : i32
    %461 = vector.broadcast %c1_i32 : i32 to vector<1x128xi32>
    %462 = arith.cmpi eq, %454, %461 : vector<1x128xi32>
    %cst_210 = arith.constant 0.000000e+00 : f32
    %463 = vector.shape_cast %418 : vector<1x1xf32> to vector<1x1xf32>
    %464 = vector.broadcast %463 : vector<1x1xf32> to vector<1x128xf32>
    %465 = vector.broadcast %cst_210 : f32 to vector<1x128xf32>
    %466 = arith.select %462, %464, %465 : vector<1x128xi1>, vector<1x128xf32>
    %467 = arith.addf %460, %466 : vector<1x128xf32>
    %c2_i32 = arith.constant 2 : i32
    %468 = vector.broadcast %c2_i32 : i32 to vector<1x128xi32>
    %469 = arith.cmpi eq, %454, %468 : vector<1x128xi32>
    %cst_211 = arith.constant 0.000000e+00 : f32
    %470 = vector.shape_cast %453 : vector<1x1xf32> to vector<1x1xf32>
    %471 = vector.broadcast %470 : vector<1x1xf32> to vector<1x128xf32>
    %472 = vector.broadcast %cst_211 : f32 to vector<1x128xf32>
    %473 = arith.select %469, %471, %472 : vector<1x128xi1>, vector<1x128xf32>
    %474 = arith.addf %467, %473 : vector<1x128xf32>
    %c0_212 = arith.constant 0 : index
    %c0_213 = arith.constant 0 : index
    %475 = vector.load %arg29[%c0_212, %c0_213] : memref<1x128xf32, #tpu.memory_space<vmem>>, vector<1x128xf32>
    tpu.vector_store %arg29[%c0_212, %c0_213], %474 {strides = array<i32>} : memref<1x128xf32, #tpu.memory_space<vmem>>, vector<1x128xf32>,
    return
  }
  func.func @transform_0(%arg0: i32) -> (i32, i32) {
    %c0_i32 = arith.constant 0 : i32
    %c0_i32_0 = arith.constant 0 : i32
    %c0_i32_1 = arith.constant 0 : i32
    return %c0_i32, %c0_i32_0 : i32, i32
  }
  func.func @transform_1(%arg0: i32) -> (i32, i32) {
    %c0_i32 = arith.constant 0 : i32
    %c0_i32_0 = arith.constant 0 : i32
    %c0_i32_1 = arith.constant 0 : i32
    return %c0_i32, %c0_i32_0 : i32, i32
  }
  func.func @transform_2(%arg0: i32) -> (i32, i32) {
    %c0_i32 = arith.constant 0 : i32
    %c0_i32_0 = arith.constant 0 : i32
    %c0_i32_1 = arith.constant 0 : i32
    return %c0_i32, %c0_i32_0 : i32, i32
  }
  func.func @transform_3(%arg0: i32) -> (i32, i32) {
    %c0_i32 = arith.constant 0 : i32
    %c0_i32_0 = arith.constant 0 : i32
    %c0_i32_1 = arith.constant 0 : i32
    return %c0_i32, %c0_i32_0 : i32, i32
  }
  func.func @transform_4(%arg0: i32) -> (i32, i32) {
    %c0_i32 = arith.constant 0 : i32
    %c0_i32_0 = arith.constant 0 : i32
    %c0_i32_1 = arith.constant 0 : i32
    return %c0_i32, %c0_i32_0 : i32, i32
  }
  func.func @transform_5(%arg0: i32) -> (i32, i32) {
    %c0_i32 = arith.constant 0 : i32
    %c0_i32_0 = arith.constant 0 : i32
    %c0_i32_1 = arith.constant 0 : i32
    return %c0_i32, %c0_i32_0 : i32, i32
  }
  func.func @transform_6(%arg0: i32) -> (i32, i32, i32) {
    %c0_i32 = arith.constant 0 : i32
    %c0_i32_0 = arith.constant 0 : i32
    %c0_i32_1 = arith.constant 0 : i32
    %c0_i32_2 = arith.constant 0 : i32
    return %c0_i32, %c0_i32_0, %c0_i32_1 : i32, i32, i32
  }
  func.func @transform_7(%arg0: i32) -> (i32, i32, i32) {
    %c0_i32 = arith.constant 0 : i32
    %c0_i32_0 = arith.constant 0 : i32
    %c0_i32_1 = arith.constant 0 : i32
    %c0_i32_2 = arith.constant 0 : i32
    return %c0_i32, %c0_i32_0, %c0_i32_1 : i32, i32, i32
  }
  func.func @transform_8(%arg0: i32) -> (i32, i32, i32) {
    %c0_i32 = arith.constant 0 : i32
    %c0_i32_0 = arith.constant 0 : i32
    %c0_i32_1 = arith.constant 0 : i32
    %c0_i32_2 = arith.constant 0 : i32
    return %c0_i32, %c0_i32_0, %c0_i32_1 : i32, i32, i32
  }
  func.func @transform_9(%arg0: i32) -> (i32, i32, i32) {
    %c0_i32 = arith.constant 0 : i32
    %c0_i32_0 = arith.constant 0 : i32
    %c0_i32_1 = arith.constant 0 : i32
    %c0_i32_2 = arith.constant 0 : i32
    return %c0_i32, %c0_i32_0, %c0_i32_1 : i32, i32, i32
  }
  func.func @transform_10(%arg0: i32) -> (i32, i32, i32) {
    %c0_i32 = arith.constant 0 : i32
    %c0_i32_0 = arith.constant 0 : i32
    %c0_i32_1 = arith.constant 0 : i32
    %c0_i32_2 = arith.constant 0 : i32
    return %c0_i32, %c0_i32_0, %c0_i32_1 : i32, i32, i32
  }
  func.func @transform_11(%arg0: i32) -> (i32, i32, i32) {
    %c0_i32 = arith.constant 0 : i32
    %c0_i32_0 = arith.constant 0 : i32
    %c0_i32_1 = arith.constant 0 : i32
    %c0_i32_2 = arith.constant 0 : i32
    return %c0_i32, %c0_i32_0, %c0_i32_1 : i32, i32, i32
  }
  func.func @transform_12(%arg0: i32) -> (i32, i32, i32) {
    %c0_i32 = arith.constant 0 : i32
    %c0_i32_0 = arith.constant 0 : i32
    %c0_i32_1 = arith.constant 0 : i32
    %c0_i32_2 = arith.constant 0 : i32
    return %c0_i32, %c0_i32_0, %c0_i32_1 : i32, i32, i32
  }
  func.func @transform_13(%arg0: i32) -> (i32, i32, i32) {
    %c0_i32 = arith.constant 0 : i32
    %c0_i32_0 = arith.constant 0 : i32
    %c0_i32_1 = arith.constant 0 : i32
    %c0_i32_2 = arith.constant 0 : i32
    return %c0_i32, %c0_i32_0, %c0_i32_1 : i32, i32, i32
  }
  func.func @transform_14(%arg0: i32) -> (i32, i32, i32) {
    %c0_i32 = arith.constant 0 : i32
    %c0_i32_0 = arith.constant 0 : i32
    %c0_i32_1 = arith.constant 0 : i32
    %c0_i32_2 = arith.constant 0 : i32
    return %c0_i32, %c0_i32_0, %c0_i32_1 : i32, i32, i32
  }
  func.func @transform_15(%arg0: i32) -> (i32, i32, i32) {
    %c0_i32 = arith.constant 0 : i32
    %c0_i32_0 = arith.constant 0 : i32
    %c0_i32_1 = arith.constant 0 : i32
    %c0_i32_2 = arith.constant 0 : i32
    return %c0_i32, %c0_i32_0, %c0_i32_1 : i32, i32, i32
  }
  func.func @transform_16(%arg0: i32) -> (i32, i32, i32) {
    %c0_i32 = arith.constant 0 : i32
    %c0_i32_0 = arith.constant 0 : i32
    %c0_i32_1 = arith.constant 0 : i32
    %c0_i32_2 = arith.constant 0 : i32
    return %c0_i32, %c0_i32_0, %c0_i32_1 : i32, i32, i32
  }
  func.func @transform_17(%arg0: i32) -> (i32, i32, i32) {
    %c0_i32 = arith.constant 0 : i32
    %c0_i32_0 = arith.constant 0 : i32
    %c0_i32_1 = arith.constant 0 : i32
    %c0_i32_2 = arith.constant 0 : i32
    return %c0_i32, %c0_i32_0, %c0_i32_1 : i32, i32, i32
  }
  func.func @transform_18(%arg0: i32) -> (i32, i32) {
    %c0_i32 = arith.constant 0 : i32
    %c0_i32_0 = arith.constant 0 : i32
    %c0_i32_1 = arith.constant 0 : i32
    return %c0_i32, %c0_i32_0 : i32, i32
  }
  func.func @transform_19(%arg0: i32) -> (i32, i32) {
    %c0_i32 = arith.constant 0 : i32
    %c0_i32_0 = arith.constant 0 : i32
    %c0_i32_1 = arith.constant 0 : i32
    return %c0_i32, %c0_i32_0 : i32, i32
  }
  func.func @transform_20(%arg0: i32) -> (i32, i32) {
    %c0_i32 = arith.constant 0 : i32
    %c0_i32_0 = arith.constant 0 : i32
    %c0_i32_1 = arith.constant 0 : i32
    return %c0_i32, %c0_i32_0 : i32, i32
  }
  func.func @transform_21(%arg0: i32) -> (i32, i32) {
    %c0_i32 = arith.constant 0 : i32
    %c0_i32_0 = arith.constant 0 : i32
    %c0_i32_1 = arith.constant 0 : i32
    return %c0_i32, %c0_i32_0 : i32, i32
  }
  func.func @transform_22(%arg0: i32) -> (i32, i32) {
    %c0_i32 = arith.constant 0 : i32
    %c0_i32_0 = arith.constant 0 : i32
    %c0_i32_1 = arith.constant 0 : i32
    return %c0_i32, %c0_i32_0 : i32, i32
  }
  func.func @transform_23(%arg0: i32) -> (i32, i32) {
    %c0_i32 = arith.constant 0 : i32
    %c0_i32_0 = arith.constant 0 : i32
    %c0_i32_1 = arith.constant 0 : i32
    return %c0_i32, %c0_i32_0 : i32, i32
  }
  func.func @transform_24(%arg0: i32) -> (i32, i32) {
    %c0_i32 = arith.constant 0 : i32
    %c0_i32_0 = arith.constant 0 : i32
    %c0_i32_1 = arith.constant 0 : i32
    return %c0_i32, %c0_i32_0 : i32, i32
  }
  func.func @transform_25(%arg0: i32) -> (i32, i32) {
    %c0_i32 = arith.constant 0 : i32
    %c0_i32_0 = arith.constant 0 : i32
    %c0_i32_1 = arith.constant 0 : i32
    return %c0_i32, %c0_i32_0 : i32, i32
  }
  func.func @transform_26(%arg0: i32) -> (i32, i32) {
    %c0_i32 = arith.constant 0 : i32
    %c0_i32_0 = arith.constant 0 : i32
    %c0_i32_1 = arith.constant 0 : i32
    return %c0_i32, %c0_i32_0 : i32, i32
  }
  func.func @transform_27(%arg0: i32) -> (i32, i32) {
    %c0_i32 = arith.constant 0 : i32
    %c0_i32_0 = arith.constant 0 : i32
    %c0_i32_1 = arith.constant 0 : i32
    return %c0_i32, %c0_i32_0 : i32, i32
  }
  func.func @transform_28(%arg0: i32) -> (i32, i32) {
    %c0_i32 = arith.constant 0 : i32
    %c0_i32_0 = arith.constant 0 : i32
    %c0_i32_1 = arith.constant 0 : i32
    return %c0_i32, %c0_i32_0 : i32, i32
  }
}

</mosaic_0001>

<llo_original>
// kernel: forward.1
$region0: #{forward.1}
  #allocation0 [shape = 'u32[]', space=smem, size = 0x4, offset = 0x4, fixed_abs, tag = 'smem constant byte address 0x4 - core index']
  #allocation1 [shape = 'u32[144,128]{1,0:T(1,128)}', space=vmem, size = 0x12000, scoped, tag = 'internal scratch']
  #allocation2 [shape = 'f32[16,256]{1,0:T(8,128)}', space=vmem, size = 0x4000, scoped, tag = 'scratch operand']
  %s0 = inlined_call_operand.vmem [shape: f32[16,128], index: 0, kind: input, shape index: {}]
  %s1 = inlined_call_operand.vmem [shape: f32[1,128], index: 1, kind: input, shape index: {}]
  %s2 = inlined_call_operand.vmem [shape: f32[1,128], index: 2, kind: input, shape index: {}]
  %s3 = inlined_call_operand.vmem [shape: f32[2,128], index: 3, kind: input, shape index: {}]
  %s4 = inlined_call_operand.vmem [shape: f32[2,128], index: 4, kind: input, shape index: {}]
  %s5 = inlined_call_operand.vmem [shape: s32[2,1], index: 5, kind: input, shape index: {}]
  %s6 = inlined_call_operand.hbm [shape: bf16[2,128,768], index: 6, kind: input, shape index: {}]
  %s7 = inlined_call_operand.vmem [shape: f32[2,1,768], index: 7, kind: input, shape index: {}]
  %s8 = inlined_call_operand.hbm [shape: bf16[2,256,128], index: 8, kind: input, shape index: {}]
  %s9 = inlined_call_operand.vmem [shape: f32[2,1,128], index: 9, kind: input, shape index: {}]
  %s10 = inlined_call_operand.vmem [shape: f32[2,1,128], index: 10, kind: input, shape index: {}]
  %s11 = inlined_call_operand.vmem [shape: f32[2,1,128], index: 11, kind: input, shape index: {}]
  %s12 = inlined_call_operand.hbm [shape: bf16[2,128,512], index: 12, kind: input, shape index: {}]
  %s13 = inlined_call_operand.vmem [shape: f32[2,1,512], index: 13, kind: input, shape index: {}]
  %s14 = inlined_call_operand.hbm [shape: bf16[2,512,128], index: 14, kind: input, shape index: {}]
  %s15 = inlined_call_operand.vmem [shape: f32[2,1,128], index: 15, kind: input, shape index: {}]
  %s16 = inlined_call_operand.vmem [shape: f32[2,1,128], index: 16, kind: input, shape index: {}]
  %s17 = inlined_call_operand.vmem [shape: f32[2,1,128], index: 17, kind: input, shape index: {}]
  %s18 = inlined_call_operand.vmem [shape: bf16[128,128], index: 18, kind: input, shape index: {}]
  %s19 = inlined_call_operand.vmem [shape: f32[1,128], index: 19, kind: input, shape index: {}]
  %s20 = inlined_call_operand.vmem [shape: bf16[128,128], index: 20, kind: input, shape index: {}]
  %s21 = inlined_call_operand.vmem [shape: f32[1,128], index: 21, kind: input, shape index: {}]
  %s22 = inlined_call_operand.vmem [shape: bf16[128,128], index: 22, kind: input, shape index: {}]
  %s23 = inlined_call_operand.vmem [shape: f32[1,128], index: 23, kind: input, shape index: {}]
  %s24 = inlined_call_operand.vmem [shape: bf16[128,128], index: 24, kind: input, shape index: {}]
  %s25 = inlined_call_operand.vmem [shape: f32[1,128], index: 25, kind: input, shape index: {}]
  %s26 = inlined_call_operand.hbm [shape: f32[2,128], index: 26, kind: output, shape index: {0}]
  %s27 = inlined_call_operand.hbm [shape: f32[2,128], index: 27, kind: output, shape index: {1}]
  %s28 = inlined_call_operand.vmem [shape: f32[1,128], index: 28, kind: output, shape index: {2}]
  %29 = xla_tuple %s26, %s27, %s28
  %s30 = sld [smem:[#allocation0]]
  $region146: #{forward.1} parent=0
    _
  %s32 = ssub.s32 1, %s30
  %s33 = scalar_select 0, %s32, %s30
  $region1: #{forward.1} parent=0
    #allocation3 [shape = 'u8[393216]{0}', space=vmem, size = 0x60000, scoped, tag = 'input window, operand 6, single buffered']
    #allocation4 [shape = 's32[1]{0}', space=sflag, size = 0x4, scoped, tag = 'scoped memory for forward.1']
    #allocation5 [shape = 's32[1]{0}', space=sflag, size = 0x4, scoped, tag = 'scoped memory for forward.1']
    #allocation6 [shape = 'u8[131072]{0}', space=vmem, size = 0x20000, scoped, tag = 'input window, operand 8, single buffered']
    #allocation7 [shape = 's32[1]{0}', space=sflag, size = 0x4, scoped, tag = 'scoped memory for forward.1']
    #allocation8 [shape = 'u8[262144]{0}', space=vmem, size = 0x40000, scoped, tag = 'input window, operand 12, single buffered']
    #allocation9 [shape = 'u8[262144]{0}', space=vmem, size = 0x40000, scoped, tag = 'input window, operand 14, single buffered']
    #allocation10 [shape = 's32[1]{0}', space=sflag, size = 0x4, scoped, tag = 'scoped memory for forward.1']
    #allocation11 [shape = 'u8[1024]{0}', space=vmem, size = 0x400, scoped, tag = 'output window, operand 0, single buffered']
    #allocation12 [shape = 'u8[1024]{0}', space=vmem, size = 0x400, scoped, tag = 'output window, operand 1, single buffered']
    #allocation13 [shape = 's32[1]{0}', space=sflag, size = 0x4, scoped, tag = 'scoped memory for forward.1']
    %34 = vsyncpa [#allocation4], 0
    %35 = vsyncpa [#allocation7], 0
    %36 = vsyncpa [#allocation10], 0
    %37 = vsyncpa [#allocation5], 0
    %38 = vsyncpa [#allocation13], 0
    // Predicated region
    $region2: #{forward.1} parent=1 // pred_check
      _
    $region3: #{forward.1} parent=1 // pred_check_branch
      %40 = sbr.rel (0) target = $region5
    $region4: #{forward.1} parent=1 // pred_region
      _
    $region5: #{forward.1} parent=1 // pred_fallthru
      _
    // Predicated region
    $region6: #{forward.1} parent=1 // pred_check
      _
    $region7: #{forward.1} parent=1 // pred_check_branch
      %42 = sbr.rel (0) target = $region9
    $region8: #{forward.1} parent=1 // pred_region
      _
    $region9: #{forward.1} parent=1 // pred_fallthru
      _
    // Predicated region
    $region10: #{forward.1} parent=1 // pred_check
      _
    $region11: #{forward.1} parent=1 // pred_check_branch
      %44 = sbr.rel (0) target = $region13
    $region12: #{forward.1} parent=1 // pred_region
      _
    $region13: #{forward.1} parent=1 // pred_fallthru
      _
    // Predicated region
    $region14: #{forward.1} parent=1 // pred_check
      _
    $region15: #{forward.1} parent=1 // pred_check_branch
      %46 = sbr.rel (0) target = $region17
    $region16: #{forward.1} parent=1 // pred_region
      _
    $region17: #{forward.1} parent=1 // pred_fallthru
      _
    // Predicated region
    $region18: #{forward.1} parent=1 // pred_check
      _
    $region19: #{forward.1} parent=1 // pred_check_branch
      %48 = sbr.rel (0) target = $region21
    $region20: #{forward.1} parent=1 // pred_region
      _
    $region21: #{forward.1} parent=1 // pred_fallthru
      _
    // Predicated region
    $region22: #{forward.1} parent=1 // pred_check
      _
    $region23: #{forward.1} parent=1 // pred_check_branch
      %50 = sbr.rel (0) target = $region25
    $region24: #{forward.1} parent=1 // pred_region
      _
    $region25: #{forward.1} parent=1 // pred_fallthru
      _
    // Predicated region
    $region26: #{forward.1} parent=1 // pred_check
      _
    $region27: #{forward.1} parent=1 // pred_check_branch
      %52 = sbr.rel (0) target = $region29
    $region28: #{forward.1} parent=1 // pred_region
      %s54 = ssub.s32 12288, 12288
      %55 = vsyncadd [#allocation4], %s54
      %s56 = sshll.u32 [#allocation3], 4
      %s57 = int_to_ptr.vmem [resolvable:$true] %s56
      %62 = dma.hbm_to_vmem [thread:$0]  %s6, 12288, %s57, [#allocation4], 384, 384, 24
    $region29: #{forward.1} parent=1 // pred_fallthru
      _
    // Predicated region
    $region30: #{forward.1} parent=1 // pred_check
      _
    $region31: #{forward.1} parent=1 // pred_check_branch
      %64 = sbr.rel (0) target = $region33
    $region32: #{forward.1} parent=1 // pred_region
      _
    $region33: #{forward.1} parent=1 // pred_fallthru
      _
    // Predicated region
    $region34: #{forward.1} parent=1 // pred_check
      _
    $region35: #{forward.1} parent=1 // pred_check_branch
      %66 = sbr.rel (0) target = $region37
    $region36: #{forward.1} parent=1 // pred_region
      %s68 = ssub.s32 4096, 4096
      %69 = vsyncadd [#allocation7], %s68
      %s70 = sshll.u32 [#allocation6], 4
      %s71 = int_to_ptr.vmem [resolvable:$true] %s70
      %76 = dma.hbm_to_vmem [thread:$0]  %s8, 4096, %s71, [#allocation7], 64, 64, 4
    $region37: #{forward.1} parent=1 // pred_fallthru
      _
    // Predicated region
    $region38: #{forward.1} parent=1 // pred_check
      _
    $region39: #{forward.1} parent=1 // pred_check_branch
      %78 = sbr.rel (0) target = $region41
    $region40: #{forward.1} parent=1 // pred_region
      _
    $region41: #{forward.1} parent=1 // pred_fallthru
      _
    // Predicated region
    $region42: #{forward.1} parent=1 // pred_check
      _
    $region43: #{forward.1} parent=1 // pred_check_branch
      %80 = sbr.rel (0) target = $region45
    $region44: #{forward.1} parent=1 // pred_region
      _
    $region45: #{forward.1} parent=1 // pred_fallthru
      _
    // Predicated region
    $region46: #{forward.1} parent=1 // pred_check
      _
    $region47: #{forward.1} parent=1 // pred_check_branch
      %82 = sbr.rel (0) target = $region49
    $region48: #{forward.1} parent=1 // pred_region
      _
    $region49: #{forward.1} parent=1 // pred_fallthru
      _
    // Predicated region
    $region50: #{forward.1} parent=1 // pred_check
      _
    $region51: #{forward.1} parent=1 // pred_check_branch
      %84 = sbr.rel (0) target = $region53
    $region52: #{forward.1} parent=1 // pred_region
      %s86 = ssub.s32 8192, 8192
      %87 = vsyncadd [#allocation7], %s86
      %s88 = sshll.u32 [#allocation8], 4
      %s89 = int_to_ptr.vmem [resolvable:$true] %s88
      %94 = dma.hbm_to_vmem [thread:$0]  %s12, 8192, %s89, [#allocation7], 256, 256, 16
    $region53: #{forward.1} parent=1 // pred_fallthru
      _
    // Predicated region
    $region54: #{forward.1} parent=1 // pred_check
      _
    $region55: #{forward.1} parent=1 // pred_check_branch
      %96 = sbr.rel (0) target = $region57
    $region56: #{forward.1} parent=1 // pred_region
      _
    $region57: #{forward.1} parent=1 // pred_fallthru
      _
    // Predicated region
    $region58: #{forward.1} parent=1 // pred_check
      _
    $region59: #{forward.1} parent=1 // pred_check_branch
      %98 = sbr.rel (0) target = $region61
    $region60: #{forward.1} parent=1 // pred_region
      %s100 = ssub.s32 8192, 8192
      %101 = vsyncadd [#allocation10], %s100
      %s102 = sshll.u32 [#allocation9], 4
      %s103 = int_to_ptr.vmem [resolvable:$true] %s102
      %108 = dma.hbm_to_vmem [thread:$0]  %s14, 8192, %s103, [#allocation10], 64, 64, 4
    $region61: #{forward.1} parent=1 // pred_fallthru
      _
    // Predicated region
    $region62: #{forward.1} parent=1 // pred_check
      _
    $region63: #{forward.1} parent=1 // pred_check_branch
      %110 = sbr.rel (0) target = $region65
    $region64: #{forward.1} parent=1 // pred_region
      _
    $region65: #{forward.1} parent=1 // pred_fallthru
      _
    // Predicated region
    $region66: #{forward.1} parent=1 // pred_check
      _
    $region67: #{forward.1} parent=1 // pred_check_branch
      %112 = sbr.rel (0) target = $region69
    $region68: #{forward.1} parent=1 // pred_region
      _
    $region69: #{forward.1} parent=1 // pred_fallthru
      _
    // Predicated region
    $region70: #{forward.1} parent=1 // pred_check
      _
    $region71: #{forward.1} parent=1 // pred_check_branch
      %114 = sbr.rel (0) target = $region73
    $region72: #{forward.1} parent=1 // pred_region
      _
    $region73: #{forward.1} parent=1 // pred_fallthru
      _
    // Predicated region
    $region74: #{forward.1} parent=1 // pred_check
      _
    $region75: #{forward.1} parent=1 // pred_check_branch
      %116 = sbr.rel (0) target = $region77
    $region76: #{forward.1} parent=1 // pred_region
      _
    $region77: #{forward.1} parent=1 // pred_fallthru
      _
    // Predicated region
    $region78: #{forward.1} parent=1 // pred_check
      _
    $region79: #{forward.1} parent=1 // pred_check_branch
      %118 = sbr.rel (0) target = $region81
    $region80: #{forward.1} parent=1 // pred_region
      _
    $region81: #{forward.1} parent=1 // pred_fallthru
      _
    // Predicated region
    $region82: #{forward.1} parent=1 // pred_check
      _
    $region83: #{forward.1} parent=1 // pred_check_branch
      %120 = sbr.rel (0) target = $region85
    $region84: #{forward.1} parent=1 // pred_region
      _
    $region85: #{forward.1} parent=1 // pred_fallthru
      _
    // Predicated region
    $region86: #{forward.1} parent=1 // pred_check
      _
    $region87: #{forward.1} parent=1 // pred_check_branch
      %122 = sbr.rel (0) target = $region89
    $region88: #{forward.1} parent=1 // pred_region
      _
    $region89: #{forward.1} parent=1 // pred_fallthru
      _
    // Predicated region
    $region90: #{forward.1} parent=1 // pred_check
      _
    $region91: #{forward.1} parent=1 // pred_check_branch
      %124 = sbr.rel (0) target = $region93
    $region92: #{forward.1} parent=1 // pred_region
      _
    $region93: #{forward.1} parent=1 // pred_fallthru
      _
    // Predicated region
    $region94: #{forward.1} parent=1 // pred_check
      _
    $region95: #{forward.1} parent=1 // pred_check_branch
      %126 = sbr.rel (0) target = $region97
    $region96: #{forward.1} parent=1 // pred_region
      _
    $region97: #{forward.1} parent=1 // pred_fallthru
      _
    // Predicated region
    $region98: #{forward.1} parent=1 // pred_check
      _
    $region99: #{forward.1} parent=1 // pred_check_branch
      %128 = sbr.rel (0) target = $region101
    $region100: #{forward.1} parent=1 // pred_region
      _
    $region101: #{forward.1} parent=1 // pred_fallthru
      _
    // Predicated region
    $region102: #{forward.1} parent=1 // pred_check
      _
    $region103: #{forward.1} parent=1 // pred_check_branch
      %130 = sbr.rel (0) target = $region105
    $region104: #{forward.1} parent=1 // pred_region
      _
    $region105: #{forward.1} parent=1 // pred_fallthru
      _
    // Predicated region
    $region106: #{forward.1} parent=1 // pred_check
      _
    $region107: #{forward.1} parent=1 // pred_check_branch
      %132 = sbr.rel (0) target = $region109
    $region108: #{forward.1} parent=1 // pred_region
      %133 = dma.done [#allocation4], 12288
    $region109: #{forward.1} parent=1 // pred_fallthru
      _
    // Predicated region
    $region110: #{forward.1} parent=1 // pred_check
      _
    $region111: #{forward.1} parent=1 // pred_check_branch
      %135 = sbr.rel (0) target = $region113
    $region112: #{forward.1} parent=1 // pred_region
      %136 = dma.done [#allocation7], 4096
    $region113: #{forward.1} parent=1 // pred_fallthru
      _
    // Predicated region
    $region114: #{forward.1} parent=1 // pred_check
      _
    $region115: #{forward.1} parent=1 // pred_check_branch
      %138 = sbr.rel (0) target = $region117
    $region116: #{forward.1} parent=1 // pred_region
      %139 = dma.done [#allocation7], 8192
    $region117: #{forward.1} parent=1 // pred_fallthru
      _
    // Predicated region
    $region118: #{forward.1} parent=1 // pred_check
      _
    $region119: #{forward.1} parent=1 // pred_check_branch
      %141 = sbr.rel (0) target = $region121
    $region120: #{forward.1} parent=1 // pred_region
      %142 = dma.done [#allocation10], 8192
    $region121: #{forward.1} parent=1 // pred_fallthru
      _
    %v144 = vld [vmem:[%s0] sm:$0xff]
    %v145 = vld [vmem:[%s0 + $0x8] sm:$0xff]
    %v146 = vld [vmem:[%s1] sm:$0x1]
    %v147 = vld [vmem:[%s2] sm:$0x1]
    %148 = vadd.xlane.f32.xlu0 %v144
    %v149 = vpop.xlane.xlu0 %148
    %150 = vadd.xlane.f32.xlu0 %v145
    %v151 = vpop.xlane.xlu0 %150
    %v152 = vrcp.pop 128.0
    %v153 = vmul.f32 %v149, %v152
    %v154 = vmul.f32 %v151, %v152
    %v155 = vsub.f32 %v144, %v153
    %v156 = vsub.f32 %v145, %v154
    %v157 = vmul.f32 %v155, %v155
    %v158 = vmul.f32 %v156, %v156
    %159 = vadd.xlane.f32.xlu0 %v157
    %v160 = vpop.xlane.xlu0 %159
    %161 = vadd.xlane.f32.xlu0 %v158
    %v162 = vpop.xlane.xlu0 %161
    %v163 = vmul.f32 %v160, %v152
    %v164 = vmul.f32 %v162, %v152
    %v165 = vadd.f32 %v163, 1e-12
    %v166 = vadd.f32 %v164, 1e-12
    %v167 = vrsqrt.pop %v165
    %v168 = vrsqrt.pop %v166
    %v169 = vmul.f32 %v155, %v167
    %v170 = vmul.f32 %v156, %v168
    %v172 = vlaneseq
    %v173 = vshrl.u32 %v172, 7
    %v174 = vsub.s32 0, %v173
    %v175 = vrot.slane %v146, %v174
    %v177 = vmul.f32 %v169, %v175
    %v178 = vmul.f32 %v170, %v175
    %v180 = vlaneseq
    %v181 = vshrl.u32 %v180, 7
    %v182 = vsub.s32 0, %v181
    %v183 = vrot.slane %v147, %v182
    %v185 = vadd.f32 %v177, %v183
    %v186 = vadd.f32 %v178, %v183
    %v187 = vld [vmem:[%s3] sm:$0x3]
    %v188 = vld [vmem:[#allocation3] sm:$0xff]
    %v189 = vld [vmem:[#allocation3 + $0x8] sm:$0xff]
    %v190 = vld [vmem:[#allocation3 + $0x10] sm:$0xff]
    %v191 = vld [vmem:[#allocation3 + $0x18] sm:$0xff]
    %v192 = vld [vmem:[#allocation3 + $0x20] sm:$0xff]
    %v193 = vld [vmem:[#allocation3 + $0x28] sm:$0xff]
    %v194 = vld [vmem:[#allocation3 + $0x30] sm:$0xff]
    %v195 = vld [vmem:[#allocation3 + $0x38] sm:$0xff]
    %v196 = vld [vmem:[#allocation3 + $0x40] sm:$0xff]
    %v197 = vld [vmem:[#allocation3 + $0x48] sm:$0xff]
    %v198 = vld [vmem:[#allocation3 + $0x50] sm:$0xff]
    %v199 = vld [vmem:[#allocation3 + $0x58] sm:$0xff]
    %v200 = vld [vmem:[#allocation3 + $0x60] sm:$0xff]
    %v201 = vld [vmem:[#allocation3 + $0x68] sm:$0xff]
    %v202 = vld [vmem:[#allocation3 + $0x70] sm:$0xff]
    %v203 = vld [vmem:[#allocation3 + $0x78] sm:$0xff]
    %v204 = vld [vmem:[#allocation3 + $0x80] sm:$0xff]
    %v205 = vld [vmem:[#allocation3 + $0x88] sm:$0xff]
    %v206 = vld [vmem:[#allocation3 + $0x90] sm:$0xff]
    %v207 = vld [vmem:[#allocation3 + $0x98] sm:$0xff]
    %v208 = vld [vmem:[#allocation3 + $0xa0] sm:$0xff]
    %v209 = vld [vmem:[#allocation3 + $0xa8] sm:$0xff]
    %v210 = vld [vmem:[#allocation3 + $0xb0] sm:$0xff]
    %v211 = vld [vmem:[#allocation3 + $0xb8] sm:$0xff]
    %v212 = vld [vmem:[#allocation3 + $0xc0] sm:$0xff]
    %v213 = vld [vmem:[#allocation3 + $0xc8] sm:$0xff]
    %v214 = vld [vmem:[#allocation3 + $0xd0] sm:$0xff]
    %v215 = vld [vmem:[#allocation3 + $0xd8] sm:$0xff]
    %v216 = vld [vmem:[#allocation3 + $0xe0] sm:$0xff]
    %v217 = vld [vmem:[#allocation3 + $0xe8] sm:$0xff]
    %v218 = vld [vmem:[#allocation3 + $0xf0] sm:$0xff]
    %v219 = vld [vmem:[#allocation3 + $0xf8] sm:$0xff]
    %v220 = vld [vmem:[#allocation3 + $0x100] sm:$0xff]
    %v221 = vld [vmem:[#allocation3 + $0x108] sm:$0xff]
    %v222 = vld [vmem:[#allocation3 + $0x110] sm:$0xff]
    %v223 = vld [vmem:[#allocation3 + $0x118] sm:$0xff]
    %v224 = vld [vmem:[#allocation3 + $0x120] sm:$0xff]
    %v225 = vld [vmem:[#allocation3 + $0x128] sm:$0xff]
    %v226 = vld [vmem:[#allocation3 + $0x130] sm:$0xff]
    %v227 = vld [vmem:[#allocation3 + $0x138] sm:$0xff]
    %v228 = vld [vmem:[#allocation3 + $0x140] sm:$0xff]
    %v229 = vld [vmem:[#allocation3 + $0x148] sm:$0xff]
    %v230 = vld [vmem:[#allocation3 + $0x150] sm:$0xff]
    %v231 = vld [vmem:[#allocation3 + $0x158] sm:$0xff]
    %v232 = vld [vmem:[#allocation3 + $0x160] sm:$0xff]
    %v233 = vld [vmem:[#allocation3 + $0x168] sm:$0xff]
    %v234 = vld [vmem:[#allocation3 + $0x170] sm:$0xff]
    %v235 = vld [vmem:[#allocation3 + $0x178] sm:$0xff]
    %v236 = vpack.c.bf16 %v186, %v185
    %v237 = vld [vmem:[%s7] sm:$0x3f]
    %v239 = vlaneseq
    %v240 = vshrl.u32 %v239, 7
    %v241 = vsub.s32 0, %v240
    %v242 = vrot.slane %v237, %v241
    %v243 = vlaneseq
    %v244 = vshrl.u32 %v243, 7
    %v245 = vsub.s32 1, %v244
    %v246 = vrot.slane %v237, %v245
    %v247 = vlaneseq
    %v248 = vshrl.u32 %v247, 7
    %v249 = vsub.s32 2, %v248
    %v250 = vrot.slane %v237, %v249
    %v251 = vlaneseq
    %v252 = vshrl.u32 %v251, 7
    %v253 = vsub.s32 3, %v252
    %v254 = vrot.slane %v237, %v253
    %v255 = vlaneseq
    %v256 = vshrl.u32 %v255, 7
    %v257 = vsub.s32 4, %v256
    %v258 = vrot.slane %v237, %v257
    %v259 = vlaneseq
    %v260 = vshrl.u32 %v259, 7
    %v261 = vsub.s32 5, %v260
    %v262 = vrot.slane %v237, %v261
    %v317 = vunpack.c.l.b16 %v188
    %v318 = vunpack.c.h.b16 %v188
    %v319 = vunpack.c.l.b16 %v189
    %v320 = vunpack.c.h.b16 %v189
    %v321 = vunpack.c.l.b16 %v190
    %v322 = vunpack.c.h.b16 %v190
    %v323 = vunpack.c.l.b16 %v191
    %v324 = vunpack.c.h.b16 %v191
    %v325 = vunpack.c.l.b16 %v192
    %v326 = vunpack.c.h.b16 %v192
    %v327 = vunpack.c.l.b16 %v193
    %v328 = vunpack.c.h.b16 %v193
    %v329 = vunpack.c.l.b16 %v194
    %v330 = vunpack.c.h.b16 %v194
    %v331 = vunpack.c.l.b16 %v195
    %v332 = vunpack.c.h.b16 %v195
    %v333 = vunpack.c.l.b16 %v196
    %v334 = vunpack.c.h.b16 %v196
    %v335 = vunpack.c.l.b16 %v197
    %v336 = vunpack.c.h.b16 %v197
    %v337 = vunpack.c.l.b16 %v198
    %v338 = vunpack.c.h.b16 %v198
    %v339 = vunpack.c.l.b16 %v199
    %v340 = vunpack.c.h.b16 %v199
    %v341 = vunpack.c.l.b16 %v200
    %v342 = vunpack.c.h.b16 %v200
    %v343 = vunpack.c.l.b16 %v201
    %v344 = vunpack.c.h.b16 %v201
    %v345 = vunpack.c.l.b16 %v202
    %v346 = vunpack.c.h.b16 %v202
    %v347 = vunpack.c.l.b16 %v203
    %v348 = vunpack.c.h.b16 %v203
    %v349 = vunpack.c.l.b16 %v204
    %v350 = vunpack.c.h.b16 %v204
    %v351 = vunpack.c.l.b16 %v205
    %v352 = vunpack.c.h.b16 %v205
    %v353 = vunpack.c.l.b16 %v206
    %v354 = vunpack.c.h.b16 %v206
    %v355 = vunpack.c.l.b16 %v207
    %v356 = vunpack.c.h.b16 %v207
    %v357 = vunpack.c.l.b16 %v208
    %v358 = vunpack.c.h.b16 %v208
    %v359 = vunpack.c.l.b16 %v209
    %v360 = vunpack.c.h.b16 %v209
    %v361 = vunpack.c.l.b16 %v210
    %v362 = vunpack.c.h.b16 %v210
    %v363 = vunpack.c.l.b16 %v211
    %v364 = vunpack.c.h.b16 %v211
    %v365 = vunpack.c.l.b16 %v212
    %v366 = vunpack.c.h.b16 %v212
    %v367 = vunpack.c.l.b16 %v213
    %v368 = vunpack.c.h.b16 %v213
    %v369 = vunpack.c.l.b16 %v214
    %v370 = vunpack.c.h.b16 %v214
    %v371 = vunpack.c.l.b16 %v215
    %v372 = vunpack.c.h.b16 %v215
    %v373 = vunpack.c.l.b16 %v216
    %v374 = vunpack.c.h.b16 %v216
    %v375 = vunpack.c.l.b16 %v217
    %v376 = vunpack.c.h.b16 %v217
    %v377 = vunpack.c.l.b16 %v218
    %v378 = vunpack.c.h.b16 %v218
    %v379 = vunpack.c.l.b16 %v219
    %v380 = vunpack.c.h.b16 %v219
    %v381 = vunpack.c.l.b16 %v220
    %v382 = vunpack.c.h.b16 %v220
    %v383 = vunpack.c.l.b16 %v221
    %v384 = vunpack.c.h.b16 %v221
    %v385 = vunpack.c.l.b16 %v222
    %v386 = vunpack.c.h.b16 %v222
    %v387 = vunpack.c.l.b16 %v223
    %v388 = vunpack.c.h.b16 %v223
    %v389 = vunpack.c.l.b16 %v224
    %v390 = vunpack.c.h.b16 %v224
    %v391 = vunpack.c.l.b16 %v225
    %v392 = vunpack.c.h.b16 %v225
    %v393 = vunpack.c.l.b16 %v226
    %v394 = vunpack.c.h.b16 %v226
    %v395 = vunpack.c.l.b16 %v227
    %v396 = vunpack.c.h.b16 %v227
    %v397 = vunpack.c.l.b16 %v228
    %v398 = vunpack.c.h.b16 %v228
    %v399 = vunpack.c.l.b16 %v229
    %v400 = vunpack.c.h.b16 %v229
    %v401 = vunpack.c.l.b16 %v230
    %v402 = vunpack.c.h.b16 %v230
    %v403 = vunpack.c.l.b16 %v231
    %v404 = vunpack.c.h.b16 %v231
    %v405 = vunpack.c.l.b16 %v232
    %v406 = vunpack.c.h.b16 %v232
    %v407 = vunpack.c.l.b16 %v233
    %v408 = vunpack.c.h.b16 %v233
    %v409 = vunpack.c.l.b16 %v234
    %v410 = vunpack.c.h.b16 %v234
    %v411 = vunpack.c.l.b16 %v235
    %v412 = vunpack.c.h.b16 %v235
    %v413 = vpack.c.b16 %v323, %v317
    %v414 = vpack.c.b16 %v324, %v318
    %v415 = vpack.c.b16 %v325, %v319
    %v416 = vpack.c.b16 %v326, %v320
    %v417 = vpack.c.b16 %v327, %v321
    %v418 = vpack.c.b16 %v328, %v322
    %v419 = vpack.c.b16 %v335, %v329
    %v420 = vpack.c.b16 %v336, %v330
    %v421 = vpack.c.b16 %v337, %v331
    %v422 = vpack.c.b16 %v338, %v332
    %v423 = vpack.c.b16 %v339, %v333
    %v424 = vpack.c.b16 %v340, %v334
    %v425 = vpack.c.b16 %v347, %v341
    %v426 = vpack.c.b16 %v348, %v342
    %v427 = vpack.c.b16 %v349, %v343
    %v428 = vpack.c.b16 %v350, %v344
    %v429 = vpack.c.b16 %v351, %v345
    %v430 = vpack.c.b16 %v352, %v346
    %v431 = vpack.c.b16 %v359, %v353
    %v432 = vpack.c.b16 %v360, %v354
    %v433 = vpack.c.b16 %v361, %v355
    %v434 = vpack.c.b16 %v362, %v356
    %v435 = vpack.c.b16 %v363, %v357
    %v436 = vpack.c.b16 %v364, %v358
    %v437 = vpack.c.b16 %v371, %v365
    %v438 = vpack.c.b16 %v372, %v366
    %v439 = vpack.c.b16 %v373, %v367
    %v440 = vpack.c.b16 %v374, %v368
    %v441 = vpack.c.b16 %v375, %v369
    %v442 = vpack.c.b16 %v376, %v370
    %v443 = vpack.c.b16 %v383, %v377
    %v444 = vpack.c.b16 %v384, %v378
    %v445 = vpack.c.b16 %v385, %v379
    %v446 = vpack.c.b16 %v386, %v380
    %v447 = vpack.c.b16 %v387, %v381
    %v448 = vpack.c.b16 %v388, %v382
    %v449 = vpack.c.b16 %v395, %v389
    %v450 = vpack.c.b16 %v396, %v390
    %v451 = vpack.c.b16 %v397, %v391
    %v452 = vpack.c.b16 %v398, %v392
    %v453 = vpack.c.b16 %v399, %v393
    %v454 = vpack.c.b16 %v400, %v394
    %v455 = vpack.c.b16 %v407, %v401
    %v456 = vpack.c.b16 %v408, %v402
    %v457 = vpack.c.b16 %v409, %v403
    %v458 = vpack.c.b16 %v410, %v404
    %v459 = vpack.c.b16 %v411, %v405
    %v460 = vpack.c.b16 %v412, %v406
    %509 = vmatprep.subr.bf16.mxu0 %v414
    %510 = vmatpush1.bf16.msra.mxu0 %v413
    %511 = vmatprep.subr.bf16.mxu0 %v420
    %512 = vmatpush1.bf16.msra.mxu0 %v419
    %513 = vmatprep.subr.bf16.mxu0 %v426
    %514 = vmatpush1.bf16.msra.mxu0 %v425
    %515 = vmatprep.subr.bf16.mxu0 %v432
    %516 = vmatpush1.bf16.msra.mxu0 %v431
    %517 = vmatprep.subr.bf16.mxu0 %v438
    %518 = vmatpush1.bf16.msra.mxu0 %v437
    %519 = vmatprep.subr.bf16.mxu0 %v444
    %520 = vmatpush1.bf16.msra.mxu0 %v443
    %521 = vmatprep.subr.bf16.mxu0 %v450
    %522 = vmatpush1.bf16.msra.mxu0 %v449
    %523 = vmatprep.subr.bf16.mxu0 %v456
    %524 = vmatpush1.bf16.msra.mxu0 %v455
    %525 = vmatprep.subr.bf16.mxu0 0
    %526 = vmatpush1.bf16.msra.mxu0 0
    %527 = vmatprep.subr.bf16.mxu0 0
    %528 = vmatpush1.bf16.msra.mxu0 0
    %529 = vmatprep.subr.bf16.mxu0 0
    %530 = vmatpush1.bf16.msra.mxu0 0
    %531 = vmatprep.subr.bf16.mxu0 0
    %532 = vmatpush1.bf16.msra.mxu0 0
    %533 = vmatprep.subr.bf16.mxu0 0
    %534 = vmatpush1.bf16.msra.mxu0 0
    %535 = vmatprep.subr.bf16.mxu0 0
    %536 = vmatpush1.bf16.msra.mxu0 0
    %537 = vmatprep.subr.bf16.mxu0 0
    %538 = vmatpush1.bf16.msra.mxu0 0
    %539 = vmatprep.subr.bf16.mxu0 0
    %540 = vmatpush1.bf16.msra.mxu0 0
    %541 = vmatprep.mubr.bf16.mxu0 0
    %542 = vmatmul.mubr.bf16.gmra.mrb[0].mxu0 %v236
    %v543 = vpop.f32.mrb[0].mxu0
    %v544 = vadd.f32 %v242, %v543
    %v545 = vpop.f32.mrb[0].mxu0
    %v546 = vadd.f32 %v246, %v545
    %v547 = vpop.f32.mrb[0].mxu0
    %v548 = vadd.f32 %v242, %v547
    %v549 = vpop.f32.mrb[0].mxu0
    %v550 = vadd.f32 %v246, %v549
    %551 = vdwg.mxu0
    %552 = vmatprep.subr.bf16.mxu0 %v416
    %553 = vmatpush1.bf16.msra.mxu0 %v415
    %554 = vmatprep.subr.bf16.mxu0 %v422
    %555 = vmatpush1.bf16.msra.mxu0 %v421
    %556 = vmatprep.subr.bf16.mxu0 %v428
    %557 = vmatpush1.bf16.msra.mxu0 %v427
    %558 = vmatprep.subr.bf16.mxu0 %v434
    %559 = vmatpush1.bf16.msra.mxu0 %v433
    %560 = vmatprep.subr.bf16.mxu0 %v440
    %561 = vmatpush1.bf16.msra.mxu0 %v439
    %562 = vmatprep.subr.bf16.mxu0 %v446
    %563 = vmatpush1.bf16.msra.mxu0 %v445
    %564 = vmatprep.subr.bf16.mxu0 %v452
    %565 = vmatpush1.bf16.msra.mxu0 %v451
    %566 = vmatprep.subr.bf16.mxu0 %v458
    %567 = vmatpush1.bf16.msra.mxu0 %v457
    %568 = vmatprep.subr.bf16.mxu0 0
    %569 = vmatpush1.bf16.msra.mxu0 0
    %570 = vmatprep.subr.bf16.mxu0 0
    %571 = vmatpush1.bf16.msra.mxu0 0
    %572 = vmatprep.subr.bf16.mxu0 0
    %573 = vmatpush1.bf16.msra.mxu0 0
    %574 = vmatprep.subr.bf16.mxu0 0
    %575 = vmatpush1.bf16.msra.mxu0 0
    %576 = vmatprep.subr.bf16.mxu0 0
    %577 = vmatpush1.bf16.msra.mxu0 0
    %578 = vmatprep.subr.bf16.mxu0 0
    %579 = vmatpush1.bf16.msra.mxu0 0
    %580 = vmatprep.subr.bf16.mxu0 0
    %581 = vmatpush1.bf16.msra.mxu0 0
    %582 = vmatprep.subr.bf16.mxu0 0
    %583 = vmatpush1.bf16.msra.mxu0 0
    %584 = vmatprep.mubr.bf16.mxu0 0
    %585 = vmatmul.mubr.bf16.gmra.mrb[0].mxu0 %v236
    %v586 = vpop.f32.mrb[0].mxu0
    %v587 = vadd.f32 %v250, %v586
    %v588 = vpop.f32.mrb[0].mxu0
    %v589 = vadd.f32 %v254, %v588
    %v590 = vpop.f32.mrb[0].mxu0
    %v591 = vadd.f32 %v250, %v590
    %v592 = vpop.f32.mrb[0].mxu0
    %v593 = vadd.f32 %v254, %v592
    %594 = vdwg.mxu0
    %595 = vmatprep.subr.bf16.mxu0 %v418
    %596 = vmatpush1.bf16.msra.mxu0 %v417
    %597 = vmatprep.subr.bf16.mxu0 %v424
    %598 = vmatpush1.bf16.msra.mxu0 %v423
    %599 = vmatprep.subr.bf16.mxu0 %v430
    %600 = vmatpush1.bf16.msra.mxu0 %v429
    %601 = vmatprep.subr.bf16.mxu0 %v436
    %602 = vmatpush1.bf16.msra.mxu0 %v435
    %603 = vmatprep.subr.bf16.mxu0 %v442
    %604 = vmatpush1.bf16.msra.mxu0 %v441
    %605 = vmatprep.subr.bf16.mxu0 %v448
    %606 = vmatpush1.bf16.msra.mxu0 %v447
    %607 = vmatprep.subr.bf16.mxu0 %v454
    %608 = vmatpush1.bf16.msra.mxu0 %v453
    %609 = vmatprep.subr.bf16.mxu0 %v460
    %610 = vmatpush1.bf16.msra.mxu0 %v459
    %611 = vmatprep.subr.bf16.mxu0 0
    %612 = vmatpush1.bf16.msra.mxu0 0
    %613 = vmatprep.subr.bf16.mxu0 0
    %614 = vmatpush1.bf16.msra.mxu0 0
    %615 = vmatprep.subr.bf16.mxu0 0
    %616 = vmatpush1.bf16.msra.mxu0 0
    %617 = vmatprep.subr.bf16.mxu0 0
    %618 = vmatpush1.bf16.msra.mxu0 0
    %619 = vmatprep.subr.bf16.mxu0 0
    %620 = vmatpush1.bf16.msra.mxu0 0
    %621 = vmatprep.subr.bf16.mxu0 0
    %622 = vmatpush1.bf16.msra.mxu0 0
    %623 = vmatprep.subr.bf16.mxu0 0
    %624 = vmatpush1.bf16.msra.mxu0 0
    %625 = vmatprep.subr.bf16.mxu0 0
    %626 = vmatpush1.bf16.msra.mxu0 0
    %627 = vmatprep.mubr.bf16.mxu0 0
    %628 = vmatmul.mubr.bf16.gmra.mrb[0].mxu0 %v236
    %v629 = vpop.f32.mrb[0].mxu0
    %v630 = vadd.f32 %v258, %v629
    %v631 = vpop.f32.mrb[0].mxu0
    %v632 = vadd.f32 %v262, %v631
    %v633 = vpop.f32.mrb[0].mxu0
    %v634 = vadd.f32 %v258, %v633
    %v635 = vpop.f32.mrb[0].mxu0
    %v636 = vadd.f32 %v262, %v635
    %637 = vdwg.mxu0
    %v638 = vpack.c.bf16 %v548, %v544
    %v639 = vpack.c.bf16 %v550, %v546
    %v640 = vpack.c.bf16 %v591, %v587
    %v641 = vpack.c.bf16 %v593, %v589
    %v642 = vpack.c.bf16 %v634, %v630
    %v643 = vpack.c.bf16 %v636, %v632
    %v644 = vlaneseq
    %v645 = vshrl.u32 %v644, 7
    %v646 = vsub.s32 0, %v645
    %v647 = vrot.slane %v187, %v646
    %648 = vmatprep.subr.bf16.mxu0 0
    %649 = vmatpush1.bf16.xpose.msra.mxu0 %v640
    %650 = vmatprep.subr.bf16.mxu0 0
    %651 = vmatpush1.bf16.xpose.msra.mxu0 0
    %652 = vmatprep.subr.bf16.mxu0 0
    %653 = vmatpush1.bf16.xpose.msra.mxu0 0
    %654 = vmatprep.subr.bf16.mxu0 0
    %655 = vmatpush1.bf16.xpose.msra.mxu0 0
    %656 = vmatprep.subr.bf16.mxu0 0
    %657 = vmatpush1.bf16.xpose.msra.mxu0 0
    %658 = vmatprep.subr.bf16.mxu0 0
    %659 = vmatpush1.bf16.xpose.msra.mxu0 0
    %660 = vmatprep.subr.bf16.mxu0 0
    %661 = vmatpush1.bf16.xpose.msra.mxu0 0
    %662 = vmatprep.subr.bf16.mxu0 0
    %663 = vmatpush1.bf16.xpose.msra.mxu0 0
    %664 = vmatprep.subr.bf16.mxu0 0
    %665 = vmatpush1.bf16.xpose.msra.mxu0 0
    %666 = vmatprep.subr.bf16.mxu0 0
    %667 = vmatpush1.bf16.xpose.msra.mxu0 0
    %668 = vmatprep.subr.bf16.mxu0 0
    %669 = vmatpush1.bf16.xpose.msra.mxu0 0
    %670 = vmatprep.subr.bf16.mxu0 0
    %671 = vmatpush1.bf16.xpose.msra.mxu0 0
    %672 = vmatprep.subr.bf16.mxu0 0
    %673 = vmatpush1.bf16.xpose.msra.mxu0 0
    %674 = vmatprep.subr.bf16.mxu0 0
    %675 = vmatpush1.bf16.xpose.msra.mxu0 0
    %676 = vmatprep.subr.bf16.mxu0 0
    %677 = vmatpush1.bf16.xpose.msra.mxu0 0
    %678 = vmatprep.subr.bf16.mxu0 0
    %679 = vmatpush1.bf16.xpose.msra.mxu0 0
    %680 = vmatprep.mubr.bf16.mxu0 0
    %681 = vmatmul.mubr.bf16.gmra.mrb[0].mxu0 %v638
    %v682 = vpop.f32.mrb[0].mxu0
    %v683 = vadd.f32 %v647, %v682
    %v684 = vpop.f32.mrb[0].mxu0
    %v685 = vpop.f32.mrb[0].mxu0
    %v686 = vpop.f32.mrb[0].mxu0
    %687 = vdwg.mxu0
    %vm688 = vcmask 64512
    %v689 = vsel %vm688, %v683, -inf
    %690 = vmax.xlane.f32.xlu0 %v689
    %v691 = vpop.xlane.xlu0 %690
    %v692 = vsub.f32 %v683, %v691
    %v693 = vmul.f32 %v692, 1.442695
    %v694 = vpow.pop %v693
    %v695 = vsel %vm688, %v694, 0.0
    %696 = vadd.xlane.f32.xlu0 %v695
    %v697 = vpop.xlane.xlu0 %696
    %v698 = vrcp.pop %v697
    %v699 = vmul.f32 %v694, %v698
    %v700 = vpack.c.bf16 %v699, %v699
    %v702 = vsel %vm688, %v700, 0
    %vm704 = vcmask 1043456
    %v706 = vsel %vm704, %v642, 0
    %708 = vmatprep.subr.bf16.mxu0 0
    %709 = vmatpush1.bf16.msra.mxu0 %v706
    %710 = vmatprep.subr.bf16.mxu0 0
    %711 = vmatpush1.bf16.msra.mxu0 0
    %712 = vmatprep.subr.bf16.mxu0 0
    %713 = vmatpush1.bf16.msra.mxu0 0
    %714 = vmatprep.subr.bf16.mxu0 0
    %715 = vmatpush1.bf16.msra.mxu0 0
    %716 = vmatprep.subr.bf16.mxu0 0
    %717 = vmatpush1.bf16.msra.mxu0 0
    %718 = vmatprep.subr.bf16.mxu0 0
    %719 = vmatpush1.bf16.msra.mxu0 0
    %720 = vmatprep.subr.bf16.mxu0 0
    %721 = vmatpush1.bf16.msra.mxu0 0
    %722 = vmatprep.subr.bf16.mxu0 0
    %723 = vmatpush1.bf16.msra.mxu0 0
    %724 = vmatprep.subr.bf16.mxu0 0
    %725 = vmatpush1.bf16.msra.mxu0 0
    %726 = vmatprep.subr.bf16.mxu0 0
    %727 = vmatpush1.bf16.msra.mxu0 0
    %728 = vmatprep.subr.bf16.mxu0 0
    %729 = vmatpush1.bf16.msra.mxu0 0
    %730 = vmatprep.subr.bf16.mxu0 0
    %731 = vmatpush1.bf16.msra.mxu0 0
    %732 = vmatprep.subr.bf16.mxu0 0
    %733 = vmatpush1.bf16.msra.mxu0 0
    %734 = vmatprep.subr.bf16.mxu0 0
    %735 = vmatpush1.bf16.msra.mxu0 0
    %736 = vmatprep.subr.bf16.mxu0 0
    %737 = vmatpush1.bf16.msra.mxu0 0
    %738 = vmatprep.subr.bf16.mxu0 0
    %739 = vmatpush1.bf16.msra.mxu0 0
    %740 = vmatprep.mubr.bf16.mxu0 0
    %741 = vmatmul.mubr.bf16.gmra.mrb[0].mxu0 %v702
    %v742 = vpop.f32.mrb[0].mxu0
    %v743 = vadd.f32 0.0, %v742
    %v744 = vpop.f32.mrb[0].mxu0
    %v745 = vpop.f32.mrb[0].mxu0
    %v746 = vpop.f32.mrb[0].mxu0
    %747 = vdwg.mxu0
    %748 = vst [vmem:[#allocation2] sm:$0xff] %v743
    %749 = vmatprep.subr.bf16.mxu0 0
    %750 = vmatpush1.bf16.xpose.msra.mxu0 %v641
    %751 = vmatprep.subr.bf16.mxu0 0
    %752 = vmatpush1.bf16.xpose.msra.mxu0 0
    %753 = vmatprep.subr.bf16.mxu0 0
    %754 = vmatpush1.bf16.xpose.msra.mxu0 0
    %755 = vmatprep.subr.bf16.mxu0 0
    %756 = vmatpush1.bf16.xpose.msra.mxu0 0
    %757 = vmatprep.subr.bf16.mxu0 0
    %758 = vmatpush1.bf16.xpose.msra.mxu0 0
    %759 = vmatprep.subr.bf16.mxu0 0
    %760 = vmatpush1.bf16.xpose.msra.mxu0 0
    %761 = vmatprep.subr.bf16.mxu0 0
    %762 = vmatpush1.bf16.xpose.msra.mxu0 0
    %763 = vmatprep.subr.bf16.mxu0 0
    %764 = vmatpush1.bf16.xpose.msra.mxu0 0
    %765 = vmatprep.subr.bf16.mxu0 0
    %766 = vmatpush1.bf16.xpose.msra.mxu0 0
    %767 = vmatprep.subr.bf16.mxu0 0
    %768 = vmatpush1.bf16.xpose.msra.mxu0 0
    %769 = vmatprep.subr.bf16.mxu0 0
    %770 = vmatpush1.bf16.xpose.msra.mxu0 0
    %771 = vmatprep.subr.bf16.mxu0 0
    %772 = vmatpush1.bf16.xpose.msra.mxu0 0
    %773 = vmatprep.subr.bf16.mxu0 0
    %774 = vmatpush1.bf16.xpose.msra.mxu0 0
    %775 = vmatprep.subr.bf16.mxu0 0
    %776 = vmatpush1.bf16.xpose.msra.mxu0 0
    %777 = vmatprep.subr.bf16.mxu0 0
    %778 = vmatpush1.bf16.xpose.msra.mxu0 0
    %779 = vmatprep.subr.bf16.mxu0 0
    %780 = vmatpush1.bf16.xpose.msra.mxu0 0
    %781 = vmatprep.mubr.bf16.mxu0 0
    %782 = vmatmul.mubr.bf16.gmra.mrb[0].mxu0 %v639
    %v783 = vpop.f32.mrb[0].mxu0
    %v784 = vadd.f32 %v647, %v783
    %v785 = vpop.f32.mrb[0].mxu0
    %v786 = vpop.f32.mrb[0].mxu0
    %v787 = vpop.f32.mrb[0].mxu0
    %788 = vdwg.mxu0
    %v789 = vsel %vm688, %v784, -inf
    %790 = vmax.xlane.f32.xlu0 %v789
    %v791 = vpop.xlane.xlu0 %790
    %v792 = vsub.f32 %v784, %v791
    %v793 = vmul.f32 %v792, 1.442695
    %v794 = vpow.pop %v793
    %v795 = vsel %vm688, %v794, 0.0
    %796 = vadd.xlane.f32.xlu0 %v795
    %v797 = vpop.xlane.xlu0 %796
    %v798 = vrcp.pop %v797
    %v799 = vmul.f32 %v794, %v798
    %v800 = vpack.c.bf16 %v799, %v799
    %v802 = vsel %vm688, %v800, 0
    %v805 = vsel %vm704, %v643, 0
    %807 = vmatprep.subr.bf16.mxu0 0
    %808 = vmatpush1.bf16.msra.mxu0 %v805
    %809 = vmatprep.subr.bf16.mxu0 0
    %810 = vmatpush1.bf16.msra.mxu0 0
    %811 = vmatprep.subr.bf16.mxu0 0
    %812 = vmatpush1.bf16.msra.mxu0 0
    %813 = vmatprep.subr.bf16.mxu0 0
    %814 = vmatpush1.bf16.msra.mxu0 0
    %815 = vmatprep.subr.bf16.mxu0 0
    %816 = vmatpush1.bf16.msra.mxu0 0
    %817 = vmatprep.subr.bf16.mxu0 0
    %818 = vmatpush1.bf16.msra.mxu0 0
    %819 = vmatprep.subr.bf16.mxu0 0
    %820 = vmatpush1.bf16.msra.mxu0 0
    %821 = vmatprep.subr.bf16.mxu0 0
    %822 = vmatpush1.bf16.msra.mxu0 0
    %823 = vmatprep.subr.bf16.mxu0 0
    %824 = vmatpush1.bf16.msra.mxu0 0
    %825 = vmatprep.subr.bf16.mxu0 0
    %826 = vmatpush1.bf16.msra.mxu0 0
    %827 = vmatprep.subr.bf16.mxu0 0
    %828 = vmatpush1.bf16.msra.mxu0 0
    %829 = vmatprep.subr.bf16.mxu0 0
    %830 = vmatpush1.bf16.msra.mxu0 0
    %831 = vmatprep.subr.bf16.mxu0 0
    %832 = vmatpush1.bf16.msra.mxu0 0
    %833 = vmatprep.subr.bf16.mxu0 0
    %834 = vmatpush1.bf16.msra.mxu0 0
    %835 = vmatprep.subr.bf16.mxu0 0
    %836 = vmatpush1.bf16.msra.mxu0 0
    %837 = vmatprep.subr.bf16.mxu0 0
    %838 = vmatpush1.bf16.msra.mxu0 0
    %839 = vmatprep.mubr.bf16.mxu0 0
    %840 = vmatmul.mubr.bf16.gmra.mrb[0].mxu0 %v802
    %v841 = vpop.f32.mrb[0].mxu0
    %v842 = vadd.f32 0.0, %v841
    %v843 = vpop.f32.mrb[0].mxu0
    %v844 = vpop.f32.mrb[0].mxu0
    %v845 = vpop.f32.mrb[0].mxu0
    %846 = vdwg.mxu0
    %847 = vst [vmem:[#allocation2 + $0x8] sm:$0xff] %v842
    %v848 = vlaneseq
    %v849 = vshrl.u32 %v848, 7
    %v850 = vsub.s32 1, %v849
    %v851 = vrot.slane %v187, %v850
    %v853 = vrot.slane %v638, 4
    %v856 = vrot.slane %v640, 4
    %858 = vmatprep.subr.bf16.mxu0 0
    %859 = vmatpush1.bf16.xpose.msra.mxu0 %v856
    %860 = vmatprep.subr.bf16.mxu0 0
    %861 = vmatpush1.bf16.xpose.msra.mxu0 0
    %862 = vmatprep.subr.bf16.mxu0 0
    %863 = vmatpush1.bf16.xpose.msra.mxu0 0
    %864 = vmatprep.subr.bf16.mxu0 0
    %865 = vmatpush1.bf16.xpose.msra.mxu0 0
    %866 = vmatprep.subr.bf16.mxu0 0
    %867 = vmatpush1.bf16.xpose.msra.mxu0 0
    %868 = vmatprep.subr.bf16.mxu0 0
    %869 = vmatpush1.bf16.xpose.msra.mxu0 0
    %870 = vmatprep.subr.bf16.mxu0 0
    %871 = vmatpush1.bf16.xpose.msra.mxu0 0
    %872 = vmatprep.subr.bf16.mxu0 0
    %873 = vmatpush1.bf16.xpose.msra.mxu0 0
    %874 = vmatprep.subr.bf16.mxu0 0
    %875 = vmatpush1.bf16.xpose.msra.mxu0 0
    %876 = vmatprep.subr.bf16.mxu0 0
    %877 = vmatpush1.bf16.xpose.msra.mxu0 0
    %878 = vmatprep.subr.bf16.mxu0 0
    %879 = vmatpush1.bf16.xpose.msra.mxu0 0
    %880 = vmatprep.subr.bf16.mxu0 0
    %881 = vmatpush1.bf16.xpose.msra.mxu0 0
    %882 = vmatprep.subr.bf16.mxu0 0
    %883 = vmatpush1.bf16.xpose.msra.mxu0 0
    %884 = vmatprep.subr.bf16.mxu0 0
    %885 = vmatpush1.bf16.xpose.msra.mxu0 0
    %886 = vmatprep.subr.bf16.mxu0 0
    %887 = vmatpush1.bf16.xpose.msra.mxu0 0
    %888 = vmatprep.subr.bf16.mxu0 0
    %889 = vmatpush1.bf16.xpose.msra.mxu0 0
    %890 = vmatprep.mubr.bf16.mxu0 0
    %891 = vmatmul.mubr.bf16.gmra.mrb[0].mxu0 %v853
    %v892 = vpop.f32.mrb[0].mxu0
    %v893 = vadd.f32 %v851, %v892
    %v894 = vpop.f32.mrb[0].mxu0
    %v895 = vpop.f32.mrb[0].mxu0
    %v896 = vpop.f32.mrb[0].mxu0
    %897 = vdwg.mxu0
    %v898 = vsel %vm688, %v893, -inf
    %899 = vmax.xlane.f32.xlu0 %v898
    %v900 = vpop.xlane.xlu0 %899
    %v901 = vsub.f32 %v893, %v900
    %v902 = vmul.f32 %v901, 1.442695
    %v903 = vpow.pop %v902
    %v904 = vsel %vm688, %v903, 0.0
    %905 = vadd.xlane.f32.xlu0 %v904
    %v906 = vpop.xlane.xlu0 %905
    %v907 = vrcp.pop %v906
    %v908 = vmul.f32 %v903, %v907
    %v909 = vpack.c.bf16 %v908, %v908
    %v911 = vrot.slane %v642, 4
    %v913 = vsel %vm688, %v909, 0
    %v916 = vsel %vm704, %v911, 0
    %918 = vmatprep.subr.bf16.mxu0 0
    %919 = vmatpush1.bf16.msra.mxu0 %v916
    %920 = vmatprep.subr.bf16.mxu0 0
    %921 = vmatpush1.bf16.msra.mxu0 0
    %922 = vmatprep.subr.bf16.mxu0 0
    %923 = vmatpush1.bf16.msra.mxu0 0
    %924 = vmatprep.subr.bf16.mxu0 0
    %925 = vmatpush1.bf16.msra.mxu0 0
    %926 = vmatprep.subr.bf16.mxu0 0
    %927 = vmatpush1.bf16.msra.mxu0 0
    %928 = vmatprep.subr.bf16.mxu0 0
    %929 = vmatpush1.bf16.msra.mxu0 0
    %930 = vmatprep.subr.bf16.mxu0 0
    %931 = vmatpush1.bf16.msra.mxu0 0
    %932 = vmatprep.subr.bf16.mxu0 0
    %933 = vmatpush1.bf16.msra.mxu0 0
    %934 = vmatprep.subr.bf16.mxu0 0
    %935 = vmatpush1.bf16.msra.mxu0 0
    %936 = vmatprep.subr.bf16.mxu0 0
    %937 = vmatpush1.bf16.msra.mxu0 0
    %938 = vmatprep.subr.bf16.mxu0 0
    %939 = vmatpush1.bf16.msra.mxu0 0
    %940 = vmatprep.subr.bf16.mxu0 0
    %941 = vmatpush1.bf16.msra.mxu0 0
    %942 = vmatprep.subr.bf16.mxu0 0
    %943 = vmatpush1.bf16.msra.mxu0 0
    %944 = vmatprep.subr.bf16.mxu0 0
    %945 = vmatpush1.bf16.msra.mxu0 0
    %946 = vmatprep.subr.bf16.mxu0 0
    %947 = vmatpush1.bf16.msra.mxu0 0
    %948 = vmatprep.subr.bf16.mxu0 0
    %949 = vmatpush1.bf16.msra.mxu0 0
    %950 = vmatprep.mubr.bf16.mxu0 0
    %951 = vmatmul.mubr.bf16.gmra.mrb[0].mxu0 %v913
    %v952 = vpop.f32.mrb[0].mxu0
    %v953 = vadd.f32 0.0, %v952
    %v954 = vpop.f32.mrb[0].mxu0
    %v955 = vpop.f32.mrb[0].mxu0
    %v956 = vpop.f32.mrb[0].mxu0
    %957 = vdwg.mxu0
    %958 = vst [vmem:[#allocation2 + $0x10] sm:$0xff] %v953
    %v960 = vrot.slane %v639, 4
    %v963 = vrot.slane %v641, 4
    %965 = vmatprep.subr.bf16.mxu0 0
    %966 = vmatpush1.bf16.xpose.msra.mxu0 %v963
    %967 = vmatprep.subr.bf16.mxu0 0
    %968 = vmatpush1.bf16.xpose.msra.mxu0 0
    %969 = vmatprep.subr.bf16.mxu0 0
    %970 = vmatpush1.bf16.xpose.msra.mxu0 0
    %971 = vmatprep.subr.bf16.mxu0 0
    %972 = vmatpush1.bf16.xpose.msra.mxu0 0
    %973 = vmatprep.subr.bf16.mxu0 0
    %974 = vmatpush1.bf16.xpose.msra.mxu0 0
    %975 = vmatprep.subr.bf16.mxu0 0
    %976 = vmatpush1.bf16.xpose.msra.mxu0 0
    %977 = vmatprep.subr.bf16.mxu0 0
    %978 = vmatpush1.bf16.xpose.msra.mxu0 0
    %979 = vmatprep.subr.bf16.mxu0 0
    %980 = vmatpush1.bf16.xpose.msra.mxu0 0
    %981 = vmatprep.subr.bf16.mxu0 0
    %982 = vmatpush1.bf16.xpose.msra.mxu0 0
    %983 = vmatprep.subr.bf16.mxu0 0
    %984 = vmatpush1.bf16.xpose.msra.mxu0 0
    %985 = vmatprep.subr.bf16.mxu0 0
    %986 = vmatpush1.bf16.xpose.msra.mxu0 0
    %987 = vmatprep.subr.bf16.mxu0 0
    %988 = vmatpush1.bf16.xpose.msra.mxu0 0
    %989 = vmatprep.subr.bf16.mxu0 0
    %990 = vmatpush1.bf16.xpose.msra.mxu0 0
    %991 = vmatprep.subr.bf16.mxu0 0
    %992 = vmatpush1.bf16.xpose.msra.mxu0 0
    %993 = vmatprep.subr.bf16.mxu0 0
    %994 = vmatpush1.bf16.xpose.msra.mxu0 0
    %995 = vmatprep.subr.bf16.mxu0 0
    %996 = vmatpush1.bf16.xpose.msra.mxu0 0
    %997 = vmatprep.mubr.bf16.mxu0 0
    %998 = vmatmul.mubr.bf16.gmra.mrb[0].mxu0 %v960
    %v999 = vpop.f32.mrb[0].mxu0
    %v1000 = vadd.f32 %v851, %v999
    %v1001 = vpop.f32.mrb[0].mxu0
    %v1002 = vpop.f32.mrb[0].mxu0
    %v1003 = vpop.f32.mrb[0].mxu0
    %1004 = vdwg.mxu0
    %v1005 = vsel %vm688, %v1000, -inf
    %1006 = vmax.xlane.f32.xlu0 %v1005
    %v1007 = vpop.xlane.xlu0 %1006
    %v1008 = vsub.f32 %v1000, %v1007
    %v1009 = vmul.f32 %v1008, 1.442695
    %v1010 = vpow.pop %v1009
    %v1011 = vsel %vm688, %v1010, 0.0
    %1012 = vadd.xlane.f32.xlu0 %v1011
    %v1013 = vpop.xlane.xlu0 %1012
    %v1014 = vrcp.pop %v1013
    %v1015 = vmul.f32 %v1010, %v1014
    %v1016 = vpack.c.bf16 %v1015, %v1015
    %v1018 = vrot.slane %v643, 4
    %v1020 = vsel %vm688, %v1016, 0
    %v1023 = vsel %vm704, %v1018, 0
    %1025 = vmatprep.subr.bf16.mxu0 0
    %1026 = vmatpush1.bf16.msra.mxu0 %v1023
    %1027 = vmatprep.subr.bf16.mxu0 0
    %1028 = vmatpush1.bf16.msra.mxu0 0
    %1029 = vmatprep.subr.bf16.mxu0 0
    %1030 = vmatpush1.bf16.msra.mxu0 0
    %1031 = vmatprep.subr.bf16.mxu0 0
    %1032 = vmatpush1.bf16.msra.mxu0 0
    %1033 = vmatprep.subr.bf16.mxu0 0
    %1034 = vmatpush1.bf16.msra.mxu0 0
    %1035 = vmatprep.subr.bf16.mxu0 0
    %1036 = vmatpush1.bf16.msra.mxu0 0
    %1037 = vmatprep.subr.bf16.mxu0 0
    %1038 = vmatpush1.bf16.msra.mxu0 0
    %1039 = vmatprep.subr.bf16.mxu0 0
    %1040 = vmatpush1.bf16.msra.mxu0 0
    %1041 = vmatprep.subr.bf16.mxu0 0
    %1042 = vmatpush1.bf16.msra.mxu0 0
    %1043 = vmatprep.subr.bf16.mxu0 0
    %1044 = vmatpush1.bf16.msra.mxu0 0
    %1045 = vmatprep.subr.bf16.mxu0 0
    %1046 = vmatpush1.bf16.msra.mxu0 0
    %1047 = vmatprep.subr.bf16.mxu0 0
    %1048 = vmatpush1.bf16.msra.mxu0 0
    %1049 = vmatprep.subr.bf16.mxu0 0
    %1050 = vmatpush1.bf16.msra.mxu0 0
    %1051 = vmatprep.subr.bf16.mxu0 0
    %1052 = vmatpush1.bf16.msra.mxu0 0
    %1053 = vmatprep.subr.bf16.mxu0 0
    %1054 = vmatpush1.bf16.msra.mxu0 0
    %1055 = vmatprep.subr.bf16.mxu0 0
    %1056 = vmatpush1.bf16.msra.mxu0 0
    %1057 = vmatprep.mubr.bf16.mxu0 0
    %1058 = vmatmul.mubr.bf16.gmra.mrb[0].mxu0 %v1020
    %v1059 = vpop.f32.mrb[0].mxu0
    %v1060 = vadd.f32 0.0, %v1059
    %v1061 = vpop.f32.mrb[0].mxu0
    %v1062 = vpop.f32.mrb[0].mxu0
    %v1063 = vpop.f32.mrb[0].mxu0
    %1064 = vdwg.mxu0
    %1065 = vst [vmem:[#allocation2 + $0x18] sm:$0xff] %v1060
    %v1066 = vld [vmem:[#allocation2] sm:$0xff]
    %v1067 = vld [vmem:[#allocation2 + $0x8] sm:$0xff]
    %v1068 = vld [vmem:[#allocation2 + $0x10] sm:$0xff]
    %v1069 = vld [vmem:[#allocation2 + $0x18] sm:$0xff]
    %v1070 = vld [vmem:[#allocation6] sm:$0xf]
    %v1071 = vld [vmem:[#allocation6 + $0x4] sm:$0xf]
    %v1072 = vld [vmem:[#allocation6 + $0x8] sm:$0xf]
    %v1073 = vld [vmem:[#allocation6 + $0xc] sm:$0xf]
    %v1074 = vld [vmem:[#allocation6 + $0x10] sm:$0xf]
    %v1075 = vld [vmem:[#allocation6 + $0x14] sm:$0xf]
    %v1076 = vld [vmem:[#allocation6 + $0x18] sm:$0xf]
    %v1077 = vld [vmem:[#allocation6 + $0x1c] sm:$0xf]
    %v1078 = vld [vmem:[#allocation6 + $0x20] sm:$0xf]
    %v1079 = vld [vmem:[#allocation6 + $0x24] sm:$0xf]
    %v1080 = vld [vmem:[#allocation6 + $0x28] sm:$0xf]
    %v1081 = vld [vmem:[#allocation6 + $0x2c] sm:$0xf]
    %v1082 = vld [vmem:[#allocation6 + $0x30] sm:$0xf]
    %v1083 = vld [vmem:[#allocation6 + $0x34] sm:$0xf]
    %v1084 = vld [vmem:[#allocation6 + $0x38] sm:$0xf]
    %v1085 = vld [vmem:[#allocation6 + $0x3c] sm:$0xf]
    %v1086 = vld [vmem:[#allocation6 + $0x40] sm:$0xf]
    %v1087 = vld [vmem:[#allocation6 + $0x44] sm:$0xf]
    %v1088 = vld [vmem:[#allocation6 + $0x48] sm:$0xf]
    %v1089 = vld [vmem:[#allocation6 + $0x4c] sm:$0xf]
    %v1090 = vld [vmem:[#allocation6 + $0x50] sm:$0xf]
    %v1091 = vld [vmem:[#allocation6 + $0x54] sm:$0xf]
    %v1092 = vld [vmem:[#allocation6 + $0x58] sm:$0xf]
    %v1093 = vld [vmem:[#allocation6 + $0x5c] sm:$0xf]
    %v1094 = vld [vmem:[#allocation6 + $0x60] sm:$0xf]
    %v1095 = vld [vmem:[#allocation6 + $0x64] sm:$0xf]
    %v1096 = vld [vmem:[#allocation6 + $0x68] sm:$0xf]
    %v1097 = vld [vmem:[#allocation6 + $0x6c] sm:$0xf]
    %v1098 = vld [vmem:[#allocation6 + $0x70] sm:$0xf]
    %v1099 = vld [vmem:[#allocation6 + $0x74] sm:$0xf]
    %v1100 = vld [vmem:[#allocation6 + $0x78] sm:$0xf]
    %v1101 = vld [vmem:[#allocation6 + $0x7c] sm:$0xf]
    %v1102 = vpack.c.bf16 %v1068, %v1066
    %v1103 = vpack.c.bf16 %v1069, %v1067
    %v1104 = vld [vmem:[%s9] sm:$0x1]
    %v1106 = vlaneseq
    %v1107 = vshrl.u32 %v1106, 7
    %v1108 = vsub.s32 0, %v1107
    %v1109 = vrot.slane %v1104, %v1108
    %v1143 = vunpack.c.l.b16 %v1070
    %v1144 = vunpack.c.l.b16 %v1071
    %v1145 = vunpack.c.l.b16 %v1072
    %v1146 = vunpack.c.l.b16 %v1073
    %v1147 = vunpack.c.l.b16 %v1074
    %v1148 = vunpack.c.l.b16 %v1075
    %v1149 = vunpack.c.l.b16 %v1076
    %v1150 = vunpack.c.l.b16 %v1077
    %v1151 = vunpack.c.l.b16 %v1078
    %v1152 = vunpack.c.l.b16 %v1079
    %v1153 = vunpack.c.l.b16 %v1080
    %v1154 = vunpack.c.l.b16 %v1081
    %v1155 = vunpack.c.l.b16 %v1082
    %v1156 = vunpack.c.l.b16 %v1083
    %v1157 = vunpack.c.l.b16 %v1084
    %v1158 = vunpack.c.l.b16 %v1085
    %v1159 = vunpack.c.l.b16 %v1086
    %v1160 = vunpack.c.l.b16 %v1087
    %v1161 = vunpack.c.l.b16 %v1088
    %v1162 = vunpack.c.l.b16 %v1089
    %v1163 = vunpack.c.l.b16 %v1090
    %v1164 = vunpack.c.l.b16 %v1091
    %v1165 = vunpack.c.l.b16 %v1092
    %v1166 = vunpack.c.l.b16 %v1093
    %v1167 = vunpack.c.l.b16 %v1094
    %v1168 = vunpack.c.l.b16 %v1095
    %v1169 = vunpack.c.l.b16 %v1096
    %v1170 = vunpack.c.l.b16 %v1097
    %v1171 = vunpack.c.l.b16 %v1098
    %v1172 = vunpack.c.l.b16 %v1099
    %v1173 = vunpack.c.l.b16 %v1100
    %v1174 = vunpack.c.l.b16 %v1101
    %v1175 = vpack.c.b16 %v1144, %v1143
    %v1176 = vpack.c.b16 %v1146, %v1145
    %v1177 = vpack.c.b16 %v1148, %v1147
    %v1178 = vpack.c.b16 %v1150, %v1149
    %v1179 = vpack.c.b16 %v1152, %v1151
    %v1180 = vpack.c.b16 %v1154, %v1153
    %v1181 = vpack.c.b16 %v1156, %v1155
    %v1182 = vpack.c.b16 %v1158, %v1157
    %v1183 = vpack.c.b16 %v1160, %v1159
    %v1184 = vpack.c.b16 %v1162, %v1161
    %v1185 = vpack.c.b16 %v1164, %v1163
    %v1186 = vpack.c.b16 %v1166, %v1165
    %v1187 = vpack.c.b16 %v1168, %v1167
    %v1188 = vpack.c.b16 %v1170, %v1169
    %v1189 = vpack.c.b16 %v1172, %v1171
    %v1190 = vpack.c.b16 %v1174, %v1173
    %1207 = vmatprep.subr.bf16.mxu0 0
    %1208 = vmatpush1.bf16.msra.mxu0 %v1175
    %1209 = vmatprep.subr.bf16.mxu0 0
    %1210 = vmatpush1.bf16.msra.mxu0 %v1176
    %1211 = vmatprep.subr.bf16.mxu0 0
    %1212 = vmatpush1.bf16.msra.mxu0 %v1177
    %1213 = vmatprep.subr.bf16.mxu0 0
    %1214 = vmatpush1.bf16.msra.mxu0 %v1178
    %1215 = vmatprep.subr.bf16.mxu0 0
    %1216 = vmatpush1.bf16.msra.mxu0 %v1179
    %1217 = vmatprep.subr.bf16.mxu0 0
    %1218 = vmatpush1.bf16.msra.mxu0 %v1180
    %1219 = vmatprep.subr.bf16.mxu0 0
    %1220 = vmatpush1.bf16.msra.mxu0 %v1181
    %1221 = vmatprep.subr.bf16.mxu0 0
    %1222 = vmatpush1.bf16.msra.mxu0 %v1182
    %1223 = vmatprep.subr.bf16.mxu0 0
    %1224 = vmatpush1.bf16.msra.mxu0 %v1183
    %1225 = vmatprep.subr.bf16.mxu0 0
    %1226 = vmatpush1.bf16.msra.mxu0 %v1184
    %1227 = vmatprep.subr.bf16.mxu0 0
    %1228 = vmatpush1.bf16.msra.mxu0 %v1185
    %1229 = vmatprep.subr.bf16.mxu0 0
    %1230 = vmatpush1.bf16.msra.mxu0 %v1186
    %1231 = vmatprep.subr.bf16.mxu0 0
    %1232 = vmatpush1.bf16.msra.mxu0 %v1187
    %1233 = vmatprep.subr.bf16.mxu0 0
    %1234 = vmatpush1.bf16.msra.mxu0 %v1188
    %1235 = vmatprep.subr.bf16.mxu0 0
    %1236 = vmatpush1.bf16.msra.mxu0 %v1189
    %1237 = vmatprep.subr.bf16.mxu0 0
    %1238 = vmatpush1.bf16.msra.mxu0 %v1190
    %1239 = vmatprep.mubr.bf16.mxu0 %v1103
    %1240 = vmatmul.mubr.bf16.gmra.mrb[0].mxu0 %v1102
    %v1241 = vpop.f32.mrb[0].mxu0
    %v1242 = vadd.f32 %v1109, %v1241
    %v1243 = vpop.f32.mrb[0].mxu0
    %v1244 = vpop.f32.mrb[0].mxu0
    %v1245 = vadd.f32 %v1109, %v1244
    %v1246 = vpop.f32.mrb[0].mxu0
    %1247 = vdwg.mxu0
    %v1248 = vadd.f32 %v185, %v1242
    %v1249 = vadd.f32 %v186, %v1245
    %v1250 = vld [vmem:[%s10] sm:$0x1]
    %v1251 = vld [vmem:[%s11] sm:$0x1]
    %1252 = vadd.xlane.f32.xlu0 %v1248
    %v1253 = vpop.xlane.xlu0 %1252
    %1254 = vadd.xlane.f32.xlu0 %v1249
    %v1255 = vpop.xlane.xlu0 %1254
    %v1256 = vmul.f32 %v1253, %v152
    %v1257 = vmul.f32 %v1255, %v152
    %v1258 = vsub.f32 %v1248, %v1256
    %v1259 = vsub.f32 %v1249, %v1257
    %v1260 = vmul.f32 %v1258, %v1258
    %v1261 = vmul.f32 %v1259, %v1259
    %1262 = vadd.xlane.f32.xlu0 %v1260
    %v1263 = vpop.xlane.xlu0 %1262
    %1264 = vadd.xlane.f32.xlu0 %v1261
    %v1265 = vpop.xlane.xlu0 %1264
    %v1266 = vmul.f32 %v1263, %v152
    %v1267 = vmul.f32 %v1265, %v152
    %v1268 = vadd.f32 %v1266, 1e-12
    %v1269 = vadd.f32 %v1267, 1e-12
    %v1270 = vrsqrt.pop %v1268
    %v1271 = vrsqrt.pop %v1269
    %v1272 = vmul.f32 %v1258, %v1270
    %v1273 = vmul.f32 %v1259, %v1271
    %v1275 = vlaneseq
    %v1276 = vshrl.u32 %v1275, 7
    %v1277 = vsub.s32 0, %v1276
    %v1278 = vrot.slane %v1250, %v1277
    %v1280 = vmul.f32 %v1272, %v1278
    %v1281 = vmul.f32 %v1273, %v1278
    %v1283 = vlaneseq
    %v1284 = vshrl.u32 %v1283, 7
    %v1285 = vsub.s32 0, %v1284
    %v1286 = vrot.slane %v1251, %v1285
    %v1288 = vadd.f32 %v1280, %v1286
    %v1289 = vadd.f32 %v1281, %v1286
    %v1290 = vld [vmem:[#allocation8] sm:$0xff]
    %v1291 = vld [vmem:[#allocation8 + $0x8] sm:$0xff]
    %v1292 = vld [vmem:[#allocation8 + $0x10] sm:$0xff]
    %v1293 = vld [vmem:[#allocation8 + $0x18] sm:$0xff]
    %v1294 = vld [vmem:[#allocation8 + $0x20] sm:$0xff]
    %v1295 = vld [vmem:[#allocation8 + $0x28] sm:$0xff]
    %v1296 = vld [vmem:[#allocation8 + $0x30] sm:$0xff]
    %v1297 = vld [vmem:[#allocation8 + $0x38] sm:$0xff]
    %v1298 = vld [vmem:[#allocation8 + $0x40] sm:$0xff]
    %v1299 = vld [vmem:[#allocation8 + $0x48] sm:$0xff]
    %v1300 = vld [vmem:[#allocation8 + $0x50] sm:$0xff]
    %v1301 = vld [vmem:[#allocation8 + $0x58] sm:$0xff]
    %v1302 = vld [vmem:[#allocation8 + $0x60] sm:$0xff]
    %v1303 = vld [vmem:[#allocation8 + $0x68] sm:$0xff]
    %v1304 = vld [vmem:[#allocation8 + $0x70] sm:$0xff]
    %v1305 = vld [vmem:[#allocation8 + $0x78] sm:$0xff]
    %v1306 = vld [vmem:[#allocation8 + $0x80] sm:$0xff]
    %v1307 = vld [vmem:[#allocation8 + $0x88] sm:$0xff]
    %v1308 = vld [vmem:[#allocation8 + $0x90] sm:$0xff]
    %v1309 = vld [vmem:[#allocation8 + $0x98] sm:$0xff]
    %v1310 = vld [vmem:[#allocation8 + $0xa0] sm:$0xff]
    %v1311 = vld [vmem:[#allocation8 + $0xa8] sm:$0xff]
    %v1312 = vld [vmem:[#allocation8 + $0xb0] sm:$0xff]
    %v1313 = vld [vmem:[#allocation8 + $0xb8] sm:$0xff]
    %v1314 = vld [vmem:[#allocation8 + $0xc0] sm:$0xff]
    %v1315 = vld [vmem:[#allocation8 + $0xc8] sm:$0xff]
    %v1316 = vld [vmem:[#allocation8 + $0xd0] sm:$0xff]
    %v1317 = vld [vmem:[#allocation8 + $0xd8] sm:$0xff]
    %v1318 = vld [vmem:[#allocation8 + $0xe0] sm:$0xff]
    %v1319 = vld [vmem:[#allocation8 + $0xe8] sm:$0xff]
    %v1320 = vld [vmem:[#allocation8 + $0xf0] sm:$0xff]
    %v1321 = vld [vmem:[#allocation8 + $0xf8] sm:$0xff]
    %v1322 = vpack.c.bf16 %v1289, %v1288
    %v1323 = vld [vmem:[%s13] sm:$0xf]
    %v1325 = vlaneseq
    %v1326 = vshrl.u32 %v1325, 7
    %v1327 = vsub.s32 0, %v1326
    %v1328 = vrot.slane %v1323, %v1327
    %v1329 = vlaneseq
    %v1330 = vshrl.u32 %v1329, 7
    %v1331 = vsub.s32 1, %v1330
    %v1332 = vrot.slane %v1323, %v1331
    %v1333 = vlaneseq
    %v1334 = vshrl.u32 %v1333, 7
    %v1335 = vsub.s32 2, %v1334
    %v1336 = vrot.slane %v1323, %v1335
    %v1337 = vlaneseq
    %v1338 = vshrl.u32 %v1337, 7
    %v1339 = vsub.s32 3, %v1338
    %v1340 = vrot.slane %v1323, %v1339
    %v1377 = vunpack.c.l.b16 %v1290
    %v1378 = vunpack.c.h.b16 %v1290
    %v1379 = vunpack.c.l.b16 %v1291
    %v1380 = vunpack.c.h.b16 %v1291
    %v1381 = vunpack.c.l.b16 %v1292
    %v1382 = vunpack.c.h.b16 %v1292
    %v1383 = vunpack.c.l.b16 %v1293
    %v1384 = vunpack.c.h.b16 %v1293
    %v1385 = vunpack.c.l.b16 %v1294
    %v1386 = vunpack.c.h.b16 %v1294
    %v1387 = vunpack.c.l.b16 %v1295
    %v1388 = vunpack.c.h.b16 %v1295
    %v1389 = vunpack.c.l.b16 %v1296
    %v1390 = vunpack.c.h.b16 %v1296
    %v1391 = vunpack.c.l.b16 %v1297
    %v1392 = vunpack.c.h.b16 %v1297
    %v1393 = vunpack.c.l.b16 %v1298
    %v1394 = vunpack.c.h.b16 %v1298
    %v1395 = vunpack.c.l.b16 %v1299
    %v1396 = vunpack.c.h.b16 %v1299
    %v1397 = vunpack.c.l.b16 %v1300
    %v1398 = vunpack.c.h.b16 %v1300
    %v1399 = vunpack.c.l.b16 %v1301
    %v1400 = vunpack.c.h.b16 %v1301
    %v1401 = vunpack.c.l.b16 %v1302
    %v1402 = vunpack.c.h.b16 %v1302
    %v1403 = vunpack.c.l.b16 %v1303
    %v1404 = vunpack.c.h.b16 %v1303
    %v1405 = vunpack.c.l.b16 %v1304
    %v1406 = vunpack.c.h.b16 %v1304
    %v1407 = vunpack.c.l.b16 %v1305
    %v1408 = vunpack.c.h.b16 %v1305
    %v1409 = vunpack.c.l.b16 %v1306
    %v1410 = vunpack.c.h.b16 %v1306
    %v1411 = vunpack.c.l.b16 %v1307
    %v1412 = vunpack.c.h.b16 %v1307
    %v1413 = vunpack.c.l.b16 %v1308
    %v1414 = vunpack.c.h.b16 %v1308
    %v1415 = vunpack.c.l.b16 %v1309
    %v1416 = vunpack.c.h.b16 %v1309
    %v1417 = vunpack.c.l.b16 %v1310
    %v1418 = vunpack.c.h.b16 %v1310
    %v1419 = vunpack.c.l.b16 %v1311
    %v1420 = vunpack.c.h.b16 %v1311
    %v1421 = vunpack.c.l.b16 %v1312
    %v1422 = vunpack.c.h.b16 %v1312
    %v1423 = vunpack.c.l.b16 %v1313
    %v1424 = vunpack.c.h.b16 %v1313
    %v1425 = vunpack.c.l.b16 %v1314
    %v1426 = vunpack.c.h.b16 %v1314
    %v1427 = vunpack.c.l.b16 %v1315
    %v1428 = vunpack.c.h.b16 %v1315
    %v1429 = vunpack.c.l.b16 %v1316
    %v1430 = vunpack.c.h.b16 %v1316
    %v1431 = vunpack.c.l.b16 %v1317
    %v1432 = vunpack.c.h.b16 %v1317
    %v1433 = vunpack.c.l.b16 %v1318
    %v1434 = vunpack.c.h.b16 %v1318
    %v1435 = vunpack.c.l.b16 %v1319
    %v1436 = vunpack.c.h.b16 %v1319
    %v1437 = vunpack.c.l.b16 %v1320
    %v1438 = vunpack.c.h.b16 %v1320
    %v1439 = vunpack.c.l.b16 %v1321
    %v1440 = vunpack.c.h.b16 %v1321
    %v1441 = vpack.c.b16 %v1381, %v1377
    %v1442 = vpack.c.b16 %v1382, %v1378
    %v1443 = vpack.c.b16 %v1383, %v1379
    %v1444 = vpack.c.b16 %v1384, %v1380
    %v1445 = vpack.c.b16 %v1389, %v1385
    %v1446 = vpack.c.b16 %v1390, %v1386
    %v1447 = vpack.c.b16 %v1391, %v1387
    %v1448 = vpack.c.b16 %v1392, %v1388
    %v1449 = vpack.c.b16 %v1397, %v1393
    %v1450 = vpack.c.b16 %v1398, %v1394
    %v1451 = vpack.c.b16 %v1399, %v1395
    %v1452 = vpack.c.b16 %v1400, %v1396
    %v1453 = vpack.c.b16 %v1405, %v1401
    %v1454 = vpack.c.b16 %v1406, %v1402
    %v1455 = vpack.c.b16 %v1407, %v1403
    %v1456 = vpack.c.b16 %v1408, %v1404
    %v1457 = vpack.c.b16 %v1413, %v1409
    %v1458 = vpack.c.b16 %v1414, %v1410
    %v1459 = vpack.c.b16 %v1415, %v1411
    %v1460 = vpack.c.b16 %v1416, %v1412
    %v1461 = vpack.c.b16 %v1421, %v1417
    %v1462 = vpack.c.b16 %v1422, %v1418
    %v1463 = vpack.c.b16 %v1423, %v1419
    %v1464 = vpack.c.b16 %v1424, %v1420
    %v1465 = vpack.c.b16 %v1429, %v1425
    %v1466 = vpack.c.b16 %v1430, %v1426
    %v1467 = vpack.c.b16 %v1431, %v1427
    %v1468 = vpack.c.b16 %v1432, %v1428
    %v1469 = vpack.c.b16 %v1437, %v1433
    %v1470 = vpack.c.b16 %v1438, %v1434
    %v1471 = vpack.c.b16 %v1439, %v1435
    %v1472 = vpack.c.b16 %v1440, %v1436
    %1505 = vmatprep.subr.bf16.mxu0 %v1442
    %1506 = vmatpush1.bf16.msra.mxu0 %v1441
    %1507 = vmatprep.subr.bf16.mxu0 %v1446
    %1508 = vmatpush1.bf16.msra.mxu0 %v1445
    %1509 = vmatprep.subr.bf16.mxu0 %v1450
    %1510 = vmatpush1.bf16.msra.mxu0 %v1449
    %1511 = vmatprep.subr.bf16.mxu0 %v1454
    %1512 = vmatpush1.bf16.msra.mxu0 %v1453
    %1513 = vmatprep.subr.bf16.mxu0 %v1458
    %1514 = vmatpush1.bf16.msra.mxu0 %v1457
    %1515 = vmatprep.subr.bf16.mxu0 %v1462
    %1516 = vmatpush1.bf16.msra.mxu0 %v1461
    %1517 = vmatprep.subr.bf16.mxu0 %v1466
    %1518 = vmatpush1.bf16.msra.mxu0 %v1465
    %1519 = vmatprep.subr.bf16.mxu0 %v1470
    %1520 = vmatpush1.bf16.msra.mxu0 %v1469
    %1521 = vmatprep.subr.bf16.mxu0 0
    %1522 = vmatpush1.bf16.msra.mxu0 0
    %1523 = vmatprep.subr.bf16.mxu0 0
    %1524 = vmatpush1.bf16.msra.mxu0 0
    %1525 = vmatprep.subr.bf16.mxu0 0
    %1526 = vmatpush1.bf16.msra.mxu0 0
    %1527 = vmatprep.subr.bf16.mxu0 0
    %1528 = vmatpush1.bf16.msra.mxu0 0
    %1529 = vmatprep.subr.bf16.mxu0 0
    %1530 = vmatpush1.bf16.msra.mxu0 0
    %1531 = vmatprep.subr.bf16.mxu0 0
    %1532 = vmatpush1.bf16.msra.mxu0 0
    %1533 = vmatprep.subr.bf16.mxu0 0
    %1534 = vmatpush1.bf16.msra.mxu0 0
    %1535 = vmatprep.subr.bf16.mxu0 0
    %1536 = vmatpush1.bf16.msra.mxu0 0
    %1537 = vmatprep.mubr.bf16.mxu0 0
    %1538 = vmatmul.mubr.bf16.gmra.mrb[0].mxu0 %v1322
    %v1539 = vpop.f32.mrb[0].mxu0
    %v1540 = vadd.f32 %v1328, %v1539
    %v1541 = vpop.f32.mrb[0].mxu0
    %v1542 = vadd.f32 %v1332, %v1541
    %v1543 = vpop.f32.mrb[0].mxu0
    %v1544 = vadd.f32 %v1328, %v1543
    %v1545 = vpop.f32.mrb[0].mxu0
    %v1546 = vadd.f32 %v1332, %v1545
    %1547 = vdwg.mxu0
    %1548 = vmatprep.subr.bf16.mxu0 %v1444
    %1549 = vmatpush1.bf16.msra.mxu0 %v1443
    %1550 = vmatprep.subr.bf16.mxu0 %v1448
    %1551 = vmatpush1.bf16.msra.mxu0 %v1447
    %1552 = vmatprep.subr.bf16.mxu0 %v1452
    %1553 = vmatpush1.bf16.msra.mxu0 %v1451
    %1554 = vmatprep.subr.bf16.mxu0 %v1456
    %1555 = vmatpush1.bf16.msra.mxu0 %v1455
    %1556 = vmatprep.subr.bf16.mxu0 %v1460
    %1557 = vmatpush1.bf16.msra.mxu0 %v1459
    %1558 = vmatprep.subr.bf16.mxu0 %v1464
    %1559 = vmatpush1.bf16.msra.mxu0 %v1463
    %1560 = vmatprep.subr.bf16.mxu0 %v1468
    %1561 = vmatpush1.bf16.msra.mxu0 %v1467
    %1562 = vmatprep.subr.bf16.mxu0 %v1472
    %1563 = vmatpush1.bf16.msra.mxu0 %v1471
    %1564 = vmatprep.subr.bf16.mxu0 0
    %1565 = vmatpush1.bf16.msra.mxu0 0
    %1566 = vmatprep.subr.bf16.mxu0 0
    %1567 = vmatpush1.bf16.msra.mxu0 0
    %1568 = vmatprep.subr.bf16.mxu0 0
    %1569 = vmatpush1.bf16.msra.mxu0 0
    %1570 = vmatprep.subr.bf16.mxu0 0
    %1571 = vmatpush1.bf16.msra.mxu0 0
    %1572 = vmatprep.subr.bf16.mxu0 0
    %1573 = vmatpush1.bf16.msra.mxu0 0
    %1574 = vmatprep.subr.bf16.mxu0 0
    %1575 = vmatpush1.bf16.msra.mxu0 0
    %1576 = vmatprep.subr.bf16.mxu0 0
    %1577 = vmatpush1.bf16.msra.mxu0 0
    %1578 = vmatprep.subr.bf16.mxu0 0
    %1579 = vmatpush1.bf16.msra.mxu0 0
    %1580 = vmatprep.mubr.bf16.mxu0 0
    %1581 = vmatmul.mubr.bf16.gmra.mrb[0].mxu0 %v1322
    %v1582 = vpop.f32.mrb[0].mxu0
    %v1583 = vadd.f32 %v1336, %v1582
    %v1584 = vpop.f32.mrb[0].mxu0
    %v1585 = vadd.f32 %v1340, %v1584
    %v1586 = vpop.f32.mrb[0].mxu0
    %v1587 = vadd.f32 %v1336, %v1586
    %v1588 = vpop.f32.mrb[0].mxu0
    %v1589 = vadd.f32 %v1340, %v1588
    %1590 = vdwg.mxu0
    %v1591 = vmul.f32 %v1540, 0.5
    %v1592 = vmul.f32 %v1542, 0.5
    %v1593 = vmul.f32 %v1583, 0.5
    %v1594 = vmul.f32 %v1585, 0.5
    %v1595 = vmul.f32 %v1544, 0.5
    %v1596 = vmul.f32 %v1546, 0.5
    %v1597 = vmul.f32 %v1587, 0.5
    %v1598 = vmul.f32 %v1589, 0.5
    %v1599 = vmul.f32 %v1540, 0.044715
    %v1600 = vmul.f32 %v1542, 0.044715
    %v1601 = vmul.f32 %v1583, 0.044715
    %v1602 = vmul.f32 %v1585, 0.044715
    %v1603 = vmul.f32 %v1544, 0.044715
    %v1604 = vmul.f32 %v1546, 0.044715
    %v1605 = vmul.f32 %v1587, 0.044715
    %v1606 = vmul.f32 %v1589, 0.044715
    %v1607 = vmul.f32 %v1599, %v1540
    %v1608 = vmul.f32 %v1600, %v1542
    %v1609 = vmul.f32 %v1601, %v1583
    %v1610 = vmul.f32 %v1602, %v1585
    %v1611 = vmul.f32 %v1603, %v1544
    %v1612 = vmul.f32 %v1604, %v1546
    %v1613 = vmul.f32 %v1605, %v1587
    %v1614 = vmul.f32 %v1606, %v1589
    %v1615 = vmul.f32 %v1607, %v1540
    %v1616 = vmul.f32 %v1608, %v1542
    %v1617 = vmul.f32 %v1609, %v1583
    %v1618 = vmul.f32 %v1610, %v1585
    %v1619 = vmul.f32 %v1611, %v1544
    %v1620 = vmul.f32 %v1612, %v1546
    %v1621 = vmul.f32 %v1613, %v1587
    %v1622 = vmul.f32 %v1614, %v1589
    %v1623 = vadd.f32 %v1540, %v1615
    %v1624 = vadd.f32 %v1542, %v1616
    %v1625 = vadd.f32 %v1583, %v1617
    %v1626 = vadd.f32 %v1585, %v1618
    %v1627 = vadd.f32 %v1544, %v1619
    %v1628 = vadd.f32 %v1546, %v1620
    %v1629 = vadd.f32 %v1587, %v1621
    %v1630 = vadd.f32 %v1589, %v1622
    %v1631 = vmul.f32 %v1623, 0.7978846
    %v1632 = vmul.f32 %v1624, 0.7978846
    %v1633 = vmul.f32 %v1625, 0.7978846
    %v1634 = vmul.f32 %v1626, 0.7978846
    %v1635 = vmul.f32 %v1627, 0.7978846
    %v1636 = vmul.f32 %v1628, 0.7978846
    %v1637 = vmul.f32 %v1629, 0.7978846
    %v1638 = vmul.f32 %v1630, 0.7978846
    %v1639 = vtanh.pop %v1631
    %v1640 = vtanh.pop %v1632
    %v1641 = vtanh.pop %v1633
    %v1642 = vtanh.pop %v1634
    %v1643 = vtanh.pop %v1635
    %v1644 = vtanh.pop %v1636
    %v1645 = vtanh.pop %v1637
    %v1646 = vtanh.pop %v1638
    %v1647 = vadd.f32 %v1639, 1.0
    %v1648 = vadd.f32 %v1640, 1.0
    %v1649 = vadd.f32 %v1641, 1.0
    %v1650 = vadd.f32 %v1642, 1.0
    %v1651 = vadd.f32 %v1643, 1.0
    %v1652 = vadd.f32 %v1644, 1.0
    %v1653 = vadd.f32 %v1645, 1.0
    %v1654 = vadd.f32 %v1646, 1.0
    %v1655 = vmul.f32 %v1591, %v1647
    %v1656 = vmul.f32 %v1592, %v1648
    %v1657 = vmul.f32 %v1593, %v1649
    %v1658 = vmul.f32 %v1594, %v1650
    %v1659 = vmul.f32 %v1595, %v1651
    %v1660 = vmul.f32 %v1596, %v1652
    %v1661 = vmul.f32 %v1597, %v1653
    %v1662 = vmul.f32 %v1598, %v1654
    %v1663 = vld [vmem:[#allocation9] sm:$0xf]
    %v1664 = vld [vmem:[#allocation9 + $0x4] sm:$0xf]
    %v1665 = vld [vmem:[#allocation9 + $0x8] sm:$0xf]
    %v1666 = vld [vmem:[#allocation9 + $0xc] sm:$0xf]
    %v1667 = vld [vmem:[#allocation9 + $0x10] sm:$0xf]
    %v1668 = vld [vmem:[#allocation9 + $0x14] sm:$0xf]
    %v1669 = vld [vmem:[#allocation9 + $0x18] sm:$0xf]
    %v1670 = vld [vmem:[#allocation9 + $0x1c] sm:$0xf]
    %v1671 = vld [vmem:[#allocation9 + $0x20] sm:$0xf]
    %v1672 = vld [vmem:[#allocation9 + $0x24] sm:$0xf]
    %v1673 = vld [vmem:[#allocation9 + $0x28] sm:$0xf]
    %v1674 = vld [vmem:[#allocation9 + $0x2c] sm:$0xf]
    %v1675 = vld [vmem:[#allocation9 + $0x30] sm:$0xf]
    %v1676 = vld [vmem:[#allocation9 + $0x34] sm:$0xf]
    %v1677 = vld [vmem:[#allocation9 + $0x38] sm:$0xf]
    %v1678 = vld [vmem:[#allocation9 + $0x3c] sm:$0xf]
    %v1679 = vld [vmem:[#allocation9 + $0x40] sm:$0xf]
    %v1680 = vld [vmem:[#allocation9 + $0x44] sm:$0xf]
    %v1681 = vld [vmem:[#allocation9 + $0x48] sm:$0xf]
    %v1682 = vld [vmem:[#allocation9 + $0x4c] sm:$0xf]
    %v1683 = vld [vmem:[#allocation9 + $0x50] sm:$0xf]
    %v1684 = vld [vmem:[#allocation9 + $0x54] sm:$0xf]
    %v1685 = vld [vmem:[#allocation9 + $0x58] sm:$0xf]
    %v1686 = vld [vmem:[#allocation9 + $0x5c] sm:$0xf]
    %v1687 = vld [vmem:[#allocation9 + $0x60] sm:$0xf]
    %v1688 = vld [vmem:[#allocation9 + $0x64] sm:$0xf]
    %v1689 = vld [vmem:[#allocation9 + $0x68] sm:$0xf]
    %v1690 = vld [vmem:[#allocation9 + $0x6c] sm:$0xf]
    %v1691 = vld [vmem:[#allocation9 + $0x70] sm:$0xf]
    %v1692 = vld [vmem:[#allocation9 + $0x74] sm:$0xf]
    %v1693 = vld [vmem:[#allocation9 + $0x78] sm:$0xf]
    %v1694 = vld [vmem:[#allocation9 + $0x7c] sm:$0xf]
    %v1695 = vld [vmem:[#allocation9 + $0x80] sm:$0xf]
    %v1696 = vld [vmem:[#allocation9 + $0x84] sm:$0xf]
    %v1697 = vld [vmem:[#allocation9 + $0x88] sm:$0xf]
    %v1698 = vld [vmem:[#allocation9 + $0x8c] sm:$0xf]
    %v1699 = vld [vmem:[#allocation9 + $0x90] sm:$0xf]
    %v1700 = vld [vmem:[#allocation9 + $0x94] sm:$0xf]
    %v1701 = vld [vmem:[#allocation9 + $0x98] sm:$0xf]
    %v1702 = vld [vmem:[#allocation9 + $0x9c] sm:$0xf]
    %v1703 = vld [vmem:[#allocation9 + $0xa0] sm:$0xf]
    %v1704 = vld [vmem:[#allocation9 + $0xa4] sm:$0xf]
    %v1705 = vld [vmem:[#allocation9 + $0xa8] sm:$0xf]
    %v1706 = vld [vmem:[#allocation9 + $0xac] sm:$0xf]
    %v1707 = vld [vmem:[#allocation9 + $0xb0] sm:$0xf]
    %v1708 = vld [vmem:[#allocation9 + $0xb4] sm:$0xf]
    %v1709 = vld [vmem:[#allocation9 + $0xb8] sm:$0xf]
    %v1710 = vld [vmem:[#allocation9 + $0xbc] sm:$0xf]
    %v1711 = vld [vmem:[#allocation9 + $0xc0] sm:$0xf]
    %v1712 = vld [vmem:[#allocation9 + $0xc4] sm:$0xf]
    %v1713 = vld [vmem:[#allocation9 + $0xc8] sm:$0xf]
    %v1714 = vld [vmem:[#allocation9 + $0xcc] sm:$0xf]
    %v1715 = vld [vmem:[#allocation9 + $0xd0] sm:$0xf]
    %v1716 = vld [vmem:[#allocation9 + $0xd4] sm:$0xf]
    %v1717 = vld [vmem:[#allocation9 + $0xd8] sm:$0xf]
    %v1718 = vld [vmem:[#allocation9 + $0xdc] sm:$0xf]
    %v1719 = vld [vmem:[#allocation9 + $0xe0] sm:$0xf]
    %v1720 = vld [vmem:[#allocation9 + $0xe4] sm:$0xf]
    %v1721 = vld [vmem:[#allocation9 + $0xe8] sm:$0xf]
    %v1722 = vld [vmem:[#allocation9 + $0xec] sm:$0xf]
    %v1723 = vld [vmem:[#allocation9 + $0xf0] sm:$0xf]
    %v1724 = vld [vmem:[#allocation9 + $0xf4] sm:$0xf]
    %v1725 = vld [vmem:[#allocation9 + $0xf8] sm:$0xf]
    %v1726 = vld [vmem:[#allocation9 + $0xfc] sm:$0xf]
    %v1727 = vpack.c.bf16 %v1659, %v1655
    %v1728 = vpack.c.bf16 %v1660, %v1656
    %v1729 = vpack.c.bf16 %v1661, %v1657
    %v1730 = vpack.c.bf16 %v1662, %v1658
    %v1731 = vld [vmem:[%s15] sm:$0x1]
    %v1733 = vlaneseq
    %v1734 = vshrl.u32 %v1733, 7
    %v1735 = vsub.s32 0, %v1734
    %v1736 = vrot.slane %v1731, %v1735
    %v1802 = vunpack.c.l.b16 %v1663
    %v1803 = vunpack.c.l.b16 %v1664
    %v1804 = vunpack.c.l.b16 %v1665
    %v1805 = vunpack.c.l.b16 %v1666
    %v1806 = vunpack.c.l.b16 %v1667
    %v1807 = vunpack.c.l.b16 %v1668
    %v1808 = vunpack.c.l.b16 %v1669
    %v1809 = vunpack.c.l.b16 %v1670
    %v1810 = vunpack.c.l.b16 %v1671
    %v1811 = vunpack.c.l.b16 %v1672
    %v1812 = vunpack.c.l.b16 %v1673
    %v1813 = vunpack.c.l.b16 %v1674
    %v1814 = vunpack.c.l.b16 %v1675
    %v1815 = vunpack.c.l.b16 %v1676
    %v1816 = vunpack.c.l.b16 %v1677
    %v1817 = vunpack.c.l.b16 %v1678
    %v1818 = vunpack.c.l.b16 %v1679
    %v1819 = vunpack.c.l.b16 %v1680
    %v1820 = vunpack.c.l.b16 %v1681
    %v1821 = vunpack.c.l.b16 %v1682
    %v1822 = vunpack.c.l.b16 %v1683
    %v1823 = vunpack.c.l.b16 %v1684
    %v1824 = vunpack.c.l.b16 %v1685
    %v1825 = vunpack.c.l.b16 %v1686
    %v1826 = vunpack.c.l.b16 %v1687
    %v1827 = vunpack.c.l.b16 %v1688
    %v1828 = vunpack.c.l.b16 %v1689
    %v1829 = vunpack.c.l.b16 %v1690
    %v1830 = vunpack.c.l.b16 %v1691
    %v1831 = vunpack.c.l.b16 %v1692
    %v1832 = vunpack.c.l.b16 %v1693
    %v1833 = vunpack.c.l.b16 %v1694
    %v1834 = vunpack.c.l.b16 %v1695
    %v1835 = vunpack.c.l.b16 %v1696
    %v1836 = vunpack.c.l.b16 %v1697
    %v1837 = vunpack.c.l.b16 %v1698
    %v1838 = vunpack.c.l.b16 %v1699
    %v1839 = vunpack.c.l.b16 %v1700
    %v1840 = vunpack.c.l.b16 %v1701
    %v1841 = vunpack.c.l.b16 %v1702
    %v1842 = vunpack.c.l.b16 %v1703
    %v1843 = vunpack.c.l.b16 %v1704
    %v1844 = vunpack.c.l.b16 %v1705
    %v1845 = vunpack.c.l.b16 %v1706
    %v1846 = vunpack.c.l.b16 %v1707
    %v1847 = vunpack.c.l.b16 %v1708
    %v1848 = vunpack.c.l.b16 %v1709
    %v1849 = vunpack.c.l.b16 %v1710
    %v1850 = vunpack.c.l.b16 %v1711
    %v1851 = vunpack.c.l.b16 %v1712
    %v1852 = vunpack.c.l.b16 %v1713
    %v1853 = vunpack.c.l.b16 %v1714
    %v1854 = vunpack.c.l.b16 %v1715
    %v1855 = vunpack.c.l.b16 %v1716
    %v1856 = vunpack.c.l.b16 %v1717
    %v1857 = vunpack.c.l.b16 %v1718
    %v1858 = vunpack.c.l.b16 %v1719
    %v1859 = vunpack.c.l.b16 %v1720
    %v1860 = vunpack.c.l.b16 %v1721
    %v1861 = vunpack.c.l.b16 %v1722
    %v1862 = vunpack.c.l.b16 %v1723
    %v1863 = vunpack.c.l.b16 %v1724
    %v1864 = vunpack.c.l.b16 %v1725
    %v1865 = vunpack.c.l.b16 %v1726
    %v1866 = vpack.c.b16 %v1803, %v1802
    %v1867 = vpack.c.b16 %v1805, %v1804
    %v1868 = vpack.c.b16 %v1807, %v1806
    %v1869 = vpack.c.b16 %v1809, %v1808
    %v1870 = vpack.c.b16 %v1811, %v1810
    %v1871 = vpack.c.b16 %v1813, %v1812
    %v1872 = vpack.c.b16 %v1815, %v1814
    %v1873 = vpack.c.b16 %v1817, %v1816
    %v1874 = vpack.c.b16 %v1819, %v1818
    %v1875 = vpack.c.b16 %v1821, %v1820
    %v1876 = vpack.c.b16 %v1823, %v1822
    %v1877 = vpack.c.b16 %v1825, %v1824
    %v1878 = vpack.c.b16 %v1827, %v1826
    %v1879 = vpack.c.b16 %v1829, %v1828
    %v1880 = vpack.c.b16 %v1831, %v1830
    %v1881 = vpack.c.b16 %v1833, %v1832
    %v1882 = vpack.c.b16 %v1835, %v1834
    %v1883 = vpack.c.b16 %v1837, %v1836
    %v1884 = vpack.c.b16 %v1839, %v1838
    %v1885 = vpack.c.b16 %v1841, %v1840
    %v1886 = vpack.c.b16 %v1843, %v1842
    %v1887 = vpack.c.b16 %v1845, %v1844
    %v1888 = vpack.c.b16 %v1847, %v1846
    %v1889 = vpack.c.b16 %v1849, %v1848
    %v1890 = vpack.c.b16 %v1851, %v1850
    %v1891 = vpack.c.b16 %v1853, %v1852
    %v1892 = vpack.c.b16 %v1855, %v1854
    %v1893 = vpack.c.b16 %v1857, %v1856
    %v1894 = vpack.c.b16 %v1859, %v1858
    %v1895 = vpack.c.b16 %v1861, %v1860
    %v1896 = vpack.c.b16 %v1863, %v1862
    %v1897 = vpack.c.b16 %v1865, %v1864
    %1930 = vmatprep.subr.bf16.mxu0 0
    %1931 = vmatpush1.bf16.msra.mxu0 %v1866
    %1932 = vmatprep.subr.bf16.mxu0 0
    %1933 = vmatpush1.bf16.msra.mxu0 %v1867
    %1934 = vmatprep.subr.bf16.mxu0 0
    %1935 = vmatpush1.bf16.msra.mxu0 %v1868
    %1936 = vmatprep.subr.bf16.mxu0 0
    %1937 = vmatpush1.bf16.msra.mxu0 %v1869
    %1938 = vmatprep.subr.bf16.mxu0 0
    %1939 = vmatpush1.bf16.msra.mxu0 %v1870
    %1940 = vmatprep.subr.bf16.mxu0 0
    %1941 = vmatpush1.bf16.msra.mxu0 %v1871
    %1942 = vmatprep.subr.bf16.mxu0 0
    %1943 = vmatpush1.bf16.msra.mxu0 %v1872
    %1944 = vmatprep.subr.bf16.mxu0 0
    %1945 = vmatpush1.bf16.msra.mxu0 %v1873
    %1946 = vmatprep.subr.bf16.mxu0 0
    %1947 = vmatpush1.bf16.msra.mxu0 %v1874
    %1948 = vmatprep.subr.bf16.mxu0 0
    %1949 = vmatpush1.bf16.msra.mxu0 %v1875
    %1950 = vmatprep.subr.bf16.mxu0 0
    %1951 = vmatpush1.bf16.msra.mxu0 %v1876
    %1952 = vmatprep.subr.bf16.mxu0 0
    %1953 = vmatpush1.bf16.msra.mxu0 %v1877
    %1954 = vmatprep.subr.bf16.mxu0 0
    %1955 = vmatpush1.bf16.msra.mxu0 %v1878
    %1956 = vmatprep.subr.bf16.mxu0 0
    %1957 = vmatpush1.bf16.msra.mxu0 %v1879
    %1958 = vmatprep.subr.bf16.mxu0 0
    %1959 = vmatpush1.bf16.msra.mxu0 %v1880
    %1960 = vmatprep.subr.bf16.mxu0 0
    %1961 = vmatpush1.bf16.msra.mxu0 %v1881
    %1962 = vmatprep.mubr.bf16.mxu0 %v1728
    %1963 = vmatmul.mubr.bf16.gmra.mrb[0].mxu0 %v1727
    %v1964 = vpop.f32.mrb[0].mxu0
    %v1965 = vadd.f32 %v1736, %v1964
    %v1966 = vpop.f32.mrb[0].mxu0
    %v1967 = vpop.f32.mrb[0].mxu0
    %v1968 = vadd.f32 %v1736, %v1967
    %v1969 = vpop.f32.mrb[0].mxu0
    %1970 = vdwg.mxu0
    %1971 = vmatprep.subr.bf16.mxu0 0
    %1972 = vmatpush1.bf16.msra.mxu0 %v1882
    %1973 = vmatprep.subr.bf16.mxu0 0
    %1974 = vmatpush1.bf16.msra.mxu0 %v1883
    %1975 = vmatprep.subr.bf16.mxu0 0
    %1976 = vmatpush1.bf16.msra.mxu0 %v1884
    %1977 = vmatprep.subr.bf16.mxu0 0
    %1978 = vmatpush1.bf16.msra.mxu0 %v1885
    %1979 = vmatprep.subr.bf16.mxu0 0
    %1980 = vmatpush1.bf16.msra.mxu0 %v1886
    %1981 = vmatprep.subr.bf16.mxu0 0
    %1982 = vmatpush1.bf16.msra.mxu0 %v1887
    %1983 = vmatprep.subr.bf16.mxu0 0
    %1984 = vmatpush1.bf16.msra.mxu0 %v1888
    %1985 = vmatprep.subr.bf16.mxu0 0
    %1986 = vmatpush1.bf16.msra.mxu0 %v1889
    %1987 = vmatprep.subr.bf16.mxu0 0
    %1988 = vmatpush1.bf16.msra.mxu0 %v1890
    %1989 = vmatprep.subr.bf16.mxu0 0
    %1990 = vmatpush1.bf16.msra.mxu0 %v1891
    %1991 = vmatprep.subr.bf16.mxu0 0
    %1992 = vmatpush1.bf16.msra.mxu0 %v1892
    %1993 = vmatprep.subr.bf16.mxu0 0
    %1994 = vmatpush1.bf16.msra.mxu0 %v1893
    %1995 = vmatprep.subr.bf16.mxu0 0
    %1996 = vmatpush1.bf16.msra.mxu0 %v1894
    %1997 = vmatprep.subr.bf16.mxu0 0
    %1998 = vmatpush1.bf16.msra.mxu0 %v1895
    %1999 = vmatprep.subr.bf16.mxu0 0
    %2000 = vmatpush1.bf16.msra.mxu0 %v1896
    %2001 = vmatprep.subr.bf16.mxu0 0
    %2002 = vmatpush1.bf16.msra.mxu0 %v1897
    %2003 = vmatprep.mubr.bf16.mxu0 %v1730
    %2004 = vmatmul.mubr.bf16.gmra.mrb[0].mxu0 %v1729
    %v2005 = vpop.f32.mrb[0].mxu0
    %v2006 = vadd.f32 %v1965, %v2005
    %v2007 = vpop.f32.mrb[0].mxu0
    %v2008 = vpop.f32.mrb[0].mxu0
    %v2009 = vadd.f32 %v1968, %v2008
    %v2010 = vpop.f32.mrb[0].mxu0
    %2011 = vdwg.mxu0
    %v2012 = vadd.f32 %v1288, %v2006
    %v2013 = vadd.f32 %v1289, %v2009
    %v2014 = vld [vmem:[%s16] sm:$0x1]
    %v2015 = vld [vmem:[%s17] sm:$0x1]
    %2016 = vadd.xlane.f32.xlu0 %v2012
    %v2017 = vpop.xlane.xlu0 %2016
    %2018 = vadd.xlane.f32.xlu0 %v2013
    %v2019 = vpop.xlane.xlu0 %2018
    %v2020 = vmul.f32 %v2017, %v152
    %v2021 = vmul.f32 %v2019, %v152
    %v2022 = vsub.f32 %v2012, %v2020
    %v2023 = vsub.f32 %v2013, %v2021
    %v2024 = vmul.f32 %v2022, %v2022
    %v2025 = vmul.f32 %v2023, %v2023
    %2026 = vadd.xlane.f32.xlu0 %v2024
    %v2027 = vpop.xlane.xlu0 %2026
    %2028 = vadd.xlane.f32.xlu0 %v2025
    %v2029 = vpop.xlane.xlu0 %2028
    %v2030 = vmul.f32 %v2027, %v152
    %v2031 = vmul.f32 %v2029, %v152
    %v2032 = vadd.f32 %v2030, 1e-12
    %v2033 = vadd.f32 %v2031, 1e-12
    %v2034 = vrsqrt.pop %v2032
    %v2035 = vrsqrt.pop %v2033
    %v2036 = vmul.f32 %v2022, %v2034
    %v2037 = vmul.f32 %v2023, %v2035
    %v2039 = vlaneseq
    %v2040 = vshrl.u32 %v2039, 7
    %v2041 = vsub.s32 0, %v2040
    %v2042 = vrot.slane %v2014, %v2041
    %v2044 = vmul.f32 %v2036, %v2042
    %v2045 = vmul.f32 %v2037, %v2042
    %v2047 = vlaneseq
    %v2048 = vshrl.u32 %v2047, 7
    %v2049 = vsub.s32 0, %v2048
    %v2050 = vrot.slane %v2015, %v2049
    %v2052 = vadd.f32 %v2044, %v2050
    %v2053 = vadd.f32 %v2045, %v2050
    %s2054 = scalar_lea.vmem [#allocation3], 384
    %v2055 = vld [vmem:[%s2054] sm:$0xff]
    %v2056 = vld [vmem:[%s2054 + $0x8] sm:$0xff]
    %v2057 = vld [vmem:[%s2054 + $0x10] sm:$0xff]
    %v2058 = vld [vmem:[%s2054 + $0x18] sm:$0xff]
    %v2059 = vld [vmem:[%s2054 + $0x20] sm:$0xff]
    %v2060 = vld [vmem:[%s2054 + $0x28] sm:$0xff]
    %v2061 = vld [vmem:[%s2054 + $0x30] sm:$0xff]
    %v2062 = vld [vmem:[%s2054 + $0x38] sm:$0xff]
    %v2063 = vld [vmem:[%s2054 + $0x40] sm:$0xff]
    %v2064 = vld [vmem:[%s2054 + $0x48] sm:$0xff]
    %v2065 = vld [vmem:[%s2054 + $0x50] sm:$0xff]
    %v2066 = vld [vmem:[%s2054 + $0x58] sm:$0xff]
    %v2067 = vld [vmem:[%s2054 + $0x60] sm:$0xff]
    %v2068 = vld [vmem:[%s2054 + $0x68] sm:$0xff]
    %v2069 = vld [vmem:[%s2054 + $0x70] sm:$0xff]
    %v2070 = vld [vmem:[%s2054 + $0x78] sm:$0xff]
    %v2071 = vld [vmem:[%s2054 + $0x80] sm:$0xff]
    %v2072 = vld [vmem:[%s2054 + $0x88] sm:$0xff]
    %v2073 = vld [vmem:[%s2054 + $0x90] sm:$0xff]
    %v2074 = vld [vmem:[%s2054 + $0x98] sm:$0xff]
    %v2075 = vld [vmem:[%s2054 + $0xa0] sm:$0xff]
    %v2076 = vld [vmem:[%s2054 + $0xa8] sm:$0xff]
    %v2077 = vld [vmem:[%s2054 + $0xb0] sm:$0xff]
    %v2078 = vld [vmem:[%s2054 + $0xb8] sm:$0xff]
    %v2079 = vld [vmem:[%s2054 + $0xc0] sm:$0xff]
    %v2080 = vld [vmem:[%s2054 + $0xc8] sm:$0xff]
    %v2081 = vld [vmem:[%s2054 + $0xd0] sm:$0xff]
    %v2082 = vld [vmem:[%s2054 + $0xd8] sm:$0xff]
    %v2083 = vld [vmem:[%s2054 + $0xe0] sm:$0xff]
    %v2084 = vld [vmem:[%s2054 + $0xe8] sm:$0xff]
    %v2085 = vld [vmem:[%s2054 + $0xf0] sm:$0xff]
    %v2086 = vld [vmem:[%s2054 + $0xf8] sm:$0xff]
    %v2087 = vld [vmem:[%s2054 + $0x100] sm:$0xff]
    %v2088 = vld [vmem:[%s2054 + $0x108] sm:$0xff]
    %v2089 = vld [vmem:[%s2054 + $0x110] sm:$0xff]
    %v2090 = vld [vmem:[%s2054 + $0x118] sm:$0xff]
    %v2091 = vld [vmem:[%s2054 + $0x120] sm:$0xff]
    %v2092 = vld [vmem:[%s2054 + $0x128] sm:$0xff]
    %v2093 = vld [vmem:[%s2054 + $0x130] sm:$0xff]
    %v2094 = vld [vmem:[%s2054 + $0x138] sm:$0xff]
    %v2095 = vld [vmem:[%s2054 + $0x140] sm:$0xff]
    %v2096 = vld [vmem:[%s2054 + $0x148] sm:$0xff]
    %v2097 = vld [vmem:[%s2054 + $0x150] sm:$0xff]
    %v2098 = vld [vmem:[%s2054 + $0x158] sm:$0xff]
    %v2099 = vld [vmem:[%s2054 + $0x160] sm:$0xff]
    %v2100 = vld [vmem:[%s2054 + $0x168] sm:$0xff]
    %v2101 = vld [vmem:[%s2054 + $0x170] sm:$0xff]
    %v2102 = vld [vmem:[%s2054 + $0x178] sm:$0xff]
    %v2103 = vpack.c.bf16 %v2053, %v2052
    %s2104 = scalar_lea.vmem %s7, 6
    %v2105 = vld [vmem:[%s2104] sm:$0x3f]
    %v2107 = vlaneseq
    %v2108 = vshrl.u32 %v2107, 7
    %v2109 = vsub.s32 0, %v2108
    %v2110 = vrot.slane %v2105, %v2109
    %v2111 = vlaneseq
    %v2112 = vshrl.u32 %v2111, 7
    %v2113 = vsub.s32 1, %v2112
    %v2114 = vrot.slane %v2105, %v2113
    %v2115 = vlaneseq
    %v2116 = vshrl.u32 %v2115, 7
    %v2117 = vsub.s32 2, %v2116
    %v2118 = vrot.slane %v2105, %v2117
    %v2119 = vlaneseq
    %v2120 = vshrl.u32 %v2119, 7
    %v2121 = vsub.s32 3, %v2120
    %v2122 = vrot.slane %v2105, %v2121
    %v2123 = vlaneseq
    %v2124 = vshrl.u32 %v2123, 7
    %v2125 = vsub.s32 4, %v2124
    %v2126 = vrot.slane %v2105, %v2125
    %v2127 = vlaneseq
    %v2128 = vshrl.u32 %v2127, 7
    %v2129 = vsub.s32 5, %v2128
    %v2130 = vrot.slane %v2105, %v2129
    %v2185 = vunpack.c.l.b16 %v2055
    %v2186 = vunpack.c.h.b16 %v2055
    %v2187 = vunpack.c.l.b16 %v2056
    %v2188 = vunpack.c.h.b16 %v2056
    %v2189 = vunpack.c.l.b16 %v2057
    %v2190 = vunpack.c.h.b16 %v2057
    %v2191 = vunpack.c.l.b16 %v2058
    %v2192 = vunpack.c.h.b16 %v2058
    %v2193 = vunpack.c.l.b16 %v2059
    %v2194 = vunpack.c.h.b16 %v2059
    %v2195 = vunpack.c.l.b16 %v2060
    %v2196 = vunpack.c.h.b16 %v2060
    %v2197 = vunpack.c.l.b16 %v2061
    %v2198 = vunpack.c.h.b16 %v2061
    %v2199 = vunpack.c.l.b16 %v2062
    %v2200 = vunpack.c.h.b16 %v2062
    %v2201 = vunpack.c.l.b16 %v2063
    %v2202 = vunpack.c.h.b16 %v2063
    %v2203 = vunpack.c.l.b16 %v2064
    %v2204 = vunpack.c.h.b16 %v2064
    %v2205 = vunpack.c.l.b16 %v2065
    %v2206 = vunpack.c.h.b16 %v2065
    %v2207 = vunpack.c.l.b16 %v2066
    %v2208 = vunpack.c.h.b16 %v2066
    %v2209 = vunpack.c.l.b16 %v2067
    %v2210 = vunpack.c.h.b16 %v2067
    %v2211 = vunpack.c.l.b16 %v2068
    %v2212 = vunpack.c.h.b16 %v2068
    %v2213 = vunpack.c.l.b16 %v2069
    %v2214 = vunpack.c.h.b16 %v2069
    %v2215 = vunpack.c.l.b16 %v2070
    %v2216 = vunpack.c.h.b16 %v2070
    %v2217 = vunpack.c.l.b16 %v2071
    %v2218 = vunpack.c.h.b16 %v2071
    %v2219 = vunpack.c.l.b16 %v2072
    %v2220 = vunpack.c.h.b16 %v2072
    %v2221 = vunpack.c.l.b16 %v2073
    %v2222 = vunpack.c.h.b16 %v2073
    %v2223 = vunpack.c.l.b16 %v2074
    %v2224 = vunpack.c.h.b16 %v2074
    %v2225 = vunpack.c.l.b16 %v2075
    %v2226 = vunpack.c.h.b16 %v2075
    %v2227 = vunpack.c.l.b16 %v2076
    %v2228 = vunpack.c.h.b16 %v2076
    %v2229 = vunpack.c.l.b16 %v2077
    %v2230 = vunpack.c.h.b16 %v2077
    %v2231 = vunpack.c.l.b16 %v2078
    %v2232 = vunpack.c.h.b16 %v2078
    %v2233 = vunpack.c.l.b16 %v2079
    %v2234 = vunpack.c.h.b16 %v2079
    %v2235 = vunpack.c.l.b16 %v2080
    %v2236 = vunpack.c.h.b16 %v2080
    %v2237 = vunpack.c.l.b16 %v2081
    %v2238 = vunpack.c.h.b16 %v2081
    %v2239 = vunpack.c.l.b16 %v2082
    %v2240 = vunpack.c.h.b16 %v2082
    %v2241 = vunpack.c.l.b16 %v2083
    %v2242 = vunpack.c.h.b16 %v2083
    %v2243 = vunpack.c.l.b16 %v2084
    %v2244 = vunpack.c.h.b16 %v2084
    %v2245 = vunpack.c.l.b16 %v2085
    %v2246 = vunpack.c.h.b16 %v2085
    %v2247 = vunpack.c.l.b16 %v2086
    %v2248 = vunpack.c.h.b16 %v2086
    %v2249 = vunpack.c.l.b16 %v2087
    %v2250 = vunpack.c.h.b16 %v2087
    %v2251 = vunpack.c.l.b16 %v2088
    %v2252 = vunpack.c.h.b16 %v2088
    %v2253 = vunpack.c.l.b16 %v2089
    %v2254 = vunpack.c.h.b16 %v2089
    %v2255 = vunpack.c.l.b16 %v2090
    %v2256 = vunpack.c.h.b16 %v2090
    %v2257 = vunpack.c.l.b16 %v2091
    %v2258 = vunpack.c.h.b16 %v2091
    %v2259 = vunpack.c.l.b16 %v2092
    %v2260 = vunpack.c.h.b16 %v2092
    %v2261 = vunpack.c.l.b16 %v2093
    %v2262 = vunpack.c.h.b16 %v2093
    %v2263 = vunpack.c.l.b16 %v2094
    %v2264 = vunpack.c.h.b16 %v2094
    %v2265 = vunpack.c.l.b16 %v2095
    %v2266 = vunpack.c.h.b16 %v2095
    %v2267 = vunpack.c.l.b16 %v2096
    %v2268 = vunpack.c.h.b16 %v2096
    %v2269 = vunpack.c.l.b16 %v2097
    %v2270 = vunpack.c.h.b16 %v2097
    %v2271 = vunpack.c.l.b16 %v2098
    %v2272 = vunpack.c.h.b16 %v2098
    %v2273 = vunpack.c.l.b16 %v2099
    %v2274 = vunpack.c.h.b16 %v2099
    %v2275 = vunpack.c.l.b16 %v2100
    %v2276 = vunpack.c.h.b16 %v2100
    %v2277 = vunpack.c.l.b16 %v2101
    %v2278 = vunpack.c.h.b16 %v2101
    %v2279 = vunpack.c.l.b16 %v2102
    %v2280 = vunpack.c.h.b16 %v2102
    %v2281 = vpack.c.b16 %v2191, %v2185
    %v2282 = vpack.c.b16 %v2192, %v2186
    %v2283 = vpack.c.b16 %v2193, %v2187
    %v2284 = vpack.c.b16 %v2194, %v2188
    %v2285 = vpack.c.b16 %v2195, %v2189
    %v2286 = vpack.c.b16 %v2196, %v2190
    %v2287 = vpack.c.b16 %v2203, %v2197
    %v2288 = vpack.c.b16 %v2204, %v2198
    %v2289 = vpack.c.b16 %v2205, %v2199
    %v2290 = vpack.c.b16 %v2206, %v2200
    %v2291 = vpack.c.b16 %v2207, %v2201
    %v2292 = vpack.c.b16 %v2208, %v2202
    %v2293 = vpack.c.b16 %v2215, %v2209
    %v2294 = vpack.c.b16 %v2216, %v2210
    %v2295 = vpack.c.b16 %v2217, %v2211
    %v2296 = vpack.c.b16 %v2218, %v2212
    %v2297 = vpack.c.b16 %v2219, %v2213
    %v2298 = vpack.c.b16 %v2220, %v2214
    %v2299 = vpack.c.b16 %v2227, %v2221
    %v2300 = vpack.c.b16 %v2228, %v2222
    %v2301 = vpack.c.b16 %v2229, %v2223
    %v2302 = vpack.c.b16 %v2230, %v2224
    %v2303 = vpack.c.b16 %v2231, %v2225
    %v2304 = vpack.c.b16 %v2232, %v2226
    %v2305 = vpack.c.b16 %v2239, %v2233
    %v2306 = vpack.c.b16 %v2240, %v2234
    %v2307 = vpack.c.b16 %v2241, %v2235
    %v2308 = vpack.c.b16 %v2242, %v2236
    %v2309 = vpack.c.b16 %v2243, %v2237
    %v2310 = vpack.c.b16 %v2244, %v2238
    %v2311 = vpack.c.b16 %v2251, %v2245
    %v2312 = vpack.c.b16 %v2252, %v2246
    %v2313 = vpack.c.b16 %v2253, %v2247
    %v2314 = vpack.c.b16 %v2254, %v2248
    %v2315 = vpack.c.b16 %v2255, %v2249
    %v2316 = vpack.c.b16 %v2256, %v2250
    %v2317 = vpack.c.b16 %v2263, %v2257
    %v2318 = vpack.c.b16 %v2264, %v2258
    %v2319 = vpack.c.b16 %v2265, %v2259
    %v2320 = vpack.c.b16 %v2266, %v2260
    %v2321 = vpack.c.b16 %v2267, %v2261
    %v2322 = vpack.c.b16 %v2268, %v2262
    %v2323 = vpack.c.b16 %v2275, %v2269
    %v2324 = vpack.c.b16 %v2276, %v2270
    %v2325 = vpack.c.b16 %v2277, %v2271
    %v2326 = vpack.c.b16 %v2278, %v2272
    %v2327 = vpack.c.b16 %v2279, %v2273
    %v2328 = vpack.c.b16 %v2280, %v2274
    %2377 = vmatprep.subr.bf16.mxu0 %v2282
    %2378 = vmatpush1.bf16.msra.mxu0 %v2281
    %2379 = vmatprep.subr.bf16.mxu0 %v2288
    %2380 = vmatpush1.bf16.msra.mxu0 %v2287
    %2381 = vmatprep.subr.bf16.mxu0 %v2294
    %2382 = vmatpush1.bf16.msra.mxu0 %v2293
    %2383 = vmatprep.subr.bf16.mxu0 %v2300
    %2384 = vmatpush1.bf16.msra.mxu0 %v2299
    %2385 = vmatprep.subr.bf16.mxu0 %v2306
    %2386 = vmatpush1.bf16.msra.mxu0 %v2305
    %2387 = vmatprep.subr.bf16.mxu0 %v2312
    %2388 = vmatpush1.bf16.msra.mxu0 %v2311
    %2389 = vmatprep.subr.bf16.mxu0 %v2318
    %2390 = vmatpush1.bf16.msra.mxu0 %v2317
    %2391 = vmatprep.subr.bf16.mxu0 %v2324
    %2392 = vmatpush1.bf16.msra.mxu0 %v2323
    %2393 = vmatprep.subr.bf16.mxu0 0
    %2394 = vmatpush1.bf16.msra.mxu0 0
    %2395 = vmatprep.subr.bf16.mxu0 0
    %2396 = vmatpush1.bf16.msra.mxu0 0
    %2397 = vmatprep.subr.bf16.mxu0 0
    %2398 = vmatpush1.bf16.msra.mxu0 0
    %2399 = vmatprep.subr.bf16.mxu0 0
    %2400 = vmatpush1.bf16.msra.mxu0 0
    %2401 = vmatprep.subr.bf16.mxu0 0
    %2402 = vmatpush1.bf16.msra.mxu0 0
    %2403 = vmatprep.subr.bf16.mxu0 0
    %2404 = vmatpush1.bf16.msra.mxu0 0
    %2405 = vmatprep.subr.bf16.mxu0 0
    %2406 = vmatpush1.bf16.msra.mxu0 0
    %2407 = vmatprep.subr.bf16.mxu0 0
    %2408 = vmatpush1.bf16.msra.mxu0 0
    %2409 = vmatprep.mubr.bf16.mxu0 0
    %2410 = vmatmul.mubr.bf16.gmra.mrb[0].mxu0 %v2103
    %v2411 = vpop.f32.mrb[0].mxu0
    %v2412 = vadd.f32 %v2110, %v2411
    %v2413 = vpop.f32.mrb[0].mxu0
    %v2414 = vadd.f32 %v2114, %v2413
    %v2415 = vpop.f32.mrb[0].mxu0
    %v2416 = vadd.f32 %v2110, %v2415
    %v2417 = vpop.f32.mrb[0].mxu0
    %v2418 = vadd.f32 %v2114, %v2417
    %2419 = vdwg.mxu0
    %2420 = vmatprep.subr.bf16.mxu0 %v2284
    %2421 = vmatpush1.bf16.msra.mxu0 %v2283
    %2422 = vmatprep.subr.bf16.mxu0 %v2290
    %2423 = vmatpush1.bf16.msra.mxu0 %v2289
    %2424 = vmatprep.subr.bf16.mxu0 %v2296
    %2425 = vmatpush1.bf16.msra.mxu0 %v2295
    %2426 = vmatprep.subr.bf16.mxu0 %v2302
    %2427 = vmatpush1.bf16.msra.mxu0 %v2301
    %2428 = vmatprep.subr.bf16.mxu0 %v2308
    %2429 = vmatpush1.bf16.msra.mxu0 %v2307
    %2430 = vmatprep.subr.bf16.mxu0 %v2314
    %2431 = vmatpush1.bf16.msra.mxu0 %v2313
    %2432 = vmatprep.subr.bf16.mxu0 %v2320
    %2433 = vmatpush1.bf16.msra.mxu0 %v2319
    %2434 = vmatprep.subr.bf16.mxu0 %v2326
    %2435 = vmatpush1.bf16.msra.mxu0 %v2325
    %2436 = vmatprep.subr.bf16.mxu0 0
    %2437 = vmatpush1.bf16.msra.mxu0 0
    %2438 = vmatprep.subr.bf16.mxu0 0
    %2439 = vmatpush1.bf16.msra.mxu0 0
    %2440 = vmatprep.subr.bf16.mxu0 0
    %2441 = vmatpush1.bf16.msra.mxu0 0
    %2442 = vmatprep.subr.bf16.mxu0 0
    %2443 = vmatpush1.bf16.msra.mxu0 0
    %2444 = vmatprep.subr.bf16.mxu0 0
    %2445 = vmatpush1.bf16.msra.mxu0 0
    %2446 = vmatprep.subr.bf16.mxu0 0
    %2447 = vmatpush1.bf16.msra.mxu0 0
    %2448 = vmatprep.subr.bf16.mxu0 0
    %2449 = vmatpush1.bf16.msra.mxu0 0
    %2450 = vmatprep.subr.bf16.mxu0 0
    %2451 = vmatpush1.bf16.msra.mxu0 0
    %2452 = vmatprep.mubr.bf16.mxu0 0
    %2453 = vmatmul.mubr.bf16.gmra.mrb[0].mxu0 %v2103
    %v2454 = vpop.f32.mrb[0].mxu0
    %v2455 = vadd.f32 %v2118, %v2454
    %v2456 = vpop.f32.mrb[0].mxu0
    %v2457 = vadd.f32 %v2122, %v2456
    %v2458 = vpop.f32.mrb[0].mxu0
    %v2459 = vadd.f32 %v2118, %v2458
    %v2460 = vpop.f32.mrb[0].mxu0
    %v2461 = vadd.f32 %v2122, %v2460
    %2462 = vdwg.mxu0
    %2463 = vmatprep.subr.bf16.mxu0 %v2286
    %2464 = vmatpush1.bf16.msra.mxu0 %v2285
    %2465 = vmatprep.subr.bf16.mxu0 %v2292
    %2466 = vmatpush1.bf16.msra.mxu0 %v2291
    %2467 = vmatprep.subr.bf16.mxu0 %v2298
    %2468 = vmatpush1.bf16.msra.mxu0 %v2297
    %2469 = vmatprep.subr.bf16.mxu0 %v2304
    %2470 = vmatpush1.bf16.msra.mxu0 %v2303
    %2471 = vmatprep.subr.bf16.mxu0 %v2310
    %2472 = vmatpush1.bf16.msra.mxu0 %v2309
    %2473 = vmatprep.subr.bf16.mxu0 %v2316
    %2474 = vmatpush1.bf16.msra.mxu0 %v2315
    %2475 = vmatprep.subr.bf16.mxu0 %v2322
    %2476 = vmatpush1.bf16.msra.mxu0 %v2321
    %2477 = vmatprep.subr.bf16.mxu0 %v2328
    %2478 = vmatpush1.bf16.msra.mxu0 %v2327
    %2479 = vmatprep.subr.bf16.mxu0 0
    %2480 = vmatpush1.bf16.msra.mxu0 0
    %2481 = vmatprep.subr.bf16.mxu0 0
    %2482 = vmatpush1.bf16.msra.mxu0 0
    %2483 = vmatprep.subr.bf16.mxu0 0
    %2484 = vmatpush1.bf16.msra.mxu0 0
    %2485 = vmatprep.subr.bf16.mxu0 0
    %2486 = vmatpush1.bf16.msra.mxu0 0
    %2487 = vmatprep.subr.bf16.mxu0 0
    %2488 = vmatpush1.bf16.msra.mxu0 0
    %2489 = vmatprep.subr.bf16.mxu0 0
    %2490 = vmatpush1.bf16.msra.mxu0 0
    %2491 = vmatprep.subr.bf16.mxu0 0
    %2492 = vmatpush1.bf16.msra.mxu0 0
    %2493 = vmatprep.subr.bf16.mxu0 0
    %2494 = vmatpush1.bf16.msra.mxu0 0
    %2495 = vmatprep.mubr.bf16.mxu0 0
    %2496 = vmatmul.mubr.bf16.gmra.mrb[0].mxu0 %v2103
    %v2497 = vpop.f32.mrb[0].mxu0
    %v2498 = vadd.f32 %v2126, %v2497
    %v2499 = vpop.f32.mrb[0].mxu0
    %v2500 = vadd.f32 %v2130, %v2499
    %v2501 = vpop.f32.mrb[0].mxu0
    %v2502 = vadd.f32 %v2126, %v2501
    %v2503 = vpop.f32.mrb[0].mxu0
    %v2504 = vadd.f32 %v2130, %v2503
    %2505 = vdwg.mxu0
    %v2506 = vpack.c.bf16 %v2416, %v2412
    %v2507 = vpack.c.bf16 %v2418, %v2414
    %v2508 = vpack.c.bf16 %v2459, %v2455
    %v2509 = vpack.c.bf16 %v2461, %v2457
    %v2510 = vpack.c.bf16 %v2502, %v2498
    %v2511 = vpack.c.bf16 %v2504, %v2500
    %2512 = vmatprep.subr.bf16.mxu0 0
    %2513 = vmatpush1.bf16.xpose.msra.mxu0 %v2508
    %2514 = vmatprep.subr.bf16.mxu0 0
    %2515 = vmatpush1.bf16.xpose.msra.mxu0 0
    %2516 = vmatprep.subr.bf16.mxu0 0
    %2517 = vmatpush1.bf16.xpose.msra.mxu0 0
    %2518 = vmatprep.subr.bf16.mxu0 0
    %2519 = vmatpush1.bf16.xpose.msra.mxu0 0
    %2520 = vmatprep.subr.bf16.mxu0 0
    %2521 = vmatpush1.bf16.xpose.msra.mxu0 0
    %2522 = vmatprep.subr.bf16.mxu0 0
    %2523 = vmatpush1.bf16.xpose.msra.mxu0 0
    %2524 = vmatprep.subr.bf16.mxu0 0
    %2525 = vmatpush1.bf16.xpose.msra.mxu0 0
    %2526 = vmatprep.subr.bf16.mxu0 0
    %2527 = vmatpush1.bf16.xpose.msra.mxu0 0
    %2528 = vmatprep.subr.bf16.mxu0 0
    %2529 = vmatpush1.bf16.xpose.msra.mxu0 0
    %2530 = vmatprep.subr.bf16.mxu0 0
    %2531 = vmatpush1.bf16.xpose.msra.mxu0 0
    %2532 = vmatprep.subr.bf16.mxu0 0
    %2533 = vmatpush1.bf16.xpose.msra.mxu0 0
    %2534 = vmatprep.subr.bf16.mxu0 0
    %2535 = vmatpush1.bf16.xpose.msra.mxu0 0
    %2536 = vmatprep.subr.bf16.mxu0 0
    %2537 = vmatpush1.bf16.xpose.msra.mxu0 0
    %2538 = vmatprep.subr.bf16.mxu0 0
    %2539 = vmatpush1.bf16.xpose.msra.mxu0 0
    %2540 = vmatprep.subr.bf16.mxu0 0
    %2541 = vmatpush1.bf16.xpose.msra.mxu0 0
    %2542 = vmatprep.subr.bf16.mxu0 0
    %2543 = vmatpush1.bf16.xpose.msra.mxu0 0
    %2544 = vmatprep.mubr.bf16.mxu0 0
    %2545 = vmatmul.mubr.bf16.gmra.mrb[0].mxu0 %v2506
    %v2546 = vpop.f32.mrb[0].mxu0
    %v2547 = vadd.f32 %v647, %v2546
    %v2548 = vpop.f32.mrb[0].mxu0
    %v2549 = vpop.f32.mrb[0].mxu0
    %v2550 = vpop.f32.mrb[0].mxu0
    %2551 = vdwg.mxu0
    %v2552 = vsel %vm688, %v2547, -inf
    %2553 = vmax.xlane.f32.xlu0 %v2552
    %v2554 = vpop.xlane.xlu0 %2553
    %v2555 = vsub.f32 %v2547, %v2554
    %v2556 = vmul.f32 %v2555, 1.442695
    %v2557 = vpow.pop %v2556
    %v2558 = vsel %vm688, %v2557, 0.0
    %2559 = vadd.xlane.f32.xlu0 %v2558
    %v2560 = vpop.xlane.xlu0 %2559
    %v2561 = vrcp.pop %v2560
    %v2562 = vmul.f32 %v2557, %v2561
    %v2563 = vpack.c.bf16 %v2562, %v2562
    %v2565 = vsel %vm688, %v2563, 0
    %v2568 = vsel %vm704, %v2510, 0
    %2570 = vmatprep.subr.bf16.mxu0 0
    %2571 = vmatpush1.bf16.msra.mxu0 %v2568
    %2572 = vmatprep.subr.bf16.mxu0 0
    %2573 = vmatpush1.bf16.msra.mxu0 0
    %2574 = vmatprep.subr.bf16.mxu0 0
    %2575 = vmatpush1.bf16.msra.mxu0 0
    %2576 = vmatprep.subr.bf16.mxu0 0
    %2577 = vmatpush1.bf16.msra.mxu0 0
    %2578 = vmatprep.subr.bf16.mxu0 0
    %2579 = vmatpush1.bf16.msra.mxu0 0
    %2580 = vmatprep.subr.bf16.mxu0 0
    %2581 = vmatpush1.bf16.msra.mxu0 0
    %2582 = vmatprep.subr.bf16.mxu0 0
    %2583 = vmatpush1.bf16.msra.mxu0 0
    %2584 = vmatprep.subr.bf16.mxu0 0
    %2585 = vmatpush1.bf16.msra.mxu0 0
    %2586 = vmatprep.subr.bf16.mxu0 0
    %2587 = vmatpush1.bf16.msra.mxu0 0
    %2588 = vmatprep.subr.bf16.mxu0 0
    %2589 = vmatpush1.bf16.msra.mxu0 0
    %2590 = vmatprep.subr.bf16.mxu0 0
    %2591 = vmatpush1.bf16.msra.mxu0 0
    %2592 = vmatprep.subr.bf16.mxu0 0
    %2593 = vmatpush1.bf16.msra.mxu0 0
    %2594 = vmatprep.subr.bf16.mxu0 0
    %2595 = vmatpush1.bf16.msra.mxu0 0
    %2596 = vmatprep.subr.bf16.mxu0 0
    %2597 = vmatpush1.bf16.msra.mxu0 0
    %2598 = vmatprep.subr.bf16.mxu0 0
    %2599 = vmatpush1.bf16.msra.mxu0 0
    %2600 = vmatprep.subr.bf16.mxu0 0
    %2601 = vmatpush1.bf16.msra.mxu0 0
    %2602 = vmatprep.mubr.bf16.mxu0 0
    %2603 = vmatmul.mubr.bf16.gmra.mrb[0].mxu0 %v2565
    %v2604 = vpop.f32.mrb[0].mxu0
    %v2605 = vadd.f32 0.0, %v2604
    %v2606 = vpop.f32.mrb[0].mxu0
    %v2607 = vpop.f32.mrb[0].mxu0
    %v2608 = vpop.f32.mrb[0].mxu0
    %2609 = vdwg.mxu0
    %2610 = vst [vmem:[#allocation2] sm:$0xff] %v2605
    %2611 = vmatprep.subr.bf16.mxu0 0
    %2612 = vmatpush1.bf16.xpose.msra.mxu0 %v2509
    %2613 = vmatprep.subr.bf16.mxu0 0
    %2614 = vmatpush1.bf16.xpose.msra.mxu0 0
    %2615 = vmatprep.subr.bf16.mxu0 0
    %2616 = vmatpush1.bf16.xpose.msra.mxu0 0
    %2617 = vmatprep.subr.bf16.mxu0 0
    %2618 = vmatpush1.bf16.xpose.msra.mxu0 0
    %2619 = vmatprep.subr.bf16.mxu0 0
    %2620 = vmatpush1.bf16.xpose.msra.mxu0 0
    %2621 = vmatprep.subr.bf16.mxu0 0
    %2622 = vmatpush1.bf16.xpose.msra.mxu0 0
    %2623 = vmatprep.subr.bf16.mxu0 0
    %2624 = vmatpush1.bf16.xpose.msra.mxu0 0
    %2625 = vmatprep.subr.bf16.mxu0 0
    %2626 = vmatpush1.bf16.xpose.msra.mxu0 0
    %2627 = vmatprep.subr.bf16.mxu0 0
    %2628 = vmatpush1.bf16.xpose.msra.mxu0 0
    %2629 = vmatprep.subr.bf16.mxu0 0
    %2630 = vmatpush1.bf16.xpose.msra.mxu0 0
    %2631 = vmatprep.subr.bf16.mxu0 0
    %2632 = vmatpush1.bf16.xpose.msra.mxu0 0
    %2633 = vmatprep.subr.bf16.mxu0 0
    %2634 = vmatpush1.bf16.xpose.msra.mxu0 0
    %2635 = vmatprep.subr.bf16.mxu0 0
    %2636 = vmatpush1.bf16.xpose.msra.mxu0 0
    %2637 = vmatprep.subr.bf16.mxu0 0
    %2638 = vmatpush1.bf16.xpose.msra.mxu0 0
    %2639 = vmatprep.subr.bf16.mxu0 0
    %2640 = vmatpush1.bf16.xpose.msra.mxu0 0
    %2641 = vmatprep.subr.bf16.mxu0 0
    %2642 = vmatpush1.bf16.xpose.msra.mxu0 0
    %2643 = vmatprep.mubr.bf16.mxu0 0
    %2644 = vmatmul.mubr.bf16.gmra.mrb[0].mxu0 %v2507
    %v2645 = vpop.f32.mrb[0].mxu0
    %v2646 = vadd.f32 %v647, %v2645
    %v2647 = vpop.f32.mrb[0].mxu0
    %v2648 = vpop.f32.mrb[0].mxu0
    %v2649 = vpop.f32.mrb[0].mxu0
    %2650 = vdwg.mxu0
    %v2651 = vsel %vm688, %v2646, -inf
    %2652 = vmax.xlane.f32.xlu0 %v2651
    %v2653 = vpop.xlane.xlu0 %2652
    %v2654 = vsub.f32 %v2646, %v2653
    %v2655 = vmul.f32 %v2654, 1.442695
    %v2656 = vpow.pop %v2655
    %v2657 = vsel %vm688, %v2656, 0.0
    %2658 = vadd.xlane.f32.xlu0 %v2657
    %v2659 = vpop.xlane.xlu0 %2658
    %v2660 = vrcp.pop %v2659
    %v2661 = vmul.f32 %v2656, %v2660
    %v2662 = vpack.c.bf16 %v2661, %v2661
    %v2664 = vsel %vm688, %v2662, 0
    %v2667 = vsel %vm704, %v2511, 0
    %2669 = vmatprep.subr.bf16.mxu0 0
    %2670 = vmatpush1.bf16.msra.mxu0 %v2667
    %2671 = vmatprep.subr.bf16.mxu0 0
    %2672 = vmatpush1.bf16.msra.mxu0 0
    %2673 = vmatprep.subr.bf16.mxu0 0
    %2674 = vmatpush1.bf16.msra.mxu0 0
    %2675 = vmatprep.subr.bf16.mxu0 0
    %2676 = vmatpush1.bf16.msra.mxu0 0
    %2677 = vmatprep.subr.bf16.mxu0 0
    %2678 = vmatpush1.bf16.msra.mxu0 0
    %2679 = vmatprep.subr.bf16.mxu0 0
    %2680 = vmatpush1.bf16.msra.mxu0 0
    %2681 = vmatprep.subr.bf16.mxu0 0
    %2682 = vmatpush1.bf16.msra.mxu0 0
    %2683 = vmatprep.subr.bf16.mxu0 0
    %2684 = vmatpush1.bf16.msra.mxu0 0
    %2685 = vmatprep.subr.bf16.mxu0 0
    %2686 = vmatpush1.bf16.msra.mxu0 0
    %2687 = vmatprep.subr.bf16.mxu0 0
    %2688 = vmatpush1.bf16.msra.mxu0 0
    %2689 = vmatprep.subr.bf16.mxu0 0
    %2690 = vmatpush1.bf16.msra.mxu0 0
    %2691 = vmatprep.subr.bf16.mxu0 0
    %2692 = vmatpush1.bf16.msra.mxu0 0
    %2693 = vmatprep.subr.bf16.mxu0 0
    %2694 = vmatpush1.bf16.msra.mxu0 0
    %2695 = vmatprep.subr.bf16.mxu0 0
    %2696 = vmatpush1.bf16.msra.mxu0 0
    %2697 = vmatprep.subr.bf16.mxu0 0
    %2698 = vmatpush1.bf16.msra.mxu0 0
    %2699 = vmatprep.subr.bf16.mxu0 0
    %2700 = vmatpush1.bf16.msra.mxu0 0
    %2701 = vmatprep.mubr.bf16.mxu0 0
    %2702 = vmatmul.mubr.bf16.gmra.mrb[0].mxu0 %v2664
    %v2703 = vpop.f32.mrb[0].mxu0
    %v2704 = vadd.f32 0.0, %v2703
    %v2705 = vpop.f32.mrb[0].mxu0
    %v2706 = vpop.f32.mrb[0].mxu0
    %v2707 = vpop.f32.mrb[0].mxu0
    %2708 = vdwg.mxu0
    %2709 = vst [vmem:[#allocation2 + $0x8] sm:$0xff] %v2704
    %v2711 = vrot.slane %v2506, 4
    %v2714 = vrot.slane %v2508, 4
    %2716 = vmatprep.subr.bf16.mxu0 0
    %2717 = vmatpush1.bf16.xpose.msra.mxu0 %v2714
    %2718 = vmatprep.subr.bf16.mxu0 0
    %2719 = vmatpush1.bf16.xpose.msra.mxu0 0
    %2720 = vmatprep.subr.bf16.mxu0 0
    %2721 = vmatpush1.bf16.xpose.msra.mxu0 0
    %2722 = vmatprep.subr.bf16.mxu0 0
    %2723 = vmatpush1.bf16.xpose.msra.mxu0 0
    %2724 = vmatprep.subr.bf16.mxu0 0
    %2725 = vmatpush1.bf16.xpose.msra.mxu0 0
    %2726 = vmatprep.subr.bf16.mxu0 0
    %2727 = vmatpush1.bf16.xpose.msra.mxu0 0
    %2728 = vmatprep.subr.bf16.mxu0 0
    %2729 = vmatpush1.bf16.xpose.msra.mxu0 0
    %2730 = vmatprep.subr.bf16.mxu0 0
    %2731 = vmatpush1.bf16.xpose.msra.mxu0 0
    %2732 = vmatprep.subr.bf16.mxu0 0
    %2733 = vmatpush1.bf16.xpose.msra.mxu0 0
    %2734 = vmatprep.subr.bf16.mxu0 0
    %2735 = vmatpush1.bf16.xpose.msra.mxu0 0
    %2736 = vmatprep.subr.bf16.mxu0 0
    %2737 = vmatpush1.bf16.xpose.msra.mxu0 0
    %2738 = vmatprep.subr.bf16.mxu0 0
    %2739 = vmatpush1.bf16.xpose.msra.mxu0 0
    %2740 = vmatprep.subr.bf16.mxu0 0
    %2741 = vmatpush1.bf16.xpose.msra.mxu0 0
    %2742 = vmatprep.subr.bf16.mxu0 0
    %2743 = vmatpush1.bf16.xpose.msra.mxu0 0
    %2744 = vmatprep.subr.bf16.mxu0 0
    %2745 = vmatpush1.bf16.xpose.msra.mxu0 0
    %2746 = vmatprep.subr.bf16.mxu0 0
    %2747 = vmatpush1.bf16.xpose.msra.mxu0 0
    %2748 = vmatprep.mubr.bf16.mxu0 0
    %2749 = vmatmul.mubr.bf16.gmra.mrb[0].mxu0 %v2711
    %v2750 = vpop.f32.mrb[0].mxu0
    %v2751 = vadd.f32 %v851, %v2750
    %v2752 = vpop.f32.mrb[0].mxu0
    %v2753 = vpop.f32.mrb[0].mxu0
    %v2754 = vpop.f32.mrb[0].mxu0
    %2755 = vdwg.mxu0
    %v2756 = vsel %vm688, %v2751, -inf
    %2757 = vmax.xlane.f32.xlu0 %v2756
    %v2758 = vpop.xlane.xlu0 %2757
    %v2759 = vsub.f32 %v2751, %v2758
    %v2760 = vmul.f32 %v2759, 1.442695
    %v2761 = vpow.pop %v2760
    %v2762 = vsel %vm688, %v2761, 0.0
    %2763 = vadd.xlane.f32.xlu0 %v2762
    %v2764 = vpop.xlane.xlu0 %2763
    %v2765 = vrcp.pop %v2764
    %v2766 = vmul.f32 %v2761, %v2765
    %v2767 = vpack.c.bf16 %v2766, %v2766
    %v2769 = vrot.slane %v2510, 4
    %v2771 = vsel %vm688, %v2767, 0
    %v2774 = vsel %vm704, %v2769, 0
    %2776 = vmatprep.subr.bf16.mxu0 0
    %2777 = vmatpush1.bf16.msra.mxu0 %v2774
    %2778 = vmatprep.subr.bf16.mxu0 0
    %2779 = vmatpush1.bf16.msra.mxu0 0
    %2780 = vmatprep.subr.bf16.mxu0 0
    %2781 = vmatpush1.bf16.msra.mxu0 0
    %2782 = vmatprep.subr.bf16.mxu0 0
    %2783 = vmatpush1.bf16.msra.mxu0 0
    %2784 = vmatprep.subr.bf16.mxu0 0
    %2785 = vmatpush1.bf16.msra.mxu0 0
    %2786 = vmatprep.subr.bf16.mxu0 0
    %2787 = vmatpush1.bf16.msra.mxu0 0
    %2788 = vmatprep.subr.bf16.mxu0 0
    %2789 = vmatpush1.bf16.msra.mxu0 0
    %2790 = vmatprep.subr.bf16.mxu0 0
    %2791 = vmatpush1.bf16.msra.mxu0 0
    %2792 = vmatprep.subr.bf16.mxu0 0
    %2793 = vmatpush1.bf16.msra.mxu0 0
    %2794 = vmatprep.subr.bf16.mxu0 0
    %2795 = vmatpush1.bf16.msra.mxu0 0
    %2796 = vmatprep.subr.bf16.mxu0 0
    %2797 = vmatpush1.bf16.msra.mxu0 0
    %2798 = vmatprep.subr.bf16.mxu0 0
    %2799 = vmatpush1.bf16.msra.mxu0 0
    %2800 = vmatprep.subr.bf16.mxu0 0
    %2801 = vmatpush1.bf16.msra.mxu0 0
    %2802 = vmatprep.subr.bf16.mxu0 0
    %2803 = vmatpush1.bf16.msra.mxu0 0
    %2804 = vmatprep.subr.bf16.mxu0 0
    %2805 = vmatpush1.bf16.msra.mxu0 0
    %2806 = vmatprep.subr.bf16.mxu0 0
    %2807 = vmatpush1.bf16.msra.mxu0 0
    %2808 = vmatprep.mubr.bf16.mxu0 0
    %2809 = vmatmul.mubr.bf16.gmra.mrb[0].mxu0 %v2771
    %v2810 = vpop.f32.mrb[0].mxu0
    %v2811 = vadd.f32 0.0, %v2810
    %v2812 = vpop.f32.mrb[0].mxu0
    %v2813 = vpop.f32.mrb[0].mxu0
    %v2814 = vpop.f32.mrb[0].mxu0
    %2815 = vdwg.mxu0
    %2816 = vst [vmem:[#allocation2 + $0x10] sm:$0xff] %v2811
    %v2818 = vrot.slane %v2507, 4
    %v2821 = vrot.slane %v2509, 4
    %2823 = vmatprep.subr.bf16.mxu0 0
    %2824 = vmatpush1.bf16.xpose.msra.mxu0 %v2821
    %2825 = vmatprep.subr.bf16.mxu0 0
    %2826 = vmatpush1.bf16.xpose.msra.mxu0 0
    %2827 = vmatprep.subr.bf16.mxu0 0
    %2828 = vmatpush1.bf16.xpose.msra.mxu0 0
    %2829 = vmatprep.subr.bf16.mxu0 0
    %2830 = vmatpush1.bf16.xpose.msra.mxu0 0
    %2831 = vmatprep.subr.bf16.mxu0 0
    %2832 = vmatpush1.bf16.xpose.msra.mxu0 0
    %2833 = vmatprep.subr.bf16.mxu0 0
    %2834 = vmatpush1.bf16.xpose.msra.mxu0 0
    %2835 = vmatprep.subr.bf16.mxu0 0
    %2836 = vmatpush1.bf16.xpose.msra.mxu0 0
    %2837 = vmatprep.subr.bf16.mxu0 0
    %2838 = vmatpush1.bf16.xpose.msra.mxu0 0
    %2839 = vmatprep.subr.bf16.mxu0 0
    %2840 = vmatpush1.bf16.xpose.msra.mxu0 0
    %2841 = vmatprep.subr.bf16.mxu0 0
    %2842 = vmatpush1.bf16.xpose.msra.mxu0 0
    %2843 = vmatprep.subr.bf16.mxu0 0
    %2844 = vmatpush1.bf16.xpose.msra.mxu0 0
    %2845 = vmatprep.subr.bf16.mxu0 0
    %2846 = vmatpush1.bf16.xpose.msra.mxu0 0
    %2847 = vmatprep.subr.bf16.mxu0 0
    %2848 = vmatpush1.bf16.xpose.msra.mxu0 0
    %2849 = vmatprep.subr.bf16.mxu0 0
    %2850 = vmatpush1.bf16.xpose.msra.mxu0 0
    %2851 = vmatprep.subr.bf16.mxu0 0
    %2852 = vmatpush1.bf16.xpose.msra.mxu0 0
    %2853 = vmatprep.subr.bf16.mxu0 0
    %2854 = vmatpush1.bf16.xpose.msra.mxu0 0
    %2855 = vmatprep.mubr.bf16.mxu0 0
    %2856 = vmatmul.mubr.bf16.gmra.mrb[0].mxu0 %v2818
    %v2857 = vpop.f32.mrb[0].mxu0
    %v2858 = vadd.f32 %v851, %v2857
    %v2859 = vpop.f32.mrb[0].mxu0
    %v2860 = vpop.f32.mrb[0].mxu0
    %v2861 = vpop.f32.mrb[0].mxu0
    %2862 = vdwg.mxu0
    %v2863 = vsel %vm688, %v2858, -inf
    %2864 = vmax.xlane.f32.xlu0 %v2863
    %v2865 = vpop.xlane.xlu0 %2864
    %v2866 = vsub.f32 %v2858, %v2865
    %v2867 = vmul.f32 %v2866, 1.442695
    %v2868 = vpow.pop %v2867
    %v2869 = vsel %vm688, %v2868, 0.0
    %2870 = vadd.xlane.f32.xlu0 %v2869
    %v2871 = vpop.xlane.xlu0 %2870
    %v2872 = vrcp.pop %v2871
    %v2873 = vmul.f32 %v2868, %v2872
    %v2874 = vpack.c.bf16 %v2873, %v2873
    %v2876 = vrot.slane %v2511, 4
    %v2878 = vsel %vm688, %v2874, 0
    %v2881 = vsel %vm704, %v2876, 0
    %2883 = vmatprep.subr.bf16.mxu0 0
    %2884 = vmatpush1.bf16.msra.mxu0 %v2881
    %2885 = vmatprep.subr.bf16.mxu0 0
    %2886 = vmatpush1.bf16.msra.mxu0 0
    %2887 = vmatprep.subr.bf16.mxu0 0
    %2888 = vmatpush1.bf16.msra.mxu0 0
    %2889 = vmatprep.subr.bf16.mxu0 0
    %2890 = vmatpush1.bf16.msra.mxu0 0
    %2891 = vmatprep.subr.bf16.mxu0 0
    %2892 = vmatpush1.bf16.msra.mxu0 0
    %2893 = vmatprep.subr.bf16.mxu0 0
    %2894 = vmatpush1.bf16.msra.mxu0 0
    %2895 = vmatprep.subr.bf16.mxu0 0
    %2896 = vmatpush1.bf16.msra.mxu0 0
    %2897 = vmatprep.subr.bf16.mxu0 0
    %2898 = vmatpush1.bf16.msra.mxu0 0
    %2899 = vmatprep.subr.bf16.mxu0 0
    %2900 = vmatpush1.bf16.msra.mxu0 0
    %2901 = vmatprep.subr.bf16.mxu0 0
    %2902 = vmatpush1.bf16.msra.mxu0 0
    %2903 = vmatprep.subr.bf16.mxu0 0
    %2904 = vmatpush1.bf16.msra.mxu0 0
    %2905 = vmatprep.subr.bf16.mxu0 0
    %2906 = vmatpush1.bf16.msra.mxu0 0
    %2907 = vmatprep.subr.bf16.mxu0 0
    %2908 = vmatpush1.bf16.msra.mxu0 0
    %2909 = vmatprep.subr.bf16.mxu0 0
    %2910 = vmatpush1.bf16.msra.mxu0 0
    %2911 = vmatprep.subr.bf16.mxu0 0
    %2912 = vmatpush1.bf16.msra.mxu0 0
    %2913 = vmatprep.subr.bf16.mxu0 0
    %2914 = vmatpush1.bf16.msra.mxu0 0
    %2915 = vmatprep.mubr.bf16.mxu0 0
    %2916 = vmatmul.mubr.bf16.gmra.mrb[0].mxu0 %v2878
    %v2917 = vpop.f32.mrb[0].mxu0
    %v2918 = vadd.f32 0.0, %v2917
    %v2919 = vpop.f32.mrb[0].mxu0
    %v2920 = vpop.f32.mrb[0].mxu0
    %v2921 = vpop.f32.mrb[0].mxu0
    %2922 = vdwg.mxu0
    %2923 = vst [vmem:[#allocation2 + $0x18] sm:$0xff] %v2918
    %v2924 = vld [vmem:[#allocation2] sm:$0xff]
    %v2925 = vld [vmem:[#allocation2 + $0x8] sm:$0xff]
    %v2926 = vld [vmem:[#allocation2 + $0x10] sm:$0xff]
    %v2927 = vld [vmem:[#allocation2 + $0x18] sm:$0xff]
    %s2928 = scalar_lea.vmem [#allocation6], 128
    %v2929 = vld [vmem:[%s2928] sm:$0xf]
    %v2930 = vld [vmem:[%s2928 + $0x4] sm:$0xf]
    %v2931 = vld [vmem:[%s2928 + $0x8] sm:$0xf]
    %v2932 = vld [vmem:[%s2928 + $0xc] sm:$0xf]
    %v2933 = vld [vmem:[%s2928 + $0x10] sm:$0xf]
    %v2934 = vld [vmem:[%s2928 + $0x14] sm:$0xf]
    %v2935 = vld [vmem:[%s2928 + $0x18] sm:$0xf]
    %v2936 = vld [vmem:[%s2928 + $0x1c] sm:$0xf]
    %v2937 = vld [vmem:[%s2928 + $0x20] sm:$0xf]
    %v2938 = vld [vmem:[%s2928 + $0x24] sm:$0xf]
    %v2939 = vld [vmem:[%s2928 + $0x28] sm:$0xf]
    %v2940 = vld [vmem:[%s2928 + $0x2c] sm:$0xf]
    %v2941 = vld [vmem:[%s2928 + $0x30] sm:$0xf]
    %v2942 = vld [vmem:[%s2928 + $0x34] sm:$0xf]
    %v2943 = vld [vmem:[%s2928 + $0x38] sm:$0xf]
    %v2944 = vld [vmem:[%s2928 + $0x3c] sm:$0xf]
    %v2945 = vld [vmem:[%s2928 + $0x40] sm:$0xf]
    %v2946 = vld [vmem:[%s2928 + $0x44] sm:$0xf]
    %v2947 = vld [vmem:[%s2928 + $0x48] sm:$0xf]
    %v2948 = vld [vmem:[%s2928 + $0x4c] sm:$0xf]
    %v2949 = vld [vmem:[%s2928 + $0x50] sm:$0xf]
    %v2950 = vld [vmem:[%s2928 + $0x54] sm:$0xf]
    %v2951 = vld [vmem:[%s2928 + $0x58] sm:$0xf]
    %v2952 = vld [vmem:[%s2928 + $0x5c] sm:$0xf]
    %v2953 = vld [vmem:[%s2928 + $0x60] sm:$0xf]
    %v2954 = vld [vmem:[%s2928 + $0x64] sm:$0xf]
    %v2955 = vld [vmem:[%s2928 + $0x68] sm:$0xf]
    %v2956 = vld [vmem:[%s2928 + $0x6c] sm:$0xf]
    %v2957 = vld [vmem:[%s2928 + $0x70] sm:$0xf]
    %v2958 = vld [vmem:[%s2928 + $0x74] sm:$0xf]
    %v2959 = vld [vmem:[%s2928 + $0x78] sm:$0xf]
    %v2960 = vld [vmem:[%s2928 + $0x7c] sm:$0xf]
    %v2961 = vpack.c.bf16 %v2926, %v2924
    %v2962 = vpack.c.bf16 %v2927, %v2925
    %s2963 = scalar_lea.vmem %s9, 1
    %v2964 = vld [vmem:[%s2963] sm:$0x1]
    %v2966 = vlaneseq
    %v2967 = vshrl.u32 %v2966, 7
    %v2968 = vsub.s32 0, %v2967
    %v2969 = vrot.slane %v2964, %v2968
    %v3003 = vunpack.c.l.b16 %v2929
    %v3004 = vunpack.c.l.b16 %v2930
    %v3005 = vunpack.c.l.b16 %v2931
    %v3006 = vunpack.c.l.b16 %v2932
    %v3007 = vunpack.c.l.b16 %v2933
    %v3008 = vunpack.c.l.b16 %v2934
    %v3009 = vunpack.c.l.b16 %v2935
    %v3010 = vunpack.c.l.b16 %v2936
    %v3011 = vunpack.c.l.b16 %v2937
    %v3012 = vunpack.c.l.b16 %v2938
    %v3013 = vunpack.c.l.b16 %v2939
    %v3014 = vunpack.c.l.b16 %v2940
    %v3015 = vunpack.c.l.b16 %v2941
    %v3016 = vunpack.c.l.b16 %v2942
    %v3017 = vunpack.c.l.b16 %v2943
    %v3018 = vunpack.c.l.b16 %v2944
    %v3019 = vunpack.c.l.b16 %v2945
    %v3020 = vunpack.c.l.b16 %v2946
    %v3021 = vunpack.c.l.b16 %v2947
    %v3022 = vunpack.c.l.b16 %v2948
    %v3023 = vunpack.c.l.b16 %v2949
    %v3024 = vunpack.c.l.b16 %v2950
    %v3025 = vunpack.c.l.b16 %v2951
    %v3026 = vunpack.c.l.b16 %v2952
    %v3027 = vunpack.c.l.b16 %v2953
    %v3028 = vunpack.c.l.b16 %v2954
    %v3029 = vunpack.c.l.b16 %v2955
    %v3030 = vunpack.c.l.b16 %v2956
    %v3031 = vunpack.c.l.b16 %v2957
    %v3032 = vunpack.c.l.b16 %v2958
    %v3033 = vunpack.c.l.b16 %v2959
    %v3034 = vunpack.c.l.b16 %v2960
    %v3035 = vpack.c.b16 %v3004, %v3003
    %v3036 = vpack.c.b16 %v3006, %v3005
    %v3037 = vpack.c.b16 %v3008, %v3007
    %v3038 = vpack.c.b16 %v3010, %v3009
    %v3039 = vpack.c.b16 %v3012, %v3011
    %v3040 = vpack.c.b16 %v3014, %v3013
    %v3041 = vpack.c.b16 %v3016, %v3015
    %v3042 = vpack.c.b16 %v3018, %v3017
    %v3043 = vpack.c.b16 %v3020, %v3019
    %v3044 = vpack.c.b16 %v3022, %v3021
    %v3045 = vpack.c.b16 %v3024, %v3023
    %v3046 = vpack.c.b16 %v3026, %v3025
    %v3047 = vpack.c.b16 %v3028, %v3027
    %v3048 = vpack.c.b16 %v3030, %v3029
    %v3049 = vpack.c.b16 %v3032, %v3031
    %v3050 = vpack.c.b16 %v3034, %v3033
    %3067 = vmatprep.subr.bf16.mxu0 0
    %3068 = vmatpush1.bf16.msra.mxu0 %v3035
    %3069 = vmatprep.subr.bf16.mxu0 0
    %3070 = vmatpush1.bf16.msra.mxu0 %v3036
    %3071 = vmatprep.subr.bf16.mxu0 0
    %3072 = vmatpush1.bf16.msra.mxu0 %v3037
    %3073 = vmatprep.subr.bf16.mxu0 0
    %3074 = vmatpush1.bf16.msra.mxu0 %v3038
    %3075 = vmatprep.subr.bf16.mxu0 0
    %3076 = vmatpush1.bf16.msra.mxu0 %v3039
    %3077 = vmatprep.subr.bf16.mxu0 0
    %3078 = vmatpush1.bf16.msra.mxu0 %v3040
    %3079 = vmatprep.subr.bf16.mxu0 0
    %3080 = vmatpush1.bf16.msra.mxu0 %v3041
    %3081 = vmatprep.subr.bf16.mxu0 0
    %3082 = vmatpush1.bf16.msra.mxu0 %v3042
    %3083 = vmatprep.subr.bf16.mxu0 0
    %3084 = vmatpush1.bf16.msra.mxu0 %v3043
    %3085 = vmatprep.subr.bf16.mxu0 0
    %3086 = vmatpush1.bf16.msra.mxu0 %v3044
    %3087 = vmatprep.subr.bf16.mxu0 0
    %3088 = vmatpush1.bf16.msra.mxu0 %v3045
    %3089 = vmatprep.subr.bf16.mxu0 0
    %3090 = vmatpush1.bf16.msra.mxu0 %v3046
    %3091 = vmatprep.subr.bf16.mxu0 0
    %3092 = vmatpush1.bf16.msra.mxu0 %v3047
    %3093 = vmatprep.subr.bf16.mxu0 0
    %3094 = vmatpush1.bf16.msra.mxu0 %v3048
    %3095 = vmatprep.subr.bf16.mxu0 0
    %3096 = vmatpush1.bf16.msra.mxu0 %v3049
    %3097 = vmatprep.subr.bf16.mxu0 0
    %3098 = vmatpush1.bf16.msra.mxu0 %v3050
    %3099 = vmatprep.mubr.bf16.mxu0 %v2962
    %3100 = vmatmul.mubr.bf16.gmra.mrb[0].mxu0 %v2961
    %v3101 = vpop.f32.mrb[0].mxu0
    %v3102 = vadd.f32 %v2969, %v3101
    %v3103 = vpop.f32.mrb[0].mxu0
    %v3104 = vpop.f32.mrb[0].mxu0
    %v3105 = vadd.f32 %v2969, %v3104
    %v3106 = vpop.f32.mrb[0].mxu0
    %3107 = vdwg.mxu0
    %v3108 = vadd.f32 %v2052, %v3102
    %v3109 = vadd.f32 %v2053, %v3105
    %s3110 = scalar_lea.vmem %s10, 1
    %v3111 = vld [vmem:[%s3110] sm:$0x1]
    %s3112 = scalar_lea.vmem %s11, 1
    %v3113 = vld [vmem:[%s3112] sm:$0x1]
    %3114 = vadd.xlane.f32.xlu0 %v3108
    %v3115 = vpop.xlane.xlu0 %3114
    %3116 = vadd.xlane.f32.xlu0 %v3109
    %v3117 = vpop.xlane.xlu0 %3116
    %v3118 = vmul.f32 %v3115, %v152
    %v3119 = vmul.f32 %v3117, %v152
    %v3120 = vsub.f32 %v3108, %v3118
    %v3121 = vsub.f32 %v3109, %v3119
    %v3122 = vmul.f32 %v3120, %v3120
    %v3123 = vmul.f32 %v3121, %v3121
    %3124 = vadd.xlane.f32.xlu0 %v3122
    %v3125 = vpop.xlane.xlu0 %3124
    %3126 = vadd.xlane.f32.xlu0 %v3123
    %v3127 = vpop.xlane.xlu0 %3126
    %v3128 = vmul.f32 %v3125, %v152
    %v3129 = vmul.f32 %v3127, %v152
    %v3130 = vadd.f32 %v3128, 1e-12
    %v3131 = vadd.f32 %v3129, 1e-12
    %v3132 = vrsqrt.pop %v3130
    %v3133 = vrsqrt.pop %v3131
    %v3134 = vmul.f32 %v3120, %v3132
    %v3135 = vmul.f32 %v3121, %v3133
    %v3137 = vlaneseq
    %v3138 = vshrl.u32 %v3137, 7
    %v3139 = vsub.s32 0, %v3138
    %v3140 = vrot.slane %v3111, %v3139
    %v3142 = vmul.f32 %v3134, %v3140
    %v3143 = vmul.f32 %v3135, %v3140
    %v3145 = vlaneseq
    %v3146 = vshrl.u32 %v3145, 7
    %v3147 = vsub.s32 0, %v3146
    %v3148 = vrot.slane %v3113, %v3147
    %v3150 = vadd.f32 %v3142, %v3148
    %v3151 = vadd.f32 %v3143, %v3148
    %s3152 = scalar_lea.vmem [#allocation8], 256
    %v3153 = vld [vmem:[%s3152] sm:$0xff]
    %v3154 = vld [vmem:[%s3152 + $0x8] sm:$0xff]
    %v3155 = vld [vmem:[%s3152 + $0x10] sm:$0xff]
    %v3156 = vld [vmem:[%s3152 + $0x18] sm:$0xff]
    %v3157 = vld [vmem:[%s3152 + $0x20] sm:$0xff]
    %v3158 = vld [vmem:[%s3152 + $0x28] sm:$0xff]
    %v3159 = vld [vmem:[%s3152 + $0x30] sm:$0xff]
    %v3160 = vld [vmem:[%s3152 + $0x38] sm:$0xff]
    %v3161 = vld [vmem:[%s3152 + $0x40] sm:$0xff]
    %v3162 = vld [vmem:[%s3152 + $0x48] sm:$0xff]
    %v3163 = vld [vmem:[%s3152 + $0x50] sm:$0xff]
    %v3164 = vld [vmem:[%s3152 + $0x58] sm:$0xff]
    %v3165 = vld [vmem:[%s3152 + $0x60] sm:$0xff]
    %v3166 = vld [vmem:[%s3152 + $0x68] sm:$0xff]
    %v3167 = vld [vmem:[%s3152 + $0x70] sm:$0xff]
    %v3168 = vld [vmem:[%s3152 + $0x78] sm:$0xff]
    %v3169 = vld [vmem:[%s3152 + $0x80] sm:$0xff]
    %v3170 = vld [vmem:[%s3152 + $0x88] sm:$0xff]
    %v3171 = vld [vmem:[%s3152 + $0x90] sm:$0xff]
    %v3172 = vld [vmem:[%s3152 + $0x98] sm:$0xff]
    %v3173 = vld [vmem:[%s3152 + $0xa0] sm:$0xff]
    %v3174 = vld [vmem:[%s3152 + $0xa8] sm:$0xff]
    %v3175 = vld [vmem:[%s3152 + $0xb0] sm:$0xff]
    %v3176 = vld [vmem:[%s3152 + $0xb8] sm:$0xff]
    %v3177 = vld [vmem:[%s3152 + $0xc0] sm:$0xff]
    %v3178 = vld [vmem:[%s3152 + $0xc8] sm:$0xff]
    %v3179 = vld [vmem:[%s3152 + $0xd0] sm:$0xff]
    %v3180 = vld [vmem:[%s3152 + $0xd8] sm:$0xff]
    %v3181 = vld [vmem:[%s3152 + $0xe0] sm:$0xff]
    %v3182 = vld [vmem:[%s3152 + $0xe8] sm:$0xff]
    %v3183 = vld [vmem:[%s3152 + $0xf0] sm:$0xff]
    %v3184 = vld [vmem:[%s3152 + $0xf8] sm:$0xff]
    %v3185 = vpack.c.bf16 %v3151, %v3150
    %s3186 = scalar_lea.vmem %s13, 4
    %v3187 = vld [vmem:[%s3186] sm:$0xf]
    %v3189 = vlaneseq
    %v3190 = vshrl.u32 %v3189, 7
    %v3191 = vsub.s32 0, %v3190
    %v3192 = vrot.slane %v3187, %v3191
    %v3193 = vlaneseq
    %v3194 = vshrl.u32 %v3193, 7
    %v3195 = vsub.s32 1, %v3194
    %v3196 = vrot.slane %v3187, %v3195
    %v3197 = vlaneseq
    %v3198 = vshrl.u32 %v3197, 7
    %v3199 = vsub.s32 2, %v3198
    %v3200 = vrot.slane %v3187, %v3199
    %v3201 = vlaneseq
    %v3202 = vshrl.u32 %v3201, 7
    %v3203 = vsub.s32 3, %v3202
    %v3204 = vrot.slane %v3187, %v3203
    %v3241 = vunpack.c.l.b16 %v3153
    %v3242 = vunpack.c.h.b16 %v3153
    %v3243 = vunpack.c.l.b16 %v3154
    %v3244 = vunpack.c.h.b16 %v3154
    %v3245 = vunpack.c.l.b16 %v3155
    %v3246 = vunpack.c.h.b16 %v3155
    %v3247 = vunpack.c.l.b16 %v3156
    %v3248 = vunpack.c.h.b16 %v3156
    %v3249 = vunpack.c.l.b16 %v3157
    %v3250 = vunpack.c.h.b16 %v3157
    %v3251 = vunpack.c.l.b16 %v3158
    %v3252 = vunpack.c.h.b16 %v3158
    %v3253 = vunpack.c.l.b16 %v3159
    %v3254 = vunpack.c.h.b16 %v3159
    %v3255 = vunpack.c.l.b16 %v3160
    %v3256 = vunpack.c.h.b16 %v3160
    %v3257 = vunpack.c.l.b16 %v3161
    %v3258 = vunpack.c.h.b16 %v3161
    %v3259 = vunpack.c.l.b16 %v3162
    %v3260 = vunpack.c.h.b16 %v3162
    %v3261 = vunpack.c.l.b16 %v3163
    %v3262 = vunpack.c.h.b16 %v3163
    %v3263 = vunpack.c.l.b16 %v3164
    %v3264 = vunpack.c.h.b16 %v3164
    %v3265 = vunpack.c.l.b16 %v3165
    %v3266 = vunpack.c.h.b16 %v3165
    %v3267 = vunpack.c.l.b16 %v3166
    %v3268 = vunpack.c.h.b16 %v3166
    %v3269 = vunpack.c.l.b16 %v3167
    %v3270 = vunpack.c.h.b16 %v3167
    %v3271 = vunpack.c.l.b16 %v3168
    %v3272 = vunpack.c.h.b16 %v3168
    %v3273 = vunpack.c.l.b16 %v3169
    %v3274 = vunpack.c.h.b16 %v3169
    %v3275 = vunpack.c.l.b16 %v3170
    %v3276 = vunpack.c.h.b16 %v3170
    %v3277 = vunpack.c.l.b16 %v3171
    %v3278 = vunpack.c.h.b16 %v3171
    %v3279 = vunpack.c.l.b16 %v3172
    %v3280 = vunpack.c.h.b16 %v3172
    %v3281 = vunpack.c.l.b16 %v3173
    %v3282 = vunpack.c.h.b16 %v3173
    %v3283 = vunpack.c.l.b16 %v3174
    %v3284 = vunpack.c.h.b16 %v3174
    %v3285 = vunpack.c.l.b16 %v3175
    %v3286 = vunpack.c.h.b16 %v3175
    %v3287 = vunpack.c.l.b16 %v3176
    %v3288 = vunpack.c.h.b16 %v3176
    %v3289 = vunpack.c.l.b16 %v3177
    %v3290 = vunpack.c.h.b16 %v3177
    %v3291 = vunpack.c.l.b16 %v3178
    %v3292 = vunpack.c.h.b16 %v3178
    %v3293 = vunpack.c.l.b16 %v3179
    %v3294 = vunpack.c.h.b16 %v3179
    %v3295 = vunpack.c.l.b16 %v3180
    %v3296 = vunpack.c.h.b16 %v3180
    %v3297 = vunpack.c.l.b16 %v3181
    %v3298 = vunpack.c.h.b16 %v3181
    %v3299 = vunpack.c.l.b16 %v3182
    %v3300 = vunpack.c.h.b16 %v3182
    %v3301 = vunpack.c.l.b16 %v3183
    %v3302 = vunpack.c.h.b16 %v3183
    %v3303 = vunpack.c.l.b16 %v3184
    %v3304 = vunpack.c.h.b16 %v3184
    %v3305 = vpack.c.b16 %v3245, %v3241
    %v3306 = vpack.c.b16 %v3246, %v3242
    %v3307 = vpack.c.b16 %v3247, %v3243
    %v3308 = vpack.c.b16 %v3248, %v3244
    %v3309 = vpack.c.b16 %v3253, %v3249
    %v3310 = vpack.c.b16 %v3254, %v3250
    %v3311 = vpack.c.b16 %v3255, %v3251
    %v3312 = vpack.c.b16 %v3256, %v3252
    %v3313 = vpack.c.b16 %v3261, %v3257
    %v3314 = vpack.c.b16 %v3262, %v3258
    %v3315 = vpack.c.b16 %v3263, %v3259
    %v3316 = vpack.c.b16 %v3264, %v3260
    %v3317 = vpack.c.b16 %v3269, %v3265
    %v3318 = vpack.c.b16 %v3270, %v3266
    %v3319 = vpack.c.b16 %v3271, %v3267
    %v3320 = vpack.c.b16 %v3272, %v3268
    %v3321 = vpack.c.b16 %v3277, %v3273
    %v3322 = vpack.c.b16 %v3278, %v3274
    %v3323 = vpack.c.b16 %v3279, %v3275
    %v3324 = vpack.c.b16 %v3280, %v3276
    %v3325 = vpack.c.b16 %v3285, %v3281
    %v3326 = vpack.c.b16 %v3286, %v3282
    %v3327 = vpack.c.b16 %v3287, %v3283
    %v3328 = vpack.c.b16 %v3288, %v3284
    %v3329 = vpack.c.b16 %v3293, %v3289
    %v3330 = vpack.c.b16 %v3294, %v3290
    %v3331 = vpack.c.b16 %v3295, %v3291
    %v3332 = vpack.c.b16 %v3296, %v3292
    %v3333 = vpack.c.b16 %v3301, %v3297
    %v3334 = vpack.c.b16 %v3302, %v3298
    %v3335 = vpack.c.b16 %v3303, %v3299
    %v3336 = vpack.c.b16 %v3304, %v3300
    %3369 = vmatprep.subr.bf16.mxu0 %v3306
    %3370 = vmatpush1.bf16.msra.mxu0 %v3305
    %3371 = vmatprep.subr.bf16.mxu0 %v3310
    %3372 = vmatpush1.bf16.msra.mxu0 %v3309
    %3373 = vmatprep.subr.bf16.mxu0 %v3314
    %3374 = vmatpush1.bf16.msra.mxu0 %v3313
    %3375 = vmatprep.subr.bf16.mxu0 %v3318
    %3376 = vmatpush1.bf16.msra.mxu0 %v3317
    %3377 = vmatprep.subr.bf16.mxu0 %v3322
    %3378 = vmatpush1.bf16.msra.mxu0 %v3321
    %3379 = vmatprep.subr.bf16.mxu0 %v3326
    %3380 = vmatpush1.bf16.msra.mxu0 %v3325
    %3381 = vmatprep.subr.bf16.mxu0 %v3330
    %3382 = vmatpush1.bf16.msra.mxu0 %v3329
    %3383 = vmatprep.subr.bf16.mxu0 %v3334
    %3384 = vmatpush1.bf16.msra.mxu0 %v3333
    %3385 = vmatprep.subr.bf16.mxu0 0
    %3386 = vmatpush1.bf16.msra.mxu0 0
    %3387 = vmatprep.subr.bf16.mxu0 0
    %3388 = vmatpush1.bf16.msra.mxu0 0
    %3389 = vmatprep.subr.bf16.mxu0 0
    %3390 = vmatpush1.bf16.msra.mxu0 0
    %3391 = vmatprep.subr.bf16.mxu0 0
    %3392 = vmatpush1.bf16.msra.mxu0 0
    %3393 = vmatprep.subr.bf16.mxu0 0
    %3394 = vmatpush1.bf16.msra.mxu0 0
    %3395 = vmatprep.subr.bf16.mxu0 0
    %3396 = vmatpush1.bf16.msra.mxu0 0
    %3397 = vmatprep.subr.bf16.mxu0 0
    %3398 = vmatpush1.bf16.msra.mxu0 0
    %3399 = vmatprep.subr.bf16.mxu0 0
    %3400 = vmatpush1.bf16.msra.mxu0 0
    %3401 = vmatprep.mubr.bf16.mxu0 0
    %3402 = vmatmul.mubr.bf16.gmra.mrb[0].mxu0 %v3185
    %v3403 = vpop.f32.mrb[0].mxu0
    %v3404 = vadd.f32 %v3192, %v3403
    %v3405 = vpop.f32.mrb[0].mxu0
    %v3406 = vadd.f32 %v3196, %v3405
    %v3407 = vpop.f32.mrb[0].mxu0
    %v3408 = vadd.f32 %v3192, %v3407
    %v3409 = vpop.f32.mrb[0].mxu0
    %v3410 = vadd.f32 %v3196, %v3409
    %3411 = vdwg.mxu0
    %3412 = vmatprep.subr.bf16.mxu0 %v3308
    %3413 = vmatpush1.bf16.msra.mxu0 %v3307
    %3414 = vmatprep.subr.bf16.mxu0 %v3312
    %3415 = vmatpush1.bf16.msra.mxu0 %v3311
    %3416 = vmatprep.subr.bf16.mxu0 %v3316
    %3417 = vmatpush1.bf16.msra.mxu0 %v3315
    %3418 = vmatprep.subr.bf16.mxu0 %v3320
    %3419 = vmatpush1.bf16.msra.mxu0 %v3319
    %3420 = vmatprep.subr.bf16.mxu0 %v3324
    %3421 = vmatpush1.bf16.msra.mxu0 %v3323
    %3422 = vmatprep.subr.bf16.mxu0 %v3328
    %3423 = vmatpush1.bf16.msra.mxu0 %v3327
    %3424 = vmatprep.subr.bf16.mxu0 %v3332
    %3425 = vmatpush1.bf16.msra.mxu0 %v3331
    %3426 = vmatprep.subr.bf16.mxu0 %v3336
    %3427 = vmatpush1.bf16.msra.mxu0 %v3335
    %3428 = vmatprep.subr.bf16.mxu0 0
    %3429 = vmatpush1.bf16.msra.mxu0 0
    %3430 = vmatprep.subr.bf16.mxu0 0
    %3431 = vmatpush1.bf16.msra.mxu0 0
    %3432 = vmatprep.subr.bf16.mxu0 0
    %3433 = vmatpush1.bf16.msra.mxu0 0
    %3434 = vmatprep.subr.bf16.mxu0 0
    %3435 = vmatpush1.bf16.msra.mxu0 0
    %3436 = vmatprep.subr.bf16.mxu0 0
    %3437 = vmatpush1.bf16.msra.mxu0 0
    %3438 = vmatprep.subr.bf16.mxu0 0
    %3439 = vmatpush1.bf16.msra.mxu0 0
    %3440 = vmatprep.subr.bf16.mxu0 0
    %3441 = vmatpush1.bf16.msra.mxu0 0
    %3442 = vmatprep.subr.bf16.mxu0 0
    %3443 = vmatpush1.bf16.msra.mxu0 0
    %3444 = vmatprep.mubr.bf16.mxu0 0
    %3445 = vmatmul.mubr.bf16.gmra.mrb[0].mxu0 %v3185
    %v3446 = vpop.f32.mrb[0].mxu0
    %v3447 = vadd.f32 %v3200, %v3446
    %v3448 = vpop.f32.mrb[0].mxu0
    %v3449 = vadd.f32 %v3204, %v3448
    %v3450 = vpop.f32.mrb[0].mxu0
    %v3451 = vadd.f32 %v3200, %v3450
    %v3452 = vpop.f32.mrb[0].mxu0
    %v3453 = vadd.f32 %v3204, %v3452
    %3454 = vdwg.mxu0
    %v3455 = vmul.f32 %v3404, 0.5
    %v3456 = vmul.f32 %v3406, 0.5
    %v3457 = vmul.f32 %v3447, 0.5
    %v3458 = vmul.f32 %v3449, 0.5
    %v3459 = vmul.f32 %v3408, 0.5
    %v3460 = vmul.f32 %v3410, 0.5
    %v3461 = vmul.f32 %v3451, 0.5
    %v3462 = vmul.f32 %v3453, 0.5
    %v3463 = vmul.f32 %v3404, 0.044715
    %v3464 = vmul.f32 %v3406, 0.044715
    %v3465 = vmul.f32 %v3447, 0.044715
    %v3466 = vmul.f32 %v3449, 0.044715
    %v3467 = vmul.f32 %v3408, 0.044715
    %v3468 = vmul.f32 %v3410, 0.044715
    %v3469 = vmul.f32 %v3451, 0.044715
    %v3470 = vmul.f32 %v3453, 0.044715
    %v3471 = vmul.f32 %v3463, %v3404
    %v3472 = vmul.f32 %v3464, %v3406
    %v3473 = vmul.f32 %v3465, %v3447
    %v3474 = vmul.f32 %v3466, %v3449
    %v3475 = vmul.f32 %v3467, %v3408
    %v3476 = vmul.f32 %v3468, %v3410
    %v3477 = vmul.f32 %v3469, %v3451
    %v3478 = vmul.f32 %v3470, %v3453
    %v3479 = vmul.f32 %v3471, %v3404
    %v3480 = vmul.f32 %v3472, %v3406
    %v3481 = vmul.f32 %v3473, %v3447
    %v3482 = vmul.f32 %v3474, %v3449
    %v3483 = vmul.f32 %v3475, %v3408
    %v3484 = vmul.f32 %v3476, %v3410
    %v3485 = vmul.f32 %v3477, %v3451
    %v3486 = vmul.f32 %v3478, %v3453
    %v3487 = vadd.f32 %v3404, %v3479
    %v3488 = vadd.f32 %v3406, %v3480
    %v3489 = vadd.f32 %v3447, %v3481
    %v3490 = vadd.f32 %v3449, %v3482
    %v3491 = vadd.f32 %v3408, %v3483
    %v3492 = vadd.f32 %v3410, %v3484
    %v3493 = vadd.f32 %v3451, %v3485
    %v3494 = vadd.f32 %v3453, %v3486
    %v3495 = vmul.f32 %v3487, 0.7978846
    %v3496 = vmul.f32 %v3488, 0.7978846
    %v3497 = vmul.f32 %v3489, 0.7978846
    %v3498 = vmul.f32 %v3490, 0.7978846
    %v3499 = vmul.f32 %v3491, 0.7978846
    %v3500 = vmul.f32 %v3492, 0.7978846
    %v3501 = vmul.f32 %v3493, 0.7978846
    %v3502 = vmul.f32 %v3494, 0.7978846
    %v3503 = vtanh.pop %v3495
    %v3504 = vtanh.pop %v3496
    %v3505 = vtanh.pop %v3497
    %v3506 = vtanh.pop %v3498
    %v3507 = vtanh.pop %v3499
    %v3508 = vtanh.pop %v3500
    %v3509 = vtanh.pop %v3501
    %v3510 = vtanh.pop %v3502
    %v3511 = vadd.f32 %v3503, 1.0
    %v3512 = vadd.f32 %v3504, 1.0
    %v3513 = vadd.f32 %v3505, 1.0
    %v3514 = vadd.f32 %v3506, 1.0
    %v3515 = vadd.f32 %v3507, 1.0
    %v3516 = vadd.f32 %v3508, 1.0
    %v3517 = vadd.f32 %v3509, 1.0
    %v3518 = vadd.f32 %v3510, 1.0
    %v3519 = vmul.f32 %v3455, %v3511
    %v3520 = vmul.f32 %v3456, %v3512
    %v3521 = vmul.f32 %v3457, %v3513
    %v3522 = vmul.f32 %v3458, %v3514
    %v3523 = vmul.f32 %v3459, %v3515
    %v3524 = vmul.f32 %v3460, %v3516
    %v3525 = vmul.f32 %v3461, %v3517
    %v3526 = vmul.f32 %v3462, %v3518
    %s3527 = scalar_lea.vmem [#allocation9], 256
    %v3528 = vld [vmem:[%s3527] sm:$0xf]
    %v3529 = vld [vmem:[%s3527 + $0x4] sm:$0xf]
    %v3530 = vld [vmem:[%s3527 + $0x8] sm:$0xf]
    %v3531 = vld [vmem:[%s3527 + $0xc] sm:$0xf]
    %v3532 = vld [vmem:[%s3527 + $0x10] sm:$0xf]
    %v3533 = vld [vmem:[%s3527 + $0x14] sm:$0xf]
    %v3534 = vld [vmem:[%s3527 + $0x18] sm:$0xf]
    %v3535 = vld [vmem:[%s3527 + $0x1c] sm:$0xf]
    %v3536 = vld [vmem:[%s3527 + $0x20] sm:$0xf]
    %v3537 = vld [vmem:[%s3527 + $0x24] sm:$0xf]
    %v3538 = vld [vmem:[%s3527 + $0x28] sm:$0xf]
    %v3539 = vld [vmem:[%s3527 + $0x2c] sm:$0xf]
    %v3540 = vld [vmem:[%s3527 + $0x30] sm:$0xf]
    %v3541 = vld [vmem:[%s3527 + $0x34] sm:$0xf]
    %v3542 = vld [vmem:[%s3527 + $0x38] sm:$0xf]
    %v3543 = vld [vmem:[%s3527 + $0x3c] sm:$0xf]
    %v3544 = vld [vmem:[%s3527 + $0x40] sm:$0xf]
    %v3545 = vld [vmem:[%s3527 + $0x44] sm:$0xf]
    %v3546 = vld [vmem:[%s3527 + $0x48] sm:$0xf]
    %v3547 = vld [vmem:[%s3527 + $0x4c] sm:$0xf]
    %v3548 = vld [vmem:[%s3527 + $0x50] sm:$0xf]
    %v3549 = vld [vmem:[%s3527 + $0x54] sm:$0xf]
    %v3550 = vld [vmem:[%s3527 + $0x58] sm:$0xf]
    %v3551 = vld [vmem:[%s3527 + $0x5c] sm:$0xf]
    %v3552 = vld [vmem:[%s3527 + $0x60] sm:$0xf]
    %v3553 = vld [vmem:[%s3527 + $0x64] sm:$0xf]
    %v3554 = vld [vmem:[%s3527 + $0x68] sm:$0xf]
    %v3555 = vld [vmem:[%s3527 + $0x6c] sm:$0xf]
    %v3556 = vld [vmem:[%s3527 + $0x70] sm:$0xf]
    %v3557 = vld [vmem:[%s3527 + $0x74] sm:$0xf]
    %v3558 = vld [vmem:[%s3527 + $0x78] sm:$0xf]
    %v3559 = vld [vmem:[%s3527 + $0x7c] sm:$0xf]
    %v3560 = vld [vmem:[%s3527 + $0x80] sm:$0xf]
    %v3561 = vld [vmem:[%s3527 + $0x84] sm:$0xf]
    %v3562 = vld [vmem:[%s3527 + $0x88] sm:$0xf]
    %v3563 = vld [vmem:[%s3527 + $0x8c] sm:$0xf]
    %v3564 = vld [vmem:[%s3527 + $0x90] sm:$0xf]
    %v3565 = vld [vmem:[%s3527 + $0x94] sm:$0xf]
    %v3566 = vld [vmem:[%s3527 + $0x98] sm:$0xf]
    %v3567 = vld [vmem:[%s3527 + $0x9c] sm:$0xf]
    %v3568 = vld [vmem:[%s3527 + $0xa0] sm:$0xf]
    %v3569 = vld [vmem:[%s3527 + $0xa4] sm:$0xf]
    %v3570 = vld [vmem:[%s3527 + $0xa8] sm:$0xf]
    %v3571 = vld [vmem:[%s3527 + $0xac] sm:$0xf]
    %v3572 = vld [vmem:[%s3527 + $0xb0] sm:$0xf]
    %v3573 = vld [vmem:[%s3527 + $0xb4] sm:$0xf]
    %v3574 = vld [vmem:[%s3527 + $0xb8] sm:$0xf]
    %v3575 = vld [vmem:[%s3527 + $0xbc] sm:$0xf]
    %v3576 = vld [vmem:[%s3527 + $0xc0] sm:$0xf]
    %v3577 = vld [vmem:[%s3527 + $0xc4] sm:$0xf]
    %v3578 = vld [vmem:[%s3527 + $0xc8] sm:$0xf]
    %v3579 = vld [vmem:[%s3527 + $0xcc] sm:$0xf]
    %v3580 = vld [vmem:[%s3527 + $0xd0] sm:$0xf]
    %v3581 = vld [vmem:[%s3527 + $0xd4] sm:$0xf]
    %v3582 = vld [vmem:[%s3527 + $0xd8] sm:$0xf]
    %v3583 = vld [vmem:[%s3527 + $0xdc] sm:$0xf]
    %v3584 = vld [vmem:[%s3527 + $0xe0] sm:$0xf]
    %v3585 = vld [vmem:[%s3527 + $0xe4] sm:$0xf]
    %v3586 = vld [vmem:[%s3527 + $0xe8] sm:$0xf]
    %v3587 = vld [vmem:[%s3527 + $0xec] sm:$0xf]
    %v3588 = vld [vmem:[%s3527 + $0xf0] sm:$0xf]
    %v3589 = vld [vmem:[%s3527 + $0xf4] sm:$0xf]
    %v3590 = vld [vmem:[%s3527 + $0xf8] sm:$0xf]
    %v3591 = vld [vmem:[%s3527 + $0xfc] sm:$0xf]
    %v3592 = vpack.c.bf16 %v3523, %v3519
    %v3593 = vpack.c.bf16 %v3524, %v3520
    %v3594 = vpack.c.bf16 %v3525, %v3521
    %v3595 = vpack.c.bf16 %v3526, %v3522
    %s3596 = scalar_lea.vmem %s15, 1
    %v3597 = vld [vmem:[%s3596] sm:$0x1]
    %v3599 = vlaneseq
    %v3600 = vshrl.u32 %v3599, 7
    %v3601 = vsub.s32 0, %v3600
    %v3602 = vrot.slane %v3597, %v3601
    %v3668 = vunpack.c.l.b16 %v3528
    %v3669 = vunpack.c.l.b16 %v3529
    %v3670 = vunpack.c.l.b16 %v3530
    %v3671 = vunpack.c.l.b16 %v3531
    %v3672 = vunpack.c.l.b16 %v3532
    %v3673 = vunpack.c.l.b16 %v3533
    %v3674 = vunpack.c.l.b16 %v3534
    %v3675 = vunpack.c.l.b16 %v3535
    %v3676 = vunpack.c.l.b16 %v3536
    %v3677 = vunpack.c.l.b16 %v3537
    %v3678 = vunpack.c.l.b16 %v3538
    %v3679 = vunpack.c.l.b16 %v3539
    %v3680 = vunpack.c.l.b16 %v3540
    %v3681 = vunpack.c.l.b16 %v3541
    %v3682 = vunpack.c.l.b16 %v3542
    %v3683 = vunpack.c.l.b16 %v3543
    %v3684 = vunpack.c.l.b16 %v3544
    %v3685 = vunpack.c.l.b16 %v3545
    %v3686 = vunpack.c.l.b16 %v3546
    %v3687 = vunpack.c.l.b16 %v3547
    %v3688 = vunpack.c.l.b16 %v3548
    %v3689 = vunpack.c.l.b16 %v3549
    %v3690 = vunpack.c.l.b16 %v3550
    %v3691 = vunpack.c.l.b16 %v3551
    %v3692 = vunpack.c.l.b16 %v3552
    %v3693 = vunpack.c.l.b16 %v3553
    %v3694 = vunpack.c.l.b16 %v3554
    %v3695 = vunpack.c.l.b16 %v3555
    %v3696 = vunpack.c.l.b16 %v3556
    %v3697 = vunpack.c.l.b16 %v3557
    %v3698 = vunpack.c.l.b16 %v3558
    %v3699 = vunpack.c.l.b16 %v3559
    %v3700 = vunpack.c.l.b16 %v3560
    %v3701 = vunpack.c.l.b16 %v3561
    %v3702 = vunpack.c.l.b16 %v3562
    %v3703 = vunpack.c.l.b16 %v3563
    %v3704 = vunpack.c.l.b16 %v3564
    %v3705 = vunpack.c.l.b16 %v3565
    %v3706 = vunpack.c.l.b16 %v3566
    %v3707 = vunpack.c.l.b16 %v3567
    %v3708 = vunpack.c.l.b16 %v3568
    %v3709 = vunpack.c.l.b16 %v3569
    %v3710 = vunpack.c.l.b16 %v3570
    %v3711 = vunpack.c.l.b16 %v3571
    %v3712 = vunpack.c.l.b16 %v3572
    %v3713 = vunpack.c.l.b16 %v3573
    %v3714 = vunpack.c.l.b16 %v3574
    %v3715 = vunpack.c.l.b16 %v3575
    %v3716 = vunpack.c.l.b16 %v3576
    %v3717 = vunpack.c.l.b16 %v3577
    %v3718 = vunpack.c.l.b16 %v3578
    %v3719 = vunpack.c.l.b16 %v3579
    %v3720 = vunpack.c.l.b16 %v3580
    %v3721 = vunpack.c.l.b16 %v3581
    %v3722 = vunpack.c.l.b16 %v3582
    %v3723 = vunpack.c.l.b16 %v3583
    %v3724 = vunpack.c.l.b16 %v3584
    %v3725 = vunpack.c.l.b16 %v3585
    %v3726 = vunpack.c.l.b16 %v3586
    %v3727 = vunpack.c.l.b16 %v3587
    %v3728 = vunpack.c.l.b16 %v3588
    %v3729 = vunpack.c.l.b16 %v3589
    %v3730 = vunpack.c.l.b16 %v3590
    %v3731 = vunpack.c.l.b16 %v3591
    %v3732 = vpack.c.b16 %v3669, %v3668
    %v3733 = vpack.c.b16 %v3671, %v3670
    %v3734 = vpack.c.b16 %v3673, %v3672
    %v3735 = vpack.c.b16 %v3675, %v3674
    %v3736 = vpack.c.b16 %v3677, %v3676
    %v3737 = vpack.c.b16 %v3679, %v3678
    %v3738 = vpack.c.b16 %v3681, %v3680
    %v3739 = vpack.c.b16 %v3683, %v3682
    %v3740 = vpack.c.b16 %v3685, %v3684
    %v3741 = vpack.c.b16 %v3687, %v3686
    %v3742 = vpack.c.b16 %v3689, %v3688
    %v3743 = vpack.c.b16 %v3691, %v3690
    %v3744 = vpack.c.b16 %v3693, %v3692
    %v3745 = vpack.c.b16 %v3695, %v3694
    %v3746 = vpack.c.b16 %v3697, %v3696
    %v3747 = vpack.c.b16 %v3699, %v3698
    %v3748 = vpack.c.b16 %v3701, %v3700
    %v3749 = vpack.c.b16 %v3703, %v3702
    %v3750 = vpack.c.b16 %v3705, %v3704
    %v3751 = vpack.c.b16 %v3707, %v3706
    %v3752 = vpack.c.b16 %v3709, %v3708
    %v3753 = vpack.c.b16 %v3711, %v3710
    %v3754 = vpack.c.b16 %v3713, %v3712
    %v3755 = vpack.c.b16 %v3715, %v3714
    %v3756 = vpack.c.b16 %v3717, %v3716
    %v3757 = vpack.c.b16 %v3719, %v3718
    %v3758 = vpack.c.b16 %v3721, %v3720
    %v3759 = vpack.c.b16 %v3723, %v3722
    %v3760 = vpack.c.b16 %v3725, %v3724
    %v3761 = vpack.c.b16 %v3727, %v3726
    %v3762 = vpack.c.b16 %v3729, %v3728
    %v3763 = vpack.c.b16 %v3731, %v3730
    %3796 = vmatprep.subr.bf16.mxu0 0
    %3797 = vmatpush1.bf16.msra.mxu0 %v3732
    %3798 = vmatprep.subr.bf16.mxu0 0
    %3799 = vmatpush1.bf16.msra.mxu0 %v3733
    %3800 = vmatprep.subr.bf16.mxu0 0
    %3801 = vmatpush1.bf16.msra.mxu0 %v3734
    %3802 = vmatprep.subr.bf16.mxu0 0
    %3803 = vmatpush1.bf16.msra.mxu0 %v3735
    %3804 = vmatprep.subr.bf16.mxu0 0
    %3805 = vmatpush1.bf16.msra.mxu0 %v3736
    %3806 = vmatprep.subr.bf16.mxu0 0
    %3807 = vmatpush1.bf16.msra.mxu0 %v3737
    %3808 = vmatprep.subr.bf16.mxu0 0
    %3809 = vmatpush1.bf16.msra.mxu0 %v3738
    %3810 = vmatprep.subr.bf16.mxu0 0
    %3811 = vmatpush1.bf16.msra.mxu0 %v3739
    %3812 = vmatprep.subr.bf16.mxu0 0
    %3813 = vmatpush1.bf16.msra.mxu0 %v3740
    %3814 = vmatprep.subr.bf16.mxu0 0
    %3815 = vmatpush1.bf16.msra.mxu0 %v3741
    %3816 = vmatprep.subr.bf16.mxu0 0
    %3817 = vmatpush1.bf16.msra.mxu0 %v3742
    %3818 = vmatprep.subr.bf16.mxu0 0
    %3819 = vmatpush1.bf16.msra.mxu0 %v3743
    %3820 = vmatprep.subr.bf16.mxu0 0
    %3821 = vmatpush1.bf16.msra.mxu0 %v3744
    %3822 = vmatprep.subr.bf16.mxu0 0
    %3823 = vmatpush1.bf16.msra.mxu0 %v3745
    %3824 = vmatprep.subr.bf16.mxu0 0
    %3825 = vmatpush1.bf16.msra.mxu0 %v3746
    %3826 = vmatprep.subr.bf16.mxu0 0
    %3827 = vmatpush1.bf16.msra.mxu0 %v3747
    %3828 = vmatprep.mubr.bf16.mxu0 %v3593
    %3829 = vmatmul.mubr.bf16.gmra.mrb[0].mxu0 %v3592
    %v3830 = vpop.f32.mrb[0].mxu0
    %v3831 = vadd.f32 %v3602, %v3830
    %v3832 = vpop.f32.mrb[0].mxu0
    %v3833 = vpop.f32.mrb[0].mxu0
    %v3834 = vadd.f32 %v3602, %v3833
    %v3835 = vpop.f32.mrb[0].mxu0
    %3836 = vdwg.mxu0
    %3837 = vmatprep.subr.bf16.mxu0 0
    %3838 = vmatpush1.bf16.msra.mxu0 %v3748
    %3839 = vmatprep.subr.bf16.mxu0 0
    %3840 = vmatpush1.bf16.msra.mxu0 %v3749
    %3841 = vmatprep.subr.bf16.mxu0 0
    %3842 = vmatpush1.bf16.msra.mxu0 %v3750
    %3843 = vmatprep.subr.bf16.mxu0 0
    %3844 = vmatpush1.bf16.msra.mxu0 %v3751
    %3845 = vmatprep.subr.bf16.mxu0 0
    %3846 = vmatpush1.bf16.msra.mxu0 %v3752
    %3847 = vmatprep.subr.bf16.mxu0 0
    %3848 = vmatpush1.bf16.msra.mxu0 %v3753
    %3849 = vmatprep.subr.bf16.mxu0 0
    %3850 = vmatpush1.bf16.msra.mxu0 %v3754
    %3851 = vmatprep.subr.bf16.mxu0 0
    %3852 = vmatpush1.bf16.msra.mxu0 %v3755
    %3853 = vmatprep.subr.bf16.mxu0 0
    %3854 = vmatpush1.bf16.msra.mxu0 %v3756
    %3855 = vmatprep.subr.bf16.mxu0 0
    %3856 = vmatpush1.bf16.msra.mxu0 %v3757
    %3857 = vmatprep.subr.bf16.mxu0 0
    %3858 = vmatpush1.bf16.msra.mxu0 %v3758
    %3859 = vmatprep.subr.bf16.mxu0 0
    %3860 = vmatpush1.bf16.msra.mxu0 %v3759
    %3861 = vmatprep.subr.bf16.mxu0 0
    %3862 = vmatpush1.bf16.msra.mxu0 %v3760
    %3863 = vmatprep.subr.bf16.mxu0 0
    %3864 = vmatpush1.bf16.msra.mxu0 %v3761
    %3865 = vmatprep.subr.bf16.mxu0 0
    %3866 = vmatpush1.bf16.msra.mxu0 %v3762
    %3867 = vmatprep.subr.bf16.mxu0 0
    %3868 = vmatpush1.bf16.msra.mxu0 %v3763
    %3869 = vmatprep.mubr.bf16.mxu0 %v3595
    %3870 = vmatmul.mubr.bf16.gmra.mrb[0].mxu0 %v3594
    %v3871 = vpop.f32.mrb[0].mxu0
    %v3872 = vadd.f32 %v3831, %v3871
    %v3873 = vpop.f32.mrb[0].mxu0
    %v3874 = vpop.f32.mrb[0].mxu0
    %v3875 = vadd.f32 %v3834, %v3874
    %v3876 = vpop.f32.mrb[0].mxu0
    %3877 = vdwg.mxu0
    %v3878 = vadd.f32 %v3150, %v3872
    %v3879 = vadd.f32 %v3151, %v3875
    %s3880 = scalar_lea.vmem %s16, 1
    %v3881 = vld [vmem:[%s3880] sm:$0x1]
    %s3882 = scalar_lea.vmem %s17, 1
    %v3883 = vld [vmem:[%s3882] sm:$0x1]
    %3884 = vadd.xlane.f32.xlu0 %v3878
    %v3885 = vpop.xlane.xlu0 %3884
    %3886 = vadd.xlane.f32.xlu0 %v3879
    %v3887 = vpop.xlane.xlu0 %3886
    %v3888 = vmul.f32 %v3885, %v152
    %v3889 = vmul.f32 %v3887, %v152
    %v3890 = vsub.f32 %v3878, %v3888
    %v3891 = vsub.f32 %v3879, %v3889
    %v3892 = vmul.f32 %v3890, %v3890
    %v3893 = vmul.f32 %v3891, %v3891
    %3894 = vadd.xlane.f32.xlu0 %v3892
    %v3895 = vpop.xlane.xlu0 %3894
    %3896 = vadd.xlane.f32.xlu0 %v3893
    %v3897 = vpop.xlane.xlu0 %3896
    %v3898 = vmul.f32 %v3895, %v152
    %v3899 = vmul.f32 %v3897, %v152
    %v3900 = vadd.f32 %v3898, 1e-12
    %v3901 = vadd.f32 %v3899, 1e-12
    %v3902 = vrsqrt.pop %v3900
    %v3903 = vrsqrt.pop %v3901
    %v3904 = vmul.f32 %v3890, %v3902
    %v3905 = vmul.f32 %v3891, %v3903
    %v3907 = vlaneseq
    %v3908 = vshrl.u32 %v3907, 7
    %v3909 = vsub.s32 0, %v3908
    %v3910 = vrot.slane %v3881, %v3909
    %v3912 = vmul.f32 %v3904, %v3910
    %v3913 = vmul.f32 %v3905, %v3910
    %v3915 = vlaneseq
    %v3916 = vshrl.u32 %v3915, 7
    %v3917 = vsub.s32 0, %v3916
    %v3918 = vrot.slane %v3883, %v3917
    %v3920 = vadd.f32 %v3912, %v3918
    %v3921 = vadd.f32 %v3913, %v3918
    %v3923 = vrot.slane %v3921, 7
    %vm3925 = vcmask 1040384
    %v3926 = vsel %vm3925, %v3920, %v3923
    %v3927 = vld [vmem:[%s18] sm:$0xf]
    %v3928 = vld [vmem:[%s18 + $0x4] sm:$0xf]
    %v3929 = vld [vmem:[%s18 + $0x8] sm:$0xf]
    %v3930 = vld [vmem:[%s18 + $0xc] sm:$0xf]
    %v3931 = vld [vmem:[%s18 + $0x10] sm:$0xf]
    %v3932 = vld [vmem:[%s18 + $0x14] sm:$0xf]
    %v3933 = vld [vmem:[%s18 + $0x18] sm:$0xf]
    %v3934 = vld [vmem:[%s18 + $0x1c] sm:$0xf]
    %v3935 = vld [vmem:[%s18 + $0x20] sm:$0xf]
    %v3936 = vld [vmem:[%s18 + $0x24] sm:$0xf]
    %v3937 = vld [vmem:[%s18 + $0x28] sm:$0xf]
    %v3938 = vld [vmem:[%s18 + $0x2c] sm:$0xf]
    %v3939 = vld [vmem:[%s18 + $0x30] sm:$0xf]
    %v3940 = vld [vmem:[%s18 + $0x34] sm:$0xf]
    %v3941 = vld [vmem:[%s18 + $0x38] sm:$0xf]
    %v3942 = vld [vmem:[%s18 + $0x3c] sm:$0xf]
    %v3943 = vpack.c.bf16 %v3926, %v3926
    %v3944 = vld [vmem:[%s19] sm:$0x1]
    %v3946 = vlaneseq
    %v3947 = vshrl.u32 %v3946, 7
    %v3948 = vsub.s32 0, %v3947
    %v3949 = vrot.slane %v3944, %v3948
    %v3967 = vunpack.c.l.b16 %v3927
    %v3968 = vunpack.c.l.b16 %v3928
    %v3969 = vunpack.c.l.b16 %v3929
    %v3970 = vunpack.c.l.b16 %v3930
    %v3971 = vunpack.c.l.b16 %v3931
    %v3972 = vunpack.c.l.b16 %v3932
    %v3973 = vunpack.c.l.b16 %v3933
    %v3974 = vunpack.c.l.b16 %v3934
    %v3975 = vunpack.c.l.b16 %v3935
    %v3976 = vunpack.c.l.b16 %v3936
    %v3977 = vunpack.c.l.b16 %v3937
    %v3978 = vunpack.c.l.b16 %v3938
    %v3979 = vunpack.c.l.b16 %v3939
    %v3980 = vunpack.c.l.b16 %v3940
    %v3981 = vunpack.c.l.b16 %v3941
    %v3982 = vunpack.c.l.b16 %v3942
    %v3983 = vpack.c.b16 %v3968, %v3967
    %v3984 = vpack.c.b16 %v3970, %v3969
    %v3985 = vpack.c.b16 %v3972, %v3971
    %v3986 = vpack.c.b16 %v3974, %v3973
    %v3987 = vpack.c.b16 %v3976, %v3975
    %v3988 = vpack.c.b16 %v3978, %v3977
    %v3989 = vpack.c.b16 %v3980, %v3979
    %v3990 = vpack.c.b16 %v3982, %v3981
    %3999 = vmatprep.subr.bf16.mxu0 0
    %4000 = vmatpush1.bf16.msra.mxu0 %v3983
    %4001 = vmatprep.subr.bf16.mxu0 0
    %4002 = vmatpush1.bf16.msra.mxu0 %v3984
    %4003 = vmatprep.subr.bf16.mxu0 0
    %4004 = vmatpush1.bf16.msra.mxu0 %v3985
    %4005 = vmatprep.subr.bf16.mxu0 0
    %4006 = vmatpush1.bf16.msra.mxu0 %v3986
    %4007 = vmatprep.subr.bf16.mxu0 0
    %4008 = vmatpush1.bf16.msra.mxu0 %v3987
    %4009 = vmatprep.subr.bf16.mxu0 0
    %4010 = vmatpush1.bf16.msra.mxu0 %v3988
    %4011 = vmatprep.subr.bf16.mxu0 0
    %4012 = vmatpush1.bf16.msra.mxu0 %v3989
    %4013 = vmatprep.subr.bf16.mxu0 0
    %4014 = vmatpush1.bf16.msra.mxu0 %v3990
    %4015 = vmatprep.subr.bf16.mxu0 0
    %4016 = vmatpush1.bf16.msra.mxu0 0
    %4017 = vmatprep.subr.bf16.mxu0 0
    %4018 = vmatpush1.bf16.msra.mxu0 0
    %4019 = vmatprep.subr.bf16.mxu0 0
    %4020 = vmatpush1.bf16.msra.mxu0 0
    %4021 = vmatprep.subr.bf16.mxu0 0
    %4022 = vmatpush1.bf16.msra.mxu0 0
    %4023 = vmatprep.subr.bf16.mxu0 0
    %4024 = vmatpush1.bf16.msra.mxu0 0
    %4025 = vmatprep.subr.bf16.mxu0 0
    %4026 = vmatpush1.bf16.msra.mxu0 0
    %4027 = vmatprep.subr.bf16.mxu0 0
    %4028 = vmatpush1.bf16.msra.mxu0 0
    %4029 = vmatprep.subr.bf16.mxu0 0
    %4030 = vmatpush1.bf16.msra.mxu0 0
    %4031 = vmatprep.mubr.bf16.mxu0 0
    %4032 = vmatmul.mubr.bf16.gmra.mrb[0].mxu0 %v3943
    %v4033 = vpop.f32.mrb[0].mxu0
    %v4034 = vadd.f32 %v3949, %v4033
    %v4035 = vpop.f32.mrb[0].mxu0
    %v4036 = vpop.f32.mrb[0].mxu0
    %v4037 = vpop.f32.mrb[0].mxu0
    %4038 = vdwg.mxu0
    %v4039 = vtanh.pop %v4034
    %v4040 = vld [vmem:[%s20] sm:$0xf]
    %v4041 = vld [vmem:[%s20 + $0x4] sm:$0xf]
    %v4042 = vld [vmem:[%s20 + $0x8] sm:$0xf]
    %v4043 = vld [vmem:[%s20 + $0xc] sm:$0xf]
    %v4044 = vld [vmem:[%s20 + $0x10] sm:$0xf]
    %v4045 = vld [vmem:[%s20 + $0x14] sm:$0xf]
    %v4046 = vld [vmem:[%s20 + $0x18] sm:$0xf]
    %v4047 = vld [vmem:[%s20 + $0x1c] sm:$0xf]
    %v4048 = vld [vmem:[%s20 + $0x20] sm:$0xf]
    %v4049 = vld [vmem:[%s20 + $0x24] sm:$0xf]
    %v4050 = vld [vmem:[%s20 + $0x28] sm:$0xf]
    %v4051 = vld [vmem:[%s20 + $0x2c] sm:$0xf]
    %v4052 = vld [vmem:[%s20 + $0x30] sm:$0xf]
    %v4053 = vld [vmem:[%s20 + $0x34] sm:$0xf]
    %v4054 = vld [vmem:[%s20 + $0x38] sm:$0xf]
    %v4055 = vld [vmem:[%s20 + $0x3c] sm:$0xf]
    %v4056 = vpack.c.bf16 %v4039, %v4039
    %v4057 = vld [vmem:[%s21] sm:$0x1]
    %v4059 = vlaneseq
    %v4060 = vshrl.u32 %v4059, 7
    %v4061 = vsub.s32 0, %v4060
    %v4062 = vrot.slane %v4057, %v4061
    %v4080 = vunpack.c.l.b16 %v4040
    %v4081 = vunpack.c.l.b16 %v4041
    %v4082 = vunpack.c.l.b16 %v4042
    %v4083 = vunpack.c.l.b16 %v4043
    %v4084 = vunpack.c.l.b16 %v4044
    %v4085 = vunpack.c.l.b16 %v4045
    %v4086 = vunpack.c.l.b16 %v4046
    %v4087 = vunpack.c.l.b16 %v4047
    %v4088 = vunpack.c.l.b16 %v4048
    %v4089 = vunpack.c.l.b16 %v4049
    %v4090 = vunpack.c.l.b16 %v4050
    %v4091 = vunpack.c.l.b16 %v4051
    %v4092 = vunpack.c.l.b16 %v4052
    %v4093 = vunpack.c.l.b16 %v4053
    %v4094 = vunpack.c.l.b16 %v4054
    %v4095 = vunpack.c.l.b16 %v4055
    %v4096 = vpack.c.b16 %v4081, %v4080
    %v4097 = vpack.c.b16 %v4083, %v4082
    %v4098 = vpack.c.b16 %v4085, %v4084
    %v4099 = vpack.c.b16 %v4087, %v4086
    %v4100 = vpack.c.b16 %v4089, %v4088
    %v4101 = vpack.c.b16 %v4091, %v4090
    %v4102 = vpack.c.b16 %v4093, %v4092
    %v4103 = vpack.c.b16 %v4095, %v4094
    %4112 = vmatprep.subr.bf16.mxu0 0
    %4113 = vmatpush1.bf16.msra.mxu0 %v4096
    %4114 = vmatprep.subr.bf16.mxu0 0
    %4115 = vmatpush1.bf16.msra.mxu0 %v4097
    %4116 = vmatprep.subr.bf16.mxu0 0
    %4117 = vmatpush1.bf16.msra.mxu0 %v4098
    %4118 = vmatprep.subr.bf16.mxu0 0
    %4119 = vmatpush1.bf16.msra.mxu0 %v4099
    %4120 = vmatprep.subr.bf16.mxu0 0
    %4121 = vmatpush1.bf16.msra.mxu0 %v4100
    %4122 = vmatprep.subr.bf16.mxu0 0
    %4123 = vmatpush1.bf16.msra.mxu0 %v4101
    %4124 = vmatprep.subr.bf16.mxu0 0
    %4125 = vmatpush1.bf16.msra.mxu0 %v4102
    %4126 = vmatprep.subr.bf16.mxu0 0
    %4127 = vmatpush1.bf16.msra.mxu0 %v4103
    %4128 = vmatprep.subr.bf16.mxu0 0
    %4129 = vmatpush1.bf16.msra.mxu0 0
    %4130 = vmatprep.subr.bf16.mxu0 0
    %4131 = vmatpush1.bf16.msra.mxu0 0
    %4132 = vmatprep.subr.bf16.mxu0 0
    %4133 = vmatpush1.bf16.msra.mxu0 0
    %4134 = vmatprep.subr.bf16.mxu0 0
    %4135 = vmatpush1.bf16.msra.mxu0 0
    %4136 = vmatprep.subr.bf16.mxu0 0
    %4137 = vmatpush1.bf16.msra.mxu0 0
    %4138 = vmatprep.subr.bf16.mxu0 0
    %4139 = vmatpush1.bf16.msra.mxu0 0
    %4140 = vmatprep.subr.bf16.mxu0 0
    %4141 = vmatpush1.bf16.msra.mxu0 0
    %4142 = vmatprep.subr.bf16.mxu0 0
    %4143 = vmatpush1.bf16.msra.mxu0 0
    %4144 = vmatprep.mubr.bf16.mxu0 0
    %4145 = vmatmul.mubr.bf16.gmra.mrb[0].mxu0 %v4056
    %v4146 = vpop.f32.mrb[0].mxu0
    %v4147 = vadd.f32 %v4062, %v4146
    %v4148 = vpop.f32.mrb[0].mxu0
    %v4149 = vpop.f32.mrb[0].mxu0
    %v4150 = vpop.f32.mrb[0].mxu0
    %4151 = vdwg.mxu0
    %v4152 = vld [vmem:[%s22] sm:$0xf]
    %v4153 = vld [vmem:[%s22 + $0x4] sm:$0xf]
    %v4154 = vld [vmem:[%s22 + $0x8] sm:$0xf]
    %v4155 = vld [vmem:[%s22 + $0xc] sm:$0xf]
    %v4156 = vld [vmem:[%s22 + $0x10] sm:$0xf]
    %v4157 = vld [vmem:[%s22 + $0x14] sm:$0xf]
    %v4158 = vld [vmem:[%s22 + $0x18] sm:$0xf]
    %v4159 = vld [vmem:[%s22 + $0x1c] sm:$0xf]
    %v4160 = vld [vmem:[%s22 + $0x20] sm:$0xf]
    %v4161 = vld [vmem:[%s22 + $0x24] sm:$0xf]
    %v4162 = vld [vmem:[%s22 + $0x28] sm:$0xf]
    %v4163 = vld [vmem:[%s22 + $0x2c] sm:$0xf]
    %v4164 = vld [vmem:[%s22 + $0x30] sm:$0xf]
    %v4165 = vld [vmem:[%s22 + $0x34] sm:$0xf]
    %v4166 = vld [vmem:[%s22 + $0x38] sm:$0xf]
    %v4167 = vld [vmem:[%s22 + $0x3c] sm:$0xf]
    %v4168 = vld [vmem:[%s23] sm:$0x1]
    %v4170 = vlaneseq
    %v4171 = vshrl.u32 %v4170, 7
    %v4172 = vsub.s32 0, %v4171
    %v4173 = vrot.slane %v4168, %v4172
    %v4191 = vunpack.c.l.b16 %v4152
    %v4192 = vunpack.c.l.b16 %v4153
    %v4193 = vunpack.c.l.b16 %v4154
    %v4194 = vunpack.c.l.b16 %v4155
    %v4195 = vunpack.c.l.b16 %v4156
    %v4196 = vunpack.c.l.b16 %v4157
    %v4197 = vunpack.c.l.b16 %v4158
    %v4198 = vunpack.c.l.b16 %v4159
    %v4199 = vunpack.c.l.b16 %v4160
    %v4200 = vunpack.c.l.b16 %v4161
    %v4201 = vunpack.c.l.b16 %v4162
    %v4202 = vunpack.c.l.b16 %v4163
    %v4203 = vunpack.c.l.b16 %v4164
    %v4204 = vunpack.c.l.b16 %v4165
    %v4205 = vunpack.c.l.b16 %v4166
    %v4206 = vunpack.c.l.b16 %v4167
    %v4207 = vpack.c.b16 %v4192, %v4191
    %v4208 = vpack.c.b16 %v4194, %v4193
    %v4209 = vpack.c.b16 %v4196, %v4195
    %v4210 = vpack.c.b16 %v4198, %v4197
    %v4211 = vpack.c.b16 %v4200, %v4199
    %v4212 = vpack.c.b16 %v4202, %v4201
    %v4213 = vpack.c.b16 %v4204, %v4203
    %v4214 = vpack.c.b16 %v4206, %v4205
    %4223 = vmatprep.subr.bf16.mxu0 0
    %4224 = vmatpush1.bf16.msra.mxu0 %v4207
    %4225 = vmatprep.subr.bf16.mxu0 0
    %4226 = vmatpush1.bf16.msra.mxu0 %v4208
    %4227 = vmatprep.subr.bf16.mxu0 0
    %4228 = vmatpush1.bf16.msra.mxu0 %v4209
    %4229 = vmatprep.subr.bf16.mxu0 0
    %4230 = vmatpush1.bf16.msra.mxu0 %v4210
    %4231 = vmatprep.subr.bf16.mxu0 0
    %4232 = vmatpush1.bf16.msra.mxu0 %v4211
    %4233 = vmatprep.subr.bf16.mxu0 0
    %4234 = vmatpush1.bf16.msra.mxu0 %v4212
    %4235 = vmatprep.subr.bf16.mxu0 0
    %4236 = vmatpush1.bf16.msra.mxu0 %v4213
    %4237 = vmatprep.subr.bf16.mxu0 0
    %4238 = vmatpush1.bf16.msra.mxu0 %v4214
    %4239 = vmatprep.subr.bf16.mxu0 0
    %4240 = vmatpush1.bf16.msra.mxu0 0
    %4241 = vmatprep.subr.bf16.mxu0 0
    %4242 = vmatpush1.bf16.msra.mxu0 0
    %4243 = vmatprep.subr.bf16.mxu0 0
    %4244 = vmatpush1.bf16.msra.mxu0 0
    %4245 = vmatprep.subr.bf16.mxu0 0
    %4246 = vmatpush1.bf16.msra.mxu0 0
    %4247 = vmatprep.subr.bf16.mxu0 0
    %4248 = vmatpush1.bf16.msra.mxu0 0
    %4249 = vmatprep.subr.bf16.mxu0 0
    %4250 = vmatpush1.bf16.msra.mxu0 0
    %4251 = vmatprep.subr.bf16.mxu0 0
    %4252 = vmatpush1.bf16.msra.mxu0 0
    %4253 = vmatprep.subr.bf16.mxu0 0
    %4254 = vmatpush1.bf16.msra.mxu0 0
    %4255 = vmatprep.mubr.bf16.mxu0 0
    %4256 = vmatmul.mubr.bf16.gmra.mrb[0].mxu0 %v4056
    %v4257 = vpop.f32.mrb[0].mxu0
    %v4258 = vadd.f32 %v4173, %v4257
    %v4259 = vpop.f32.mrb[0].mxu0
    %v4260 = vpop.f32.mrb[0].mxu0
    %v4261 = vpop.f32.mrb[0].mxu0
    %4262 = vdwg.mxu0
    %v4263 = vmul.f32 %v4258, 0.5
    %v4264 = vmul.f32 %v4263, 1.442695
    %v4265 = vpow.pop %v4264
    %v4266 = vld [vmem:[%s4] sm:$0x3]
    %v4267 = vmul.f32 %v4265, %v4266
    %v4268 = vadd.f32 %v4147, %v4267
    %4269 = vst [vmem:[#allocation12] sm:$0x3] %v4268
    %v4270 = vadd.f32 %v4258, 1.0
    %v4271 = vmul.f32 %v4147, %v4147
    %v4272 = vsub.f32 %v4270, %v4271
    %v4273 = vmul.f32 %v4258, 1.442695
    %v4274 = vpow.pop %v4273
    %v4275 = vsub.f32 %v4272, %v4274
    %vm4276 = vcmask 1041408
    %v4277 = vsel %vm4276, %v4275, 0.0
    %4278 = vadd.xlane.f32.xlu0 %v4277
    %v4279 = vpop.xlane.xlu0 %4278
    %v4280 = vmul.f32 %v4279, -0.5
    %v4281 = vsel %vm4276, %v4280, 0.0
    %v4282 = vrot.slane %v4281, 4
    %v4283 = vadd.f32 %v4281, %v4282
    %v4284 = vrot.slane %v4283, 2
    %v4285 = vadd.f32 %v4283, %v4284
    %v4286 = vrot.slane %v4285, 1
    %v4287 = vadd.f32 %v4285, %v4286
    %v4288 = vrcp.pop 2.0
    %v4289 = vmul.f32 %v4287, %v4288
    %v4290 = vmul.f32 %v4289, 0.001
    %v4291 = vld [vmem:[%s24] sm:$0xf]
    %v4292 = vld [vmem:[%s24 + $0x4] sm:$0xf]
    %v4293 = vld [vmem:[%s24 + $0x8] sm:$0xf]
    %v4294 = vld [vmem:[%s24 + $0xc] sm:$0xf]
    %v4295 = vld [vmem:[%s24 + $0x10] sm:$0xf]
    %v4296 = vld [vmem:[%s24 + $0x14] sm:$0xf]
    %v4297 = vld [vmem:[%s24 + $0x18] sm:$0xf]
    %v4298 = vld [vmem:[%s24 + $0x1c] sm:$0xf]
    %v4299 = vld [vmem:[%s24 + $0x20] sm:$0xf]
    %v4300 = vld [vmem:[%s24 + $0x24] sm:$0xf]
    %v4301 = vld [vmem:[%s24 + $0x28] sm:$0xf]
    %v4302 = vld [vmem:[%s24 + $0x2c] sm:$0xf]
    %v4303 = vld [vmem:[%s24 + $0x30] sm:$0xf]
    %v4304 = vld [vmem:[%s24 + $0x34] sm:$0xf]
    %v4305 = vld [vmem:[%s24 + $0x38] sm:$0xf]
    %v4306 = vld [vmem:[%s24 + $0x3c] sm:$0xf]
    %v4307 = vpack.c.bf16 %v4268, %v4268
    %v4308 = vld [vmem:[%s25] sm:$0x1]
    %v4310 = vlaneseq
    %v4311 = vshrl.u32 %v4310, 7
    %v4312 = vsub.s32 0, %v4311
    %v4313 = vrot.slane %v4308, %v4312
    %v4331 = vunpack.c.l.b16 %v4291
    %v4332 = vunpack.c.l.b16 %v4292
    %v4333 = vunpack.c.l.b16 %v4293
    %v4334 = vunpack.c.l.b16 %v4294
    %v4335 = vunpack.c.l.b16 %v4295
    %v4336 = vunpack.c.l.b16 %v4296
    %v4337 = vunpack.c.l.b16 %v4297
    %v4338 = vunpack.c.l.b16 %v4298
    %v4339 = vunpack.c.l.b16 %v4299
    %v4340 = vunpack.c.l.b16 %v4300
    %v4341 = vunpack.c.l.b16 %v4301
    %v4342 = vunpack.c.l.b16 %v4302
    %v4343 = vunpack.c.l.b16 %v4303
    %v4344 = vunpack.c.l.b16 %v4304
    %v4345 = vunpack.c.l.b16 %v4305
    %v4346 = vunpack.c.l.b16 %v4306
    %v4347 = vpack.c.b16 %v4332, %v4331
    %v4348 = vpack.c.b16 %v4334, %v4333
    %v4349 = vpack.c.b16 %v4336, %v4335
    %v4350 = vpack.c.b16 %v4338, %v4337
    %v4351 = vpack.c.b16 %v4340, %v4339
    %v4352 = vpack.c.b16 %v4342, %v4341
    %v4353 = vpack.c.b16 %v4344, %v4343
    %v4354 = vpack.c.b16 %v4346, %v4345
    %4363 = vmatprep.subr.bf16.mxu0 0
    %4364 = vmatpush1.bf16.msra.mxu0 %v4347
    %4365 = vmatprep.subr.bf16.mxu0 0
    %4366 = vmatpush1.bf16.msra.mxu0 %v4348
    %4367 = vmatprep.subr.bf16.mxu0 0
    %4368 = vmatpush1.bf16.msra.mxu0 %v4349
    %4369 = vmatprep.subr.bf16.mxu0 0
    %4370 = vmatpush1.bf16.msra.mxu0 %v4350
    %4371 = vmatprep.subr.bf16.mxu0 0
    %4372 = vmatpush1.bf16.msra.mxu0 %v4351
    %4373 = vmatprep.subr.bf16.mxu0 0
    %4374 = vmatpush1.bf16.msra.mxu0 %v4352
    %4375 = vmatprep.subr.bf16.mxu0 0
    %4376 = vmatpush1.bf16.msra.mxu0 %v4353
    %4377 = vmatprep.subr.bf16.mxu0 0
    %4378 = vmatpush1.bf16.msra.mxu0 %v4354
    %4379 = vmatprep.subr.bf16.mxu0 0
    %4380 = vmatpush1.bf16.msra.mxu0 0
    %4381 = vmatprep.subr.bf16.mxu0 0
    %4382 = vmatpush1.bf16.msra.mxu0 0
    %4383 = vmatprep.subr.bf16.mxu0 0
    %4384 = vmatpush1.bf16.msra.mxu0 0
    %4385 = vmatprep.subr.bf16.mxu0 0
    %4386 = vmatpush1.bf16.msra.mxu0 0
    %4387 = vmatprep.subr.bf16.mxu0 0
    %4388 = vmatpush1.bf16.msra.mxu0 0
    %4389 = vmatprep.subr.bf16.mxu0 0
    %4390 = vmatpush1.bf16.msra.mxu0 0
    %4391 = vmatprep.subr.bf16.mxu0 0
    %4392 = vmatpush1.bf16.msra.mxu0 0
    %4393 = vmatprep.subr.bf16.mxu0 0
    %4394 = vmatpush1.bf16.msra.mxu0 0
    %4395 = vmatprep.mubr.bf16.mxu0 0
    %4396 = vmatmul.mubr.bf16.gmra.mrb[0].mxu0 %v4307
    %v4397 = vpop.f32.mrb[0].mxu0
    %v4398 = vadd.f32 %v4313, %v4397
    %v4399 = vpop.f32.mrb[0].mxu0
    %v4400 = vpop.f32.mrb[0].mxu0
    %v4401 = vpop.f32.mrb[0].mxu0
    %4402 = vdwg.mxu0
    %4403 = vst [vmem:[#allocation11] sm:$0x3] %v4398
    %v4404 = vlaneseq
    %v4405 = vand.u32 %v4404, 127
    %vm4406 = vcmp.lt.s32.totalorder %v4405, 16
    %v4407 = vsel %vm4406, %v4398, -1e+09
    %v4408 = vsel %vm4276, %v4407, -inf
    %4409 = vmax.xlane.f32.xlu0 %v4408
    %v4410 = vpop.xlane.xlu0 %4409
    %v4411 = vsub.f32 %v4407, %v4410
    %v4412 = vmul.f32 %v4411, 1.442695
    %v4413 = vpow.pop %v4412
    %v4414 = vsel %vm4276, %v4413, 0.0
    %4415 = vadd.xlane.f32.xlu0 %v4414
    %v4416 = vpop.xlane.xlu0 %4415
    %v4417 = vlog2.pop %v4416
    %v4418 = vmul.f32 %v4417, 0.6931472
    %v4419 = vadd.f32 %v4418, %v4410
    %v4420 = vld [vmem:[%s5] sm:$0x3]
    %4421 = vset.pattern.permute.xlu0 0
    %4422 = vperm.xlu0 %4421, %v4420
    %v4423 = vpop.permute.xlu0 %4422
    %vm4424 = vcmp.eq.s32.totalorder %v4405, %v4423
    %v4425 = vsel %vm4424, 1, 0
    %v4426 = vcvt.s32.f32 %v4425
    %v4427 = vmul.f32 %v4398, %v4426
    %v4428 = vsel %vm4276, %v4427, 0.0
    %4429 = vadd.xlane.f32.xlu0 %v4428
    %v4430 = vpop.xlane.xlu0 %4429
    %v4431 = vsub.f32 %v4419, %v4430
    %v4432 = vsel %vm4276, %v4431, 0.0
    %v4433 = vrot.slane %v4432, 4
    %v4434 = vadd.f32 %v4432, %v4433
    %v4435 = vrot.slane %v4434, 2
    %v4436 = vadd.f32 %v4434, %v4435
    %v4437 = vrot.slane %v4436, 1
    %v4438 = vadd.f32 %v4436, %v4437
    %v4439 = vmul.f32 %v4438, %v4288
    %v4440 = vadd.f32 %v4439, %v4290
    %vm4441 = vcmp.eq.s32.totalorder %v4405, 0
    %v4442 = vsel %vm4441, %v4439, 0.0
    %vm4443 = vcmp.eq.s32.totalorder %v4405, 1
    %v4444 = vsel %vm4443, %v4290, 0.0
    %v4445 = vadd.f32 %v4442, %v4444
    %vm4446 = vcmp.eq.s32.totalorder %v4405, 2
    %v4447 = vsel %vm4446, %v4440, 0.0
    %v4448 = vadd.f32 %v4445, %v4447
    %4449 = vst [vmem:[%s28] sm:$0x1] %v4448
    // Predicated region
    $region122: #{forward.1} parent=1 // pred_check
      _
    $region123: #{forward.1} parent=1 // pred_check_branch
      %4451 = sbr.rel (0) target = $region125
    $region124: #{forward.1} parent=1 // pred_region
      %s4453 = ssub.s32 32, 32
      %4454 = vsyncadd [#allocation5], %s4453
      %s4456 = sshll.u32 [#allocation11], 4
      %s4457 = int_to_ptr.vmem [resolvable:$true] %s4456
      %4459 = dma.vmem_to_hbm [thread:$0]  %s4457, 32, %s26, [#allocation5]
    $region125: #{forward.1} parent=1 // pred_fallthru
      _
    // Predicated region
    $region126: #{forward.1} parent=1 // pred_check
      _
    $region127: #{forward.1} parent=1 // pred_check_branch
      %4461 = sbr.rel (0) target = $region129
    $region128: #{forward.1} parent=1 // pred_region
      %s4463 = ssub.s32 32, 32
      %4464 = vsyncadd [#allocation13], %s4463
      %s4466 = sshll.u32 [#allocation12], 4
      %s4467 = int_to_ptr.vmem [resolvable:$true] %s4466
      %4469 = dma.vmem_to_hbm [thread:$0]  %s4467, 32, %s27, [#allocation13]
    $region129: #{forward.1} parent=1 // pred_fallthru
      _
    // Predicated region
    $region130: #{forward.1} parent=1 // pred_check
      _
    $region131: #{forward.1} parent=1 // pred_check_branch
      %4471 = sbr.rel (0) target = $region133
    $region132: #{forward.1} parent=1 // pred_region
      _
    $region133: #{forward.1} parent=1 // pred_fallthru
      _
    // Predicated region
    $region134: #{forward.1} parent=1 // pred_check
      _
    $region135: #{forward.1} parent=1 // pred_check_branch
      %4473 = sbr.rel (0) target = $region137
    $region136: #{forward.1} parent=1 // pred_region
      %4474 = dma.done [#allocation5], 32
    $region137: #{forward.1} parent=1 // pred_fallthru
      _
    // Predicated region
    $region138: #{forward.1} parent=1 // pred_check
      _
    $region139: #{forward.1} parent=1 // pred_check_branch
      %4476 = sbr.rel (0) target = $region141
    $region140: #{forward.1} parent=1 // pred_region
      %4477 = dma.done [#allocation13], 32
    $region141: #{forward.1} parent=1 // pred_fallthru
      _
    // Predicated region
    $region142: #{forward.1} parent=1 // pred_check
      _
    $region143: #{forward.1} parent=1 // pred_check_branch
      %4479 = sbr.rel (0) target = $region145
    $region144: #{forward.1} parent=1 // pred_region
      _
    $region145: #{forward.1} parent=1 // pred_fallthru
      _
    %4480 = vsyncpa [#allocation4], 1
    %4481 = vsyncpa [#allocation7], 1
    %4482 = vsyncpa [#allocation10], 1
    %4483 = vsyncpa [#allocation5], 1
    %4484 = vsyncpa [#allocation13], 1

</llo_original>
